<compile_context>
chip_gen: v6e
topology: v6e:2x2x1
jax: 0.10.0
libtpu: 0.0.40
codegen_flags: <defaults>
</compile_context>

<pallas_src>
import functools

import numpy as np
import jax
import jax.numpy as jnp
from jax.experimental import pallas as pl
from jax.experimental.pallas import tpu as pltpu


def _round_up(x: int, m: int) -> int:
    return ((x + m - 1) // m) * m


def _vmem_capacity_bytes() -> int:
    # generation-aware: 128 MiB on v5e/v6e, 64 MiB on v7x
    try:
        cap = getattr(pltpu.get_tpu_info(), "vmem_capacity_bytes", None)
        if cap:
            return int(cap)
    except Exception:
        pass
    return 128 * 1024 * 1024


def _vmem_limit(*byte_terms: int, headroom: int = 4 * 1024 * 1024) -> int:
    # caller passes terms already multiplied by their buffer counts
    cap = int(0.75 * _vmem_capacity_bytes())
    want = sum(int(t) for t in byte_terms) + headroom
    return int(min(max(want, 16 * 1024 * 1024), cap))


# ----------------------------------------------------------------------------
# sincos positional embedding (host-side numpy, identical to the PyTorch spec)
# ----------------------------------------------------------------------------
def _get_1d_sincos_pos_embed_from_grid(embed_dim, pos):
    assert embed_dim % 2 == 0
    omega = np.arange(embed_dim // 2, dtype=np.float32)
    omega /= embed_dim / 2.0
    omega = 1.0 / 10000 ** omega
    pos = pos.reshape(-1)
    out = np.einsum("i,j->ij", pos, omega)
    return np.concatenate([np.sin(out), np.cos(out)], axis=1)


def _get_2d_sincos_pos_embed(embed_dim, grid_size, cls_token=False):
    assert embed_dim % 2 == 0
    grid_h = np.arange(grid_size, dtype=np.float32)
    grid_w = np.arange(grid_size, dtype=np.float32)
    grid = np.meshgrid(grid_w, grid_h)
    grid = np.stack(grid, axis=0).reshape([2, 1, grid_size, grid_size])
    emb_h = _get_1d_sincos_pos_embed_from_grid(embed_dim // 2, grid[0])
    emb_w = _get_1d_sincos_pos_embed_from_grid(embed_dim // 2, grid[1])
    pos_embed = np.concatenate([emb_h, emb_w], axis=1)
    if cls_token:
        pos_embed = np.concatenate([np.zeros([1, embed_dim]), pos_embed], axis=0)
    return pos_embed


# ----------------------------------------------------------------------------
# Pallas kernel 1: patch-embedding projection (Conv2d k=s=patch -> matmul)
# ----------------------------------------------------------------------------
def _patch_proj_kernel(x_ref, w_ref, b_ref, o_ref):
    # x_ref: (tm, K); w_ref: (K, D); b_ref: (1, D); o_ref: (tm, D)
    o_ref[...] = (
        jnp.dot(x_ref[...], w_ref[...], preferred_element_type=jnp.float32)
        + b_ref[...]
    )


def patch_proj(patches_raw, w, b):
    B, N, K = patches_raw.shape
    D = w.shape[1]
    M = B * N
    tile_m = min(256, _round_up(M, 8))
    Mp = _round_up(M, tile_m)
    x2 = patches_raw.reshape(M, K).astype(jnp.float32)
    if Mp != M:
        x2 = jnp.pad(x2, ((0, Mp - M), (0, 0)))

    out = pl.pallas_call(
        _patch_proj_kernel,
        out_shape=jax.ShapeDtypeStruct((Mp, D), jnp.float32),
        grid=(Mp // tile_m,),
        in_specs=[
            pl.BlockSpec((tile_m, K), lambda i: (i, 0)),
            pl.BlockSpec((K, D), lambda i: (0, 0), pipeline_mode=pl.Buffered(1)),
            pl.BlockSpec((1, D), lambda i: (0, 0), pipeline_mode=pl.Buffered(1)),
        ],
        out_specs=pl.BlockSpec((tile_m, D), lambda i: (i, 0)),
        compiler_params=pltpu.CompilerParams(
            dimension_semantics=("parallel",),
            vmem_limit_bytes=_vmem_limit(
                2 * 4 * tile_m * K,      # x (double-buffered)
                4 * K * D + 4 * D,       # weights (single-buffered)
                2 * 4 * tile_m * D,      # out (double-buffered)
            ),
        ),
    )(x2, w, b)
    return out[:M].reshape(B, N, D)


# ----------------------------------------------------------------------------
# Pallas kernel 2: ClusterMasking anchor-row cosine similarity
# ----------------------------------------------------------------------------
def _anchor_sim_kernel(anc_ref, key_ref, sim_ref):
    # anc_ref: (Bt, Ap, D) f32; key_ref: (Bt, Np, D) f32; sim_ref: (Bt, Ap, Np) f32
    # normalize_patches (zero mean / unit var) followed by F.normalize(p=2) fuses
    # algebraically: the var factor cancels, so xu = diff * rsqrt(sum(diff^2)).
    def normalize(v):
        mean = jnp.mean(v, axis=-1, keepdims=True)
        diff = v - mean
        sumsq = jnp.sum(diff * diff, axis=-1, keepdims=True)
        return diff * jax.lax.rsqrt(sumsq + 1e-24)

    a = normalize(anc_ref[...])
    k = normalize(key_ref[...])
    # f32 operands kept on purpose: cosine values near the 0.75 threshold must not
    # flip vs. the PyTorch reference.  Contraction on last dims -> no transpose.
    sim_ref[...] = jax.lax.dot_general(
        a, k,
        dimension_numbers=(((2,), (2,)), ((0,), (0,))),
        preferred_element_type=jnp.float32,
    )


def compute_anchor_similarity(patches, anchor_idx):
    """sim[b, a, n] = cosine(normalize(patches[b, anchor_idx[b, a]]), normalize(patches[b, n]))"""
    B, N, D = patches.shape
    A = anchor_idx.shape[1]
    Ap = _round_up(A, 8)        # sublane dim: 8-aligned only (no wasted 128 padding)
    Np = _round_up(N, 128)      # lane dim: 128-aligned for unmasked vst
    Bt = min(B, 8)
    Bp = _round_up(B, Bt)

    x = patches.astype(jnp.float32)
    anchors = jax.vmap(lambda p, idx: p[idx])(x, anchor_idx)   # (B, A, D)
    if Ap != A or Bp != B:
        anchors = jnp.pad(anchors, ((0, Bp - B), (0, Ap - A), (0, 0)))
    keysx = x
    if Np != N or Bp != B:
        keysx = jnp.pad(keysx, ((0, Bp - B), (0, Np - N), (0, 0)))

    sim = pl.pallas_call(
        _anchor_sim_kernel,
        out_shape=jax.ShapeDtypeStruct((Bp, Ap, Np), jnp.float32),
        grid=(Bp // Bt,),
        in_specs=[
            pl.BlockSpec((Bt, Ap, D), lambda b: (b, 0, 0)),
            pl.BlockSpec((Bt, Np, D), lambda b: (b, 0, 0)),
        ],
        out_specs=pl.BlockSpec((Bt, Ap, Np), lambda b: (b, 0, 0)),
        compiler_params=pltpu.CompilerParams(
            dimension_semantics=("parallel",),
            vmem_limit_bytes=_vmem_limit(
                2 * 4 * Bt * Ap * D,
                2 * 4 * Bt * Np * D,
                2 * 4 * Bt * Ap * Np,
            ),
        ),
        cost_estimate=pl.CostEstimate(
            flops=2 * Bp * Ap * Np * D,
            transcendentals=Bp * (Ap + Np),
            bytes_accessed=4 * Bp * (Ap + Np) * D + 4 * Bp * Ap * Np,
        ),
    )(anchors, keysx)
    return sim[:B, :A, :N]


# ----------------------------------------------------------------------------
# ClusterMasking mask generation (plain JAX glue)
# ----------------------------------------------------------------------------
# TODO(synk): torch.randperm / `.item()`-driven dynamic indexing have no clean Pallas
# equivalent; mask generation uses plain JAX with static-shape ranking tricks.
def generate_mask(anchor_sim, anchor_idx, key, similarity_threshold, min_mask_ratio):
    B, A, N = anchor_sim.shape

    def per_batch(sim_a, a_idx, k2):
        cluster_mask = jnp.any(sim_a > similarity_threshold, axis=0)     # (N,)
        cluster_mask = cluster_mask.at[a_idx].set(True)

        mask_ratio = jnp.mean(cluster_mask.astype(jnp.float32))
        additional = jnp.floor((min_mask_ratio - mask_ratio) * N).astype(jnp.int32)

        # random ordering among unmasked positions; mask the first `additional`
        scores = jax.random.uniform(k2, (N,))
        scores = jnp.where(cluster_mask, 2.0, scores)   # already-masked pushed to end
        order = jnp.argsort(scores)
        ranks = jnp.argsort(order)
        add_mask = (~cluster_mask) & (ranks < additional)
        return jnp.where(additional > 0, cluster_mask | add_mask, cluster_mask)

    keys = jax.random.split(key, B)
    return jax.vmap(per_batch)(anchor_sim, anchor_idx, keys)


# ----------------------------------------------------------------------------
# Pallas kernel 3: fused transformer block (LN -> masked MHA -> LN -> MLP)
# ----------------------------------------------------------------------------
def _transformer_block_kernel(
    x_ref, bias_ref,
    ln1_g_ref, ln1_b_ref, qkv_w_ref, qkv_b_ref, proj_w_ref, proj_b_ref,
    ln2_g_ref, ln2_b_ref, fc1_w_ref, fc1_b_ref, fc2_w_ref, fc2_b_ref,
    o_ref, *, num_heads,
):
    x = x_ref[0]                      # (N1p, D) f32
    bias = bias_ref[0]                # (1, N1p) additive key-mask bias (0 / -1e30)
    D = x.shape[-1]
    dh = D // num_heads
    scale = float(dh) ** -0.5

    def layernorm(v, g, b):
        mu = jnp.mean(v, axis=-1, keepdims=True)
        var = jnp.mean((v - mu) ** 2, axis=-1, keepdims=True)
        return (v - mu) * jax.lax.rsqrt(var + 1e-5) * g + b

    # --- attention branch (bf16 operands, f32 accumulation on the MXU) ---
    h = layernorm(x, ln1_g_ref[...], ln1_b_ref[...]).astype(jnp.bfloat16)
    qkv = jnp.dot(h, qkv_w_ref[...], preferred_element_type=jnp.float32) + qkv_b_ref[...]
    qkv = qkv.astype(jnp.bfloat16)

    o_heads = []
    # TODO(synk): process heads in 128-lane pairs so every slice start is lane-tile
    # aligned on v6e/v7x (dh=64 offsets force relayouts for odd heads).
    for hd in range(num_heads):       # short static loop, unrolled; no transposes
        q = qkv[:, hd * dh:(hd + 1) * dh]
        k = qkv[:, D + hd * dh:D + (hd + 1) * dh]
        v = qkv[:, 2 * D + hd * dh:2 * D + (hd + 1) * dh]
        s = jax.lax.dot_general(
            q, k, dimension_numbers=(((1,), (1,)), ((), ())),
            preferred_element_type=jnp.float32,
        ) * scale
        s = s + bias                  # mask masked / padded keys for every query row
        # explicit softmax: divide goes to the EUP via approx reciprocal
        s_max = jnp.max(s, axis=-1, keepdims=True)
        p = jnp.exp(s - s_max)
        denom = jnp.sum(p, axis=-1, keepdims=True)
        p = p * pl.reciprocal(denom, approx=True)
        o_heads.append(jnp.dot(p.astype(jnp.bfloat16), v,
                               preferred_element_type=jnp.float32))      # (N1p, dh)

    # concatenated-heads projection: one K=D matmul instead of num_heads K=dh matmuls
    o_all = jnp.concatenate(o_heads, axis=-1).astype(jnp.bfloat16)        # (N1p, D)
    attn_out = jnp.dot(o_all, proj_w_ref[...],
                       preferred_element_type=jnp.float32) + proj_b_ref[...]
    x = x + attn_out

    # --- MLP branch ---
    h2 = layernorm(x, ln2_g_ref[...], ln2_b_ref[...]).astype(jnp.bfloat16)
    h2 = jnp.dot(h2, fc1_w_ref[...], preferred_element_type=jnp.float32) + fc1_b_ref[...]
    # TODO(synk): nn.GELU is erf-exact; tanh approximation used (Mosaic-friendly, ~1e-3).
    h2 = 0.5 * h2 * (1.0 + jnp.tanh(0.7978845608028654 * (h2 + 0.044715 * h2 * h2 * h2)))
    h2 = jnp.dot(h2.astype(jnp.bfloat16), fc2_w_ref[...],
                 preferred_element_type=jnp.float32) + fc2_b_ref[...]
    o_ref[0] = x + h2


def transformer_block(x, key_bias, p, *, num_heads):
    B, N1p, D = x.shape
    Dh = p["fc1_w"].shape[1]

    def const_spec(shape):
        nd = len(shape)
        # constant block index -> single-buffered: no 2x weight VMEM reservation
        return pl.BlockSpec(shape, lambda b, _n=nd: (0,) * _n,
                            pipeline_mode=pl.Buffered(1))

    weight_bytes = (2 * (D * 3 * D + D * D + 2 * D * Dh)      # bf16 matmul weights, x1
                    + 4 * (10 * D + 3 * D + Dh))              # f32 LN params / biases
    io_bytes = 2 * (2 * 4 * N1p * D) + 2 * 4 * N1p            # x/out double-buffered
    interm_bytes = 4 * N1p * (3 * D + Dh + 2 * D) + 8 * N1p * N1p
    kernel = functools.partial(_transformer_block_kernel, num_heads=num_heads)
    # TODO(synk): pad/split B to an even number of parallel steps when B is odd so
    # both v7x TensorCores stay busy (no effect on v5e/v6e).
    return pl.pallas_call(
        kernel,
        out_shape=jax.ShapeDtypeStruct((B, N1p, D), jnp.float32),
        grid=(B,),
        in_specs=[
            pl.BlockSpec((1, N1p, D), lambda b: (b, 0, 0)),
            pl.BlockSpec((1, 1, N1p), lambda b: (b, 0, 0)),
            const_spec((1, D)), const_spec((1, D)),
            const_spec((D, 3 * D)), const_spec((1, 3 * D)),
            const_spec((D, D)), const_spec((1, D)),
            const_spec((1, D)), const_spec((1, D)),
            const_spec((D, Dh)), const_spec((1, Dh)),
            const_spec((Dh, D)), const_spec((1, D)),
        ],
        out_specs=pl.BlockSpec((1, N1p, D), lambda b: (b, 0, 0)),
        compiler_params=pltpu.CompilerParams(
            dimension_semantics=("parallel",),
            vmem_limit_bytes=_vmem_limit(weight_bytes, io_bytes, interm_bytes),
        ),
    )(x, key_bias,
      p["ln1_g"], p["ln1_b"], p["qkv_w"], p["qkv_b"], p["proj_w"], p["proj_b"],
      p["ln2_g"], p["ln2_b"], p["fc1_w"], p["fc1_b"], p["fc2_w"], p["fc2_b"])


# ----------------------------------------------------------------------------
# Parameters & forward
# ----------------------------------------------------------------------------
def patchify(x, patch_size):
    B, C, H, W = x.shape
    gh, gw = H // patch_size, W // patch_size
    x = x.reshape(B, C, gh, patch_size, gw, patch_size)
    x = x.transpose(0, 2, 4, 1, 3, 5)                       # (B, gh, gw, C, P, P)
    return x.reshape(B, gh * gw, C * patch_size * patch_size)


def init_vit_params(key, *, img_size, patch_size, in_chans, embed_dim, depth,
                    num_heads, mlp_ratio):
    del num_heads
    N = (img_size // patch_size) ** 2
    D = embed_dim
    K = in_chans * patch_size * patch_size
    Dh = int(D * mlp_ratio)

    def nrm(k, shape, dtype=jnp.float32):
        return (0.02 * jax.random.normal(k, shape)).astype(dtype)

    ks = iter(jax.random.split(key, 2 + 4 * depth))
    params = {
        # patch projection kept f32: its output feeds the cosine-similarity mask,
        # where values near the 0.75 threshold must match the f32 reference.
        "patch_w": nrm(next(ks), (K, D)),
        "patch_b": jnp.zeros((1, D), jnp.float32),
        "cls_token": nrm(next(ks), (1, 1, D)),
        "pos_embed": jnp.asarray(
            _get_2d_sincos_pos_embed(D, int(N ** 0.5), cls_token=True),
            dtype=jnp.float32)[None],
        "norm_g": jnp.ones((D,), jnp.float32),
        "norm_b": jnp.zeros((D,), jnp.float32),
        "blocks": [],
    }
    for _ in range(depth):
        params["blocks"].append({
            "ln1_g": jnp.ones((1, D), jnp.float32), "ln1_b": jnp.zeros((1, D), jnp.float32),
            # matmul weights stored bf16 (MXU-native; halves weight DMA + VMEM)
            "qkv_w": nrm(next(ks), (D, 3 * D), jnp.bfloat16),
            "qkv_b": jnp.zeros((1, 3 * D), jnp.float32),
            "proj_w": nrm(next(ks), (D, D), jnp.bfloat16),
            "proj_b": jnp.zeros((1, D), jnp.float32),
            "ln2_g": jnp.ones((1, D), jnp.float32), "ln2_b": jnp.zeros((1, D), jnp.float32),
            "fc1_w": nrm(next(ks), (D, Dh), jnp.bfloat16),
            "fc1_b": jnp.zeros((1, Dh), jnp.float32),
            "fc2_w": nrm(next(ks), (Dh, D), jnp.bfloat16),
            "fc2_b": jnp.zeros((1, D), jnp.float32),
        })
    return params


@functools.partial(
    jax.jit,
    static_argnames=("patch_size", "num_heads", "anchor_ratio",
                     "similarity_threshold", "min_mask_ratio", "use_cluster_mask"),
)
def vit_forward(params, images, key, *, patch_size, num_heads,
                anchor_ratio=0.05, similarity_threshold=0.75, min_mask_ratio=0.5,
                use_cluster_mask=True):
    images = images.astype(jnp.float32)
    patches_raw = patchify(images, patch_size)
    patches = patch_proj(patches_raw, params["patch_w"], params["patch_b"])   # Pallas
    B, N, D = patches.shape

    mask = jnp.zeros((B, N), dtype=jnp.bool_)
    if use_cluster_mask:
        num_anchors = max(1, int(N * anchor_ratio))
        k_anchor, k_topup = jax.random.split(key)
        anchor_keys = jax.random.split(k_anchor, B)
        anchor_idx = jax.vmap(
            lambda k: jax.random.permutation(k, N)[:num_anchors])(anchor_keys)  # (B, A)
        sim_a = compute_anchor_similarity(patches, anchor_idx)                  # Pallas
        mask = generate_mask(sim_a, anchor_idx, k_topup,
                             similarity_threshold, min_mask_ratio)              # JAX glue
        # exact zeroing (NaN-safe); XLA fuses this elementwise op for free.
        patches = jnp.where(mask[:, :, None], 0.0, patches)

    cls = jnp.broadcast_to(params["cls_token"], (B, 1, D)).astype(jnp.float32)
    x = jnp.concatenate([cls, patches], axis=1) + params["pos_embed"]

    # pad token dim to a multiple of 8 (unmasked sublane loads/stores in every layer);
    # pad tokens are excluded from attention via the key bias and sliced off at the end.
    N1 = N + 1
    N1p = _round_up(N1, 8)
    if N1p != N1:
        x = jnp.pad(x, ((0, 0), (0, N1p - N1), (0, 0)))

    key_mask = jnp.concatenate([jnp.zeros((B, 1), jnp.bool_), mask], axis=1)
    if N1p != N1:
        key_mask = jnp.pad(key_mask, ((0, 0), (0, N1p - N1)), constant_values=True)
    key_bias = jnp.where(key_mask, -1e30, 0.0).astype(jnp.float32)[:, None, :]

    for blk in params["blocks"]:
        x = transformer_block(x, key_bias, blk, num_heads=num_heads)          # Pallas

    # final LayerNorm on the cls token (LayerNorm is per-token, so norm(x)[:,0]==norm(x[:,0]))
    cls_tok = x[:, 0]
    mu = jnp.mean(cls_tok, axis=-1, keepdims=True)
    var = jnp.mean((cls_tok - mu) ** 2, axis=-1, keepdims=True)
    feats = (cls_tok - mu) * jax.lax.rsqrt(var + 1e-5) * params["norm_g"] + params["norm_b"]
    return feats, mask


if __name__ == "__main__":
    cfg = dict(img_size=16, patch_size=4, in_chans=3, embed_dim=32,
               depth=2, num_heads=4, mlp_ratio=4.0)
    root = jax.random.PRNGKey(0)
    k_param, k_img, k_mask = jax.random.split(root, 3)

    params = init_vit_params(k_param, **cfg)
    B = 2
    images = jax.random.normal(
        k_img, (B, cfg["in_chans"], cfg["img_size"], cfg["img_size"]), dtype=jnp.float32)

    feats, mask = vit_forward(params, images, k_mask,
                              patch_size=cfg["patch_size"], num_heads=cfg["num_heads"])
    jax.block_until_ready((feats, mask))

    N = (cfg["img_size"] // cfg["patch_size"]) ** 2
    assert feats.shape == (B, cfg["embed_dim"])
    assert mask.shape == (B, N) and mask.dtype == jnp.bool_
    assert bool(jnp.all(jnp.isfinite(feats)))
    # min-mask-ratio respected (within the single-patch rounding of the torch int() logic)
    assert bool(jnp.all(jnp.mean(mask.astype(jnp.float32), axis=1)
                        >= 0.5 - 1.0 / N - 1e-5))
    print("KERNEL_OK")
</pallas_src>

<mosaic_0001>
module attributes {stable_mosaic.version = 11 : i64} {
  func.func @_patch_proj_kernel(%arg0: i32, %arg1: memref<32x48xf32, #tpu.memory_space<vmem>>, %arg2: memref<48x32xf32, #tpu.memory_space<vmem>>, %arg3: memref<1x32xf32, #tpu.memory_space<vmem>>, %arg4: memref<32x32xf32, #tpu.memory_space<vmem>>) attributes {dimension_semantics = [#tpu.dimension_semantics<parallel>], iteration_bounds = array<i64: 1>, scalar_prefetch = 0 : i64, scratch_operands = 0 : i64, tpu.core_type = #tpu.core_type<tc>, window_params = [{transform_indices = @transform_0, window_bounds = array<i64: 32, 48>}, {pipeline_mode = #tpu.pipeline_mode<synchronous>, transform_indices = @transform_1, window_bounds = array<i64: 48, 32>}, {pipeline_mode = #tpu.pipeline_mode<synchronous>, transform_indices = @transform_2, window_bounds = array<i64: 1, 32>}, {transform_indices = @transform_3, window_bounds = array<i64: 32, 32>}]} {
    %c0 = arith.constant 0 : index
    %c0_0 = arith.constant 0 : index
    %0 = vector.load %arg1[%c0, %c0_0] : memref<32x48xf32, #tpu.memory_space<vmem>>, vector<32x48xf32>
    %c0_1 = arith.constant 0 : index
    %c0_2 = arith.constant 0 : index
    %1 = vector.load %arg2[%c0_1, %c0_2] : memref<48x32xf32, #tpu.memory_space<vmem>>, vector<48x32xf32>
    %cst = arith.constant dense<0.000000e+00> : vector<32x32xf32>
    %2 = tpu.matmul %0, %1, %cst {dimension_numbers = #tpu.dot_dimension_numbers<[1], [0], [0], [1], [0, 0, 1, 1], [], []>} : vector<32x48xf32>, vector<48x32xf32>, vector<32x32xf32> -> vector<32x32xf32>
    %c0_3 = arith.constant 0 : index
    %c0_4 = arith.constant 0 : index
    %3 = vector.load %arg3[%c0_3, %c0_4] : memref<1x32xf32, #tpu.memory_space<vmem>>, vector<1x32xf32>
    %4 = vector.broadcast %3 : vector<1x32xf32> to vector<32x32xf32>
    %5 = arith.addf %2, %4 : vector<32x32xf32>
    %c0_5 = arith.constant 0 : index
    %c0_6 = arith.constant 0 : index
    %6 = vector.load %arg4[%c0_5, %c0_6] : memref<32x32xf32, #tpu.memory_space<vmem>>, vector<32x32xf32>
    tpu.vector_store %arg4[%c0_5, %c0_6], %5 {strides = array<i32>} : memref<32x32xf32, #tpu.memory_space<vmem>>, vector<32x32xf32>,
    return
  }
  func.func @transform_0(%arg0: i32) -> (i32, i32) {
    %c0_i32 = arith.constant 0 : i32
    %c0_i32_0 = arith.constant 0 : i32
    return %arg0, %c0_i32 : i32, i32
  }
  func.func @transform_1(%arg0: i32) -> (i32, i32) {
    %c0_i32 = arith.constant 0 : i32
    %c0_i32_0 = arith.constant 0 : i32
    %c0_i32_1 = arith.constant 0 : i32
    return %c0_i32, %c0_i32_0 : i32, i32
  }
  func.func @transform_2(%arg0: i32) -> (i32, i32) {
    %c0_i32 = arith.constant 0 : i32
    %c0_i32_0 = arith.constant 0 : i32
    %c0_i32_1 = arith.constant 0 : i32
    return %c0_i32, %c0_i32_0 : i32, i32
  }
  func.func @transform_3(%arg0: i32) -> (i32, i32) {
    %c0_i32 = arith.constant 0 : i32
    %c0_i32_0 = arith.constant 0 : i32
    return %arg0, %c0_i32 : i32, i32
  }
}

module attributes {stable_mosaic.version = 11 : i64} {
  func.func @_anchor_sim_kernel(%arg0: i32, %arg1: memref<2x8x32xf32, #tpu.memory_space<vmem>>, %arg2: memref<2x128x32xf32, #tpu.memory_space<vmem>>, %arg3: memref<2x8x128xf32, #tpu.memory_space<vmem>>) attributes {dimension_semantics = [#tpu.dimension_semantics<parallel>], iteration_bounds = array<i64: 1>, scalar_prefetch = 0 : i64, scratch_operands = 0 : i64, tpu.core_type = #tpu.core_type<tc>, window_params = [{transform_indices = @transform_0, window_bounds = array<i64: 2, 8, 32>}, {transform_indices = @transform_1, window_bounds = array<i64: 2, 128, 32>}, {transform_indices = @transform_2, window_bounds = array<i64: 2, 8, 128>}]} {
    %c0 = arith.constant 0 : index
    %c0_0 = arith.constant 0 : index
    %c0_1 = arith.constant 0 : index
    %0 = vector.load %arg1[%c0, %c0_0, %c0_1] : memref<2x8x32xf32, #tpu.memory_space<vmem>>, vector<2x8x32xf32>
    %cst = arith.constant dense<0.000000e+00> : vector<2x8xf32>
    %1 = vector.multi_reduction <add>, %0, %cst [2] : vector<2x8x32xf32> to vector<2x8xf32>
    %2 = vector.shape_cast %1 : vector<2x8xf32> to vector<2x8x1xf32>
    %cst_2 = arith.constant 3.200000e+01 : f32
    %3 = vector.broadcast %cst_2 : f32 to vector<2x8x1xf32>
    %4 = arith.divf %2, %3 : vector<2x8x1xf32>
    %5 = vector.broadcast %4 : vector<2x8x1xf32> to vector<2x8x32xf32>
    %6 = arith.subf %0, %5 : vector<2x8x32xf32>
    %7 = arith.mulf %6, %6 : vector<2x8x32xf32>
    %cst_3 = arith.constant dense<0.000000e+00> : vector<2x8xf32>
    %8 = vector.multi_reduction <add>, %7, %cst_3 [2] : vector<2x8x32xf32> to vector<2x8xf32>
    %9 = vector.shape_cast %8 : vector<2x8xf32> to vector<2x8x1xf32>
    %cst_4 = arith.constant 1.000000e-24 : f32
    %10 = vector.broadcast %cst_4 : f32 to vector<2x8x1xf32>
    %11 = arith.addf %9, %10 : vector<2x8x1xf32>
    %12 = math.rsqrt %11 : vector<2x8x1xf32>
    %13 = vector.broadcast %12 : vector<2x8x1xf32> to vector<2x8x32xf32>
    %14 = arith.mulf %6, %13 : vector<2x8x32xf32>
    %c0_5 = arith.constant 0 : index
    %c0_6 = arith.constant 0 : index
    %c0_7 = arith.constant 0 : index
    %15 = vector.load %arg2[%c0_5, %c0_6, %c0_7] : memref<2x128x32xf32, #tpu.memory_space<vmem>>, vector<2x128x32xf32>
    %cst_8 = arith.constant dense<0.000000e+00> : vector<2x128xf32>
    %16 = vector.multi_reduction <add>, %15, %cst_8 [2] : vector<2x128x32xf32> to vector<2x128xf32>
    %17 = vector.shape_cast %16 : vector<2x128xf32> to vector<2x128x1xf32>
    %cst_9 = arith.constant 3.200000e+01 : f32
    %18 = vector.broadcast %cst_9 : f32 to vector<2x128x1xf32>
    %19 = arith.divf %17, %18 : vector<2x128x1xf32>
    %20 = vector.broadcast %19 : vector<2x128x1xf32> to vector<2x128x32xf32>
    %21 = arith.subf %15, %20 : vector<2x128x32xf32>
    %22 = arith.mulf %21, %21 : vector<2x128x32xf32>
    %cst_10 = arith.constant dense<0.000000e+00> : vector<2x128xf32>
    %23 = vector.multi_reduction <add>, %22, %cst_10 [2] : vector<2x128x32xf32> to vector<2x128xf32>
    %24 = vector.shape_cast %23 : vector<2x128xf32> to vector<2x128x1xf32>
    %cst_11 = arith.constant 1.000000e-24 : f32
    %25 = vector.broadcast %cst_11 : f32 to vector<2x128x1xf32>
    %26 = arith.addf %24, %25 : vector<2x128x1xf32>
    %27 = math.rsqrt %26 : vector<2x128x1xf32>
    %28 = vector.broadcast %27 : vector<2x128x1xf32> to vector<2x128x32xf32>
    %29 = arith.mulf %21, %28 : vector<2x128x32xf32>
    %cst_12 = arith.constant dense<0.000000e+00> : vector<2x8x128xf32>
    %30 = tpu.matmul %14, %29, %cst_12 {dimension_numbers = #tpu.dot_dimension_numbers<[2], [2], [1], [1], [0, 0, 0, 1, 1, 1], [0], [0]>} : vector<2x8x32xf32>, vector<2x128x32xf32>, vector<2x8x128xf32> -> vector<2x8x128xf32>
    %c0_13 = arith.constant 0 : index
    %c0_14 = arith.constant 0 : index
    %c0_15 = arith.constant 0 : index
    %31 = vector.load %arg3[%c0_13, %c0_14, %c0_15] : memref<2x8x128xf32, #tpu.memory_space<vmem>>, vector<2x8x128xf32>
    tpu.vector_store %arg3[%c0_13, %c0_14, %c0_15], %30 {strides = array<i32>} : memref<2x8x128xf32, #tpu.memory_space<vmem>>, vector<2x8x128xf32>,
    return
  }
  func.func @transform_0(%arg0: i32) -> (i32, i32, i32) {
    %c0_i32 = arith.constant 0 : i32
    %c0_i32_0 = arith.constant 0 : i32
    %c0_i32_1 = arith.constant 0 : i32
    return %arg0, %c0_i32, %c0_i32_0 : i32, i32, i32
  }
  func.func @transform_1(%arg0: i32) -> (i32, i32, i32) {
    %c0_i32 = arith.constant 0 : i32
    %c0_i32_0 = arith.constant 0 : i32
    %c0_i32_1 = arith.constant 0 : i32
    return %arg0, %c0_i32, %c0_i32_0 : i32, i32, i32
  }
  func.func @transform_2(%arg0: i32) -> (i32, i32, i32) {
    %c0_i32 = arith.constant 0 : i32
    %c0_i32_0 = arith.constant 0 : i32
    %c0_i32_1 = arith.constant 0 : i32
    return %arg0, %c0_i32, %c0_i32_0 : i32, i32, i32
  }
}

module attributes {stable_mosaic.version = 11 : i64} {
  func.func @_transformer_block_kernel(%arg0: i32, %arg1: memref<1x24x32xf32, #tpu.memory_space<vmem>>, %arg2: memref<1x1x24xf32, #tpu.memory_space<vmem>>, %arg3: memref<1x32xf32, #tpu.memory_space<vmem>>, %arg4: memref<1x32xf32, #tpu.memory_space<vmem>>, %arg5: memref<32x96xbf16, #tpu.memory_space<vmem>>, %arg6: memref<1x96xf32, #tpu.memory_space<vmem>>, %arg7: memref<32x32xbf16, #tpu.memory_space<vmem>>, %arg8: memref<1x32xf32, #tpu.memory_space<vmem>>, %arg9: memref<1x32xf32, #tpu.memory_space<vmem>>, %arg10: memref<1x32xf32, #tpu.memory_space<vmem>>, %arg11: memref<32x128xbf16, #tpu.memory_space<vmem>>, %arg12: memref<1x128xf32, #tpu.memory_space<vmem>>, %arg13: memref<128x32xbf16, #tpu.memory_space<vmem>>, %arg14: memref<1x32xf32, #tpu.memory_space<vmem>>, %arg15: memref<1x24x32xf32, #tpu.memory_space<vmem>>) attributes {dimension_semantics = [#tpu.dimension_semantics<parallel>], iteration_bounds = array<i64: 2>, scalar_prefetch = 0 : i64, scratch_operands = 0 : i64, tpu.core_type = #tpu.core_type<tc>, window_params = [{transform_indices = @transform_0, window_bounds = array<i64: 1, 24, 32>}, {transform_indices = @transform_1, window_bounds = array<i64: 1, 1, 24>}, {pipeline_mode = #tpu.pipeline_mode<synchronous>, transform_indices = @transform_2, window_bounds = array<i64: 1, 32>}, {pipeline_mode = #tpu.pipeline_mode<synchronous>, transform_indices = @transform_3, window_bounds = array<i64: 1, 32>}, {pipeline_mode = #tpu.pipeline_mode<synchronous>, transform_indices = @transform_4, window_bounds = array<i64: 32, 96>}, {pipeline_mode = #tpu.pipeline_mode<synchronous>, transform_indices = @transform_5, window_bounds = array<i64: 1, 96>}, {pipeline_mode = #tpu.pipeline_mode<synchronous>, transform_indices = @transform_6, window_bounds = array<i64: 32, 32>}, {pipeline_mode = #tpu.pipeline_mode<synchronous>, transform_indices = @transform_7, window_bounds = array<i64: 1, 32>}, {pipeline_mode = #tpu.pipeline_mode<synchronous>, transform_indices = @transform_8, window_bounds = array<i64: 1, 32>}, {pipeline_mode = #tpu.pipeline_mode<synchronous>, transform_indices = @transform_9, window_bounds = array<i64: 1, 32>}, {pipeline_mode = #tpu.pipeline_mode<synchronous>, transform_indices = @transform_10, window_bounds = array<i64: 32, 128>}, {pipeline_mode = #tpu.pipeline_mode<synchronous>, transform_indices = @transform_11, window_bounds = array<i64: 1, 128>}, {pipeline_mode = #tpu.pipeline_mode<synchronous>, transform_indices = @transform_12, window_bounds = array<i64: 128, 32>}, {pipeline_mode = #tpu.pipeline_mode<synchronous>, transform_indices = @transform_13, window_bounds = array<i64: 1, 32>}, {transform_indices = @transform_14, window_bounds = array<i64: 1, 24, 32>}]} {
    %c0 = arith.constant 0 : index
    %c0_0 = arith.constant 0 : index
    %c0_1 = arith.constant 0 : index
    %0 = vector.load %arg1[%c0, %c0_0, %c0_1] : memref<1x24x32xf32, #tpu.memory_space<vmem>>, vector<1x24x32xf32>
    %1 = vector.shape_cast %0 : vector<1x24x32xf32> to vector<24x32xf32>
    %c0_2 = arith.constant 0 : index
    %c0_3 = arith.constant 0 : index
    %c0_4 = arith.constant 0 : index
    %2 = vector.load %arg2[%c0_2, %c0_3, %c0_4] : memref<1x1x24xf32, #tpu.memory_space<vmem>>, vector<1x1x24xf32>
    %3 = vector.shape_cast %2 : vector<1x1x24xf32> to vector<1x24xf32>
    %c0_5 = arith.constant 0 : index
    %c0_6 = arith.constant 0 : index
    %4 = vector.load %arg3[%c0_5, %c0_6] : memref<1x32xf32, #tpu.memory_space<vmem>>, vector<1x32xf32>
    %c0_7 = arith.constant 0 : index
    %c0_8 = arith.constant 0 : index
    %5 = vector.load %arg4[%c0_7, %c0_8] : memref<1x32xf32, #tpu.memory_space<vmem>>, vector<1x32xf32>
    %cst = arith.constant dense<0.000000e+00> : vector<24xf32>
    %6 = vector.multi_reduction <add>, %1, %cst [1] : vector<24x32xf32> to vector<24xf32>
    %7 = vector.shape_cast %6 : vector<24xf32> to vector<24x1xf32>
    %cst_9 = arith.constant 3.200000e+01 : f32
    %8 = vector.broadcast %cst_9 : f32 to vector<24x1xf32>
    %9 = arith.divf %7, %8 : vector<24x1xf32>
    %10 = vector.broadcast %9 : vector<24x1xf32> to vector<24x32xf32>
    %11 = arith.subf %1, %10 : vector<24x32xf32>
    %12 = arith.mulf %11, %11 : vector<24x32xf32>
    %cst_10 = arith.constant dense<0.000000e+00> : vector<24xf32>
    %13 = vector.multi_reduction <add>, %12, %cst_10 [1] : vector<24x32xf32> to vector<24xf32>
    %14 = vector.shape_cast %13 : vector<24xf32> to vector<24x1xf32>
    %cst_11 = arith.constant 3.200000e+01 : f32
    %15 = vector.broadcast %cst_11 : f32 to vector<24x1xf32>
    %16 = arith.divf %14, %15 : vector<24x1xf32>
    %17 = vector.broadcast %9 : vector<24x1xf32> to vector<24x32xf32>
    %18 = arith.subf %1, %17 : vector<24x32xf32>
    %cst_12 = arith.constant 9.99999974E-6 : f32
    %19 = vector.broadcast %cst_12 : f32 to vector<24x1xf32>
    %20 = arith.addf %16, %19 : vector<24x1xf32>
    %21 = math.rsqrt %20 : vector<24x1xf32>
    %22 = vector.broadcast %21 : vector<24x1xf32> to vector<24x32xf32>
    %23 = arith.mulf %18, %22 : vector<24x32xf32>
    %24 = vector.broadcast %4 : vector<1x32xf32> to vector<24x32xf32>
    %25 = arith.mulf %23, %24 : vector<24x32xf32>
    %26 = vector.broadcast %5 : vector<1x32xf32> to vector<24x32xf32>
    %27 = arith.addf %25, %26 : vector<24x32xf32>
    %28 = arith.truncf %27 : vector<24x32xf32> to vector<24x32xbf16>
    %c0_13 = arith.constant 0 : index
    %c0_14 = arith.constant 0 : index
    %29 = vector.load %arg5[%c0_13, %c0_14] : memref<32x96xbf16, #tpu.memory_space<vmem>>, vector<32x96xbf16>
    %cst_15 = arith.constant dense<0.000000e+00> : vector<24x96xf32>
    %30 = tpu.matmul %28, %29, %cst_15 {dimension_numbers = #tpu.dot_dimension_numbers<[1], [0], [0], [1], [0, 0, 1, 1], [], []>} : vector<24x32xbf16>, vector<32x96xbf16>, vector<24x96xf32> -> vector<24x96xf32>
    %c0_16 = arith.constant 0 : index
    %c0_17 = arith.constant 0 : index
    %31 = vector.load %arg6[%c0_16, %c0_17] : memref<1x96xf32, #tpu.memory_space<vmem>>, vector<1x96xf32>
    %32 = vector.broadcast %31 : vector<1x96xf32> to vector<24x96xf32>
    %33 = arith.addf %30, %32 : vector<24x96xf32>
    %34 = arith.truncf %33 : vector<24x96xf32> to vector<24x96xbf16>
    %35 = vector.extract_strided_slice %34 {offsets = [0, 0], sizes = [24, 8], strides = [1, 1]} : vector<24x96xbf16> to vector<24x8xbf16>
    %36 = vector.extract_strided_slice %34 {offsets = [0, 32], sizes = [24, 8], strides = [1, 1]} : vector<24x96xbf16> to vector<24x8xbf16>
    %37 = vector.extract_strided_slice %34 {offsets = [0, 64], sizes = [24, 8], strides = [1, 1]} : vector<24x96xbf16> to vector<24x8xbf16>
    %cst_18 = arith.constant dense<0.000000e+00> : vector<24x24xf32>
    %38 = tpu.matmul %35, %36, %cst_18 {dimension_numbers = #tpu.dot_dimension_numbers<[1], [1], [0], [0], [0, 0, 1, 0], [], []>} : vector<24x8xbf16>, vector<24x8xbf16>, vector<24x24xf32> -> vector<24x24xf32>
    %cst_19 = arith.constant 0.353553385 : f32
    %39 = vector.broadcast %cst_19 : f32 to vector<24x24xf32>
    %40 = arith.mulf %38, %39 : vector<24x24xf32>
    %41 = vector.broadcast %3 : vector<1x24xf32> to vector<24x24xf32>
    %42 = arith.addf %40, %41 : vector<24x24xf32>
    %cst_20 = arith.constant dense<0xFF800000> : vector<24xf32>
    %43 = vector.multi_reduction <maximumf>, %42, %cst_20 [1] : vector<24x24xf32> to vector<24xf32>
    %44 = vector.shape_cast %43 : vector<24xf32> to vector<24x1xf32>
    %45 = vector.broadcast %44 : vector<24x1xf32> to vector<24x24xf32>
    %46 = arith.subf %42, %45 : vector<24x24xf32>
    %47 = math.exp %46 : vector<24x24xf32>
    %cst_21 = arith.constant dense<0.000000e+00> : vector<24xf32>
    %48 = vector.multi_reduction <add>, %47, %cst_21 [1] : vector<24x24xf32> to vector<24xf32>
    %49 = vector.shape_cast %48 : vector<24xf32> to vector<24x1xf32>
    %50 = tpu.reciprocal %49 {approx = true} : vector<24x1xf32> -> vector<24x1xf32>
    %51 = vector.broadcast %50 : vector<24x1xf32> to vector<24x24xf32>
    %52 = arith.mulf %47, %51 : vector<24x24xf32>
    %53 = arith.truncf %52 : vector<24x24xf32> to vector<24x24xbf16>
    %cst_22 = arith.constant dense<0.000000e+00> : vector<24x8xf32>
    %54 = tpu.matmul %53, %37, %cst_22 {dimension_numbers = #tpu.dot_dimension_numbers<[1], [0], [0], [1], [0, 0, 1, 1], [], []>} : vector<24x24xbf16>, vector<24x8xbf16>, vector<24x8xf32> -> vector<24x8xf32>
    %55 = vector.extract_strided_slice %34 {offsets = [0, 8], sizes = [24, 8], strides = [1, 1]} : vector<24x96xbf16> to vector<24x8xbf16>
    %56 = vector.extract_strided_slice %34 {offsets = [0, 40], sizes = [24, 8], strides = [1, 1]} : vector<24x96xbf16> to vector<24x8xbf16>
    %57 = vector.extract_strided_slice %34 {offsets = [0, 72], sizes = [24, 8], strides = [1, 1]} : vector<24x96xbf16> to vector<24x8xbf16>
    %cst_23 = arith.constant dense<0.000000e+00> : vector<24x24xf32>
    %58 = tpu.matmul %55, %56, %cst_23 {dimension_numbers = #tpu.dot_dimension_numbers<[1], [1], [0], [0], [0, 0, 1, 0], [], []>} : vector<24x8xbf16>, vector<24x8xbf16>, vector<24x24xf32> -> vector<24x24xf32>
    %cst_24 = arith.constant 0.353553385 : f32
    %59 = vector.broadcast %cst_24 : f32 to vector<24x24xf32>
    %60 = arith.mulf %58, %59 : vector<24x24xf32>
    %61 = vector.broadcast %3 : vector<1x24xf32> to vector<24x24xf32>
    %62 = arith.addf %60, %61 : vector<24x24xf32>
    %cst_25 = arith.constant dense<0xFF800000> : vector<24xf32>
    %63 = vector.multi_reduction <maximumf>, %62, %cst_25 [1] : vector<24x24xf32> to vector<24xf32>
    %64 = vector.shape_cast %63 : vector<24xf32> to vector<24x1xf32>
    %65 = vector.broadcast %64 : vector<24x1xf32> to vector<24x24xf32>
    %66 = arith.subf %62, %65 : vector<24x24xf32>
    %67 = math.exp %66 : vector<24x24xf32>
    %cst_26 = arith.constant dense<0.000000e+00> : vector<24xf32>
    %68 = vector.multi_reduction <add>, %67, %cst_26 [1] : vector<24x24xf32> to vector<24xf32>
    %69 = vector.shape_cast %68 : vector<24xf32> to vector<24x1xf32>
    %70 = tpu.reciprocal %69 {approx = true} : vector<24x1xf32> -> vector<24x1xf32>
    %71 = vector.broadcast %70 : vector<24x1xf32> to vector<24x24xf32>
    %72 = arith.mulf %67, %71 : vector<24x24xf32>
    %73 = arith.truncf %72 : vector<24x24xf32> to vector<24x24xbf16>
    %cst_27 = arith.constant dense<0.000000e+00> : vector<24x8xf32>
    %74 = tpu.matmul %73, %57, %cst_27 {dimension_numbers = #tpu.dot_dimension_numbers<[1], [0], [0], [1], [0, 0, 1, 1], [], []>} : vector<24x24xbf16>, vector<24x8xbf16>, vector<24x8xf32> -> vector<24x8xf32>
    %75 = vector.extract_strided_slice %34 {offsets = [0, 16], sizes = [24, 8], strides = [1, 1]} : vector<24x96xbf16> to vector<24x8xbf16>
    %76 = vector.extract_strided_slice %34 {offsets = [0, 48], sizes = [24, 8], strides = [1, 1]} : vector<24x96xbf16> to vector<24x8xbf16>
    %77 = vector.extract_strided_slice %34 {offsets = [0, 80], sizes = [24, 8], strides = [1, 1]} : vector<24x96xbf16> to vector<24x8xbf16>
    %cst_28 = arith.constant dense<0.000000e+00> : vector<24x24xf32>
    %78 = tpu.matmul %75, %76, %cst_28 {dimension_numbers = #tpu.dot_dimension_numbers<[1], [1], [0], [0], [0, 0, 1, 0], [], []>} : vector<24x8xbf16>, vector<24x8xbf16>, vector<24x24xf32> -> vector<24x24xf32>
    %cst_29 = arith.constant 0.353553385 : f32
    %79 = vector.broadcast %cst_29 : f32 to vector<24x24xf32>
    %80 = arith.mulf %78, %79 : vector<24x24xf32>
    %81 = vector.broadcast %3 : vector<1x24xf32> to vector<24x24xf32>
    %82 = arith.addf %80, %81 : vector<24x24xf32>
    %cst_30 = arith.constant dense<0xFF800000> : vector<24xf32>
    %83 = vector.multi_reduction <maximumf>, %82, %cst_30 [1] : vector<24x24xf32> to vector<24xf32>
    %84 = vector.shape_cast %83 : vector<24xf32> to vector<24x1xf32>
    %85 = vector.broadcast %84 : vector<24x1xf32> to vector<24x24xf32>
    %86 = arith.subf %82, %85 : vector<24x24xf32>
    %87 = math.exp %86 : vector<24x24xf32>
    %cst_31 = arith.constant dense<0.000000e+00> : vector<24xf32>
    %88 = vector.multi_reduction <add>, %87, %cst_31 [1] : vector<24x24xf32> to vector<24xf32>
    %89 = vector.shape_cast %88 : vector<24xf32> to vector<24x1xf32>
    %90 = tpu.reciprocal %89 {approx = true} : vector<24x1xf32> -> vector<24x1xf32>
    %91 = vector.broadcast %90 : vector<24x1xf32> to vector<24x24xf32>
    %92 = arith.mulf %87, %91 : vector<24x24xf32>
    %93 = arith.truncf %92 : vector<24x24xf32> to vector<24x24xbf16>
    %cst_32 = arith.constant dense<0.000000e+00> : vector<24x8xf32>
    %94 = tpu.matmul %93, %77, %cst_32 {dimension_numbers = #tpu.dot_dimension_numbers<[1], [0], [0], [1], [0, 0, 1, 1], [], []>} : vector<24x24xbf16>, vector<24x8xbf16>, vector<24x8xf32> -> vector<24x8xf32>
    %95 = vector.extract_strided_slice %34 {offsets = [0, 24], sizes = [24, 8], strides = [1, 1]} : vector<24x96xbf16> to vector<24x8xbf16>
    %96 = vector.extract_strided_slice %34 {offsets = [0, 56], sizes = [24, 8], strides = [1, 1]} : vector<24x96xbf16> to vector<24x8xbf16>
    %97 = vector.extract_strided_slice %34 {offsets = [0, 88], sizes = [24, 8], strides = [1, 1]} : vector<24x96xbf16> to vector<24x8xbf16>
    %cst_33 = arith.constant dense<0.000000e+00> : vector<24x24xf32>
    %98 = tpu.matmul %95, %96, %cst_33 {dimension_numbers = #tpu.dot_dimension_numbers<[1], [1], [0], [0], [0, 0, 1, 0], [], []>} : vector<24x8xbf16>, vector<24x8xbf16>, vector<24x24xf32> -> vector<24x24xf32>
    %cst_34 = arith.constant 0.353553385 : f32
    %99 = vector.broadcast %cst_34 : f32 to vector<24x24xf32>
    %100 = arith.mulf %98, %99 : vector<24x24xf32>
    %101 = vector.broadcast %3 : vector<1x24xf32> to vector<24x24xf32>
    %102 = arith.addf %100, %101 : vector<24x24xf32>
    %cst_35 = arith.constant dense<0xFF800000> : vector<24xf32>
    %103 = vector.multi_reduction <maximumf>, %102, %cst_35 [1] : vector<24x24xf32> to vector<24xf32>
    %104 = vector.shape_cast %103 : vector<24xf32> to vector<24x1xf32>
    %105 = vector.broadcast %104 : vector<24x1xf32> to vector<24x24xf32>
    %106 = arith.subf %102, %105 : vector<24x24xf32>
    %107 = math.exp %106 : vector<24x24xf32>
    %cst_36 = arith.constant dense<0.000000e+00> : vector<24xf32>
    %108 = vector.multi_reduction <add>, %107, %cst_36 [1] : vector<24x24xf32> to vector<24xf32>
    %109 = vector.shape_cast %108 : vector<24xf32> to vector<24x1xf32>
    %110 = tpu.reciprocal %109 {approx = true} : vector<24x1xf32> -> vector<24x1xf32>
    %111 = vector.broadcast %110 : vector<24x1xf32> to vector<24x24xf32>
    %112 = arith.mulf %107, %111 : vector<24x24xf32>
    %113 = arith.truncf %112 : vector<24x24xf32> to vector<24x24xbf16>
    %cst_37 = arith.constant dense<0.000000e+00> : vector<24x8xf32>
    %114 = tpu.matmul %113, %97, %cst_37 {dimension_numbers = #tpu.dot_dimension_numbers<[1], [0], [0], [1], [0, 0, 1, 1], [], []>} : vector<24x24xbf16>, vector<24x8xbf16>, vector<24x8xf32> -> vector<24x8xf32>
    %115 = tpu.concatenate %54, %74, %94, %114 in 1 : vector<24x8xf32>, vector<24x8xf32>, vector<24x8xf32>, vector<24x8xf32> -> vector<24x32xf32>
    %116 = arith.truncf %115 : vector<24x32xf32> to vector<24x32xbf16>
    %c0_38 = arith.constant 0 : index
    %c0_39 = arith.constant 0 : index
    %117 = vector.load %arg7[%c0_38, %c0_39] : memref<32x32xbf16, #tpu.memory_space<vmem>>, vector<32x32xbf16>
    %cst_40 = arith.constant dense<0.000000e+00> : vector<24x32xf32>
    %118 = tpu.matmul %116, %117, %cst_40 {dimension_numbers = #tpu.dot_dimension_numbers<[1], [0], [0], [1], [0, 0, 1, 1], [], []>} : vector<24x32xbf16>, vector<32x32xbf16>, vector<24x32xf32> -> vector<24x32xf32>
    %c0_41 = arith.constant 0 : index
    %c0_42 = arith.constant 0 : index
    %119 = vector.load %arg8[%c0_41, %c0_42] : memref<1x32xf32, #tpu.memory_space<vmem>>, vector<1x32xf32>
    %120 = vector.broadcast %119 : vector<1x32xf32> to vector<24x32xf32>
    %121 = arith.addf %118, %120 : vector<24x32xf32>
    %122 = arith.addf %1, %121 : vector<24x32xf32>
    %c0_43 = arith.constant 0 : index
    %c0_44 = arith.constant 0 : index
    %123 = vector.load %arg9[%c0_43, %c0_44] : memref<1x32xf32, #tpu.memory_space<vmem>>, vector<1x32xf32>
    %c0_45 = arith.constant 0 : index
    %c0_46 = arith.constant 0 : index
    %124 = vector.load %arg10[%c0_45, %c0_46] : memref<1x32xf32, #tpu.memory_space<vmem>>, vector<1x32xf32>
    %cst_47 = arith.constant dense<0.000000e+00> : vector<24xf32>
    %125 = vector.multi_reduction <add>, %122, %cst_47 [1] : vector<24x32xf32> to vector<24xf32>
    %126 = vector.shape_cast %125 : vector<24xf32> to vector<24x1xf32>
    %cst_48 = arith.constant 3.200000e+01 : f32
    %127 = vector.broadcast %cst_48 : f32 to vector<24x1xf32>
    %128 = arith.divf %126, %127 : vector<24x1xf32>
    %129 = vector.broadcast %128 : vector<24x1xf32> to vector<24x32xf32>
    %130 = arith.subf %122, %129 : vector<24x32xf32>
    %131 = arith.mulf %130, %130 : vector<24x32xf32>
    %cst_49 = arith.constant dense<0.000000e+00> : vector<24xf32>
    %132 = vector.multi_reduction <add>, %131, %cst_49 [1] : vector<24x32xf32> to vector<24xf32>
    %133 = vector.shape_cast %132 : vector<24xf32> to vector<24x1xf32>
    %cst_50 = arith.constant 3.200000e+01 : f32
    %134 = vector.broadcast %cst_50 : f32 to vector<24x1xf32>
    %135 = arith.divf %133, %134 : vector<24x1xf32>
    %136 = vector.broadcast %128 : vector<24x1xf32> to vector<24x32xf32>
    %137 = arith.subf %122, %136 : vector<24x32xf32>
    %cst_51 = arith.constant 9.99999974E-6 : f32
    %138 = vector.broadcast %cst_51 : f32 to vector<24x1xf32>
    %139 = arith.addf %135, %138 : vector<24x1xf32>
    %140 = math.rsqrt %139 : vector<24x1xf32>
    %141 = vector.broadcast %140 : vector<24x1xf32> to vector<24x32xf32>
    %142 = arith.mulf %137, %141 : vector<24x32xf32>
    %143 = vector.broadcast %123 : vector<1x32xf32> to vector<24x32xf32>
    %144 = arith.mulf %142, %143 : vector<24x32xf32>
    %145 = vector.broadcast %124 : vector<1x32xf32> to vector<24x32xf32>
    %146 = arith.addf %144, %145 : vector<24x32xf32>
    %147 = arith.truncf %146 : vector<24x32xf32> to vector<24x32xbf16>
    %c0_52 = arith.constant 0 : index
    %c0_53 = arith.constant 0 : index
    %148 = vector.load %arg11[%c0_52, %c0_53] : memref<32x128xbf16, #tpu.memory_space<vmem>>, vector<32x128xbf16>
    %cst_54 = arith.constant dense<0.000000e+00> : vector<24x128xf32>
    %149 = tpu.matmul %147, %148, %cst_54 {dimension_numbers = #tpu.dot_dimension_numbers<[1], [0], [0], [1], [0, 0, 1, 1], [], []>} : vector<24x32xbf16>, vector<32x128xbf16>, vector<24x128xf32> -> vector<24x128xf32>
    %c0_55 = arith.constant 0 : index
    %c0_56 = arith.constant 0 : index
    %150 = vector.load %arg12[%c0_55, %c0_56] : memref<1x128xf32, #tpu.memory_space<vmem>>, vector<1x128xf32>
    %151 = vector.broadcast %150 : vector<1x128xf32> to vector<24x128xf32>
    %152 = arith.addf %149, %151 : vector<24x128xf32>
    %cst_57 = arith.constant 5.000000e-01 : f32
    %153 = vector.broadcast %cst_57 : f32 to vector<24x128xf32>
    %154 = arith.mulf %153, %152 : vector<24x128xf32>
    %cst_58 = arith.constant 4.471500e-02 : f32
    %155 = vector.broadcast %cst_58 : f32 to vector<24x128xf32>
    %156 = arith.mulf %155, %152 : vector<24x128xf32>
    %157 = arith.mulf %156, %152 : vector<24x128xf32>
    %158 = arith.mulf %157, %152 : vector<24x128xf32>
    %159 = arith.addf %152, %158 : vector<24x128xf32>
    %cst_59 = arith.constant 0.797884583 : f32
    %160 = vector.broadcast %cst_59 : f32 to vector<24x128xf32>
    %161 = arith.mulf %160, %159 : vector<24x128xf32>
    %162 = math.tanh %161 : vector<24x128xf32>
    %cst_60 = arith.constant 1.000000e+00 : f32
    %163 = vector.broadcast %cst_60 : f32 to vector<24x128xf32>
    %164 = arith.addf %163, %162 : vector<24x128xf32>
    %165 = arith.mulf %154, %164 : vector<24x128xf32>
    %166 = arith.truncf %165 : vector<24x128xf32> to vector<24x128xbf16>
    %c0_61 = arith.constant 0 : index
    %c0_62 = arith.constant 0 : index
    %167 = vector.load %arg13[%c0_61, %c0_62] : memref<128x32xbf16, #tpu.memory_space<vmem>>, vector<128x32xbf16>
    %cst_63 = arith.constant dense<0.000000e+00> : vector<24x32xf32>
    %168 = tpu.matmul %166, %167, %cst_63 {dimension_numbers = #tpu.dot_dimension_numbers<[1], [0], [0], [1], [0, 0, 1, 1], [], []>} : vector<24x128xbf16>, vector<128x32xbf16>, vector<24x32xf32> -> vector<24x32xf32>
    %c0_64 = arith.constant 0 : index
    %c0_65 = arith.constant 0 : index
    %169 = vector.load %arg14[%c0_64, %c0_65] : memref<1x32xf32, #tpu.memory_space<vmem>>, vector<1x32xf32>
    %170 = vector.broadcast %169 : vector<1x32xf32> to vector<24x32xf32>
    %171 = arith.addf %168, %170 : vector<24x32xf32>
    %172 = arith.addf %122, %171 : vector<24x32xf32>
    %c0_66 = arith.constant 0 : index
    %c0_67 = arith.constant 0 : index
    %c0_68 = arith.constant 0 : index
    %173 = vector.load %arg15[%c0_66, %c0_67, %c0_68] : memref<1x24x32xf32, #tpu.memory_space<vmem>>, vector<1x24x32xf32>
    %174 = vector.shape_cast %173 : vector<1x24x32xf32> to vector<24x32xf32>
    %175 = vector.shape_cast %172 : vector<24x32xf32> to vector<1x24x32xf32>
    tpu.vector_store %arg15[%c0_66, %c0_67, %c0_68], %175 {strides = array<i32>} : memref<1x24x32xf32, #tpu.memory_space<vmem>>, vector<1x24x32xf32>,
    return
  }
  func.func @transform_0(%arg0: i32) -> (i32, i32, i32) {
    %c0_i32 = arith.constant 0 : i32
    %c0_i32_0 = arith.constant 0 : i32
    %c0_i32_1 = arith.constant 0 : i32
    return %arg0, %c0_i32, %c0_i32_0 : i32, i32, i32
  }
  func.func @transform_1(%arg0: i32) -> (i32, i32, i32) {
    %c0_i32 = arith.constant 0 : i32
    %c0_i32_0 = arith.constant 0 : i32
    %c0_i32_1 = arith.constant 0 : i32
    return %arg0, %c0_i32, %c0_i32_0 : i32, i32, i32
  }
  func.func @transform_2(%arg0: i32) -> (i32, i32) {
    %c0_i32 = arith.constant 0 : i32
    %c0_i32_0 = arith.constant 0 : i32
    %c0_i32_1 = arith.constant 0 : i32
    return %c0_i32, %c0_i32_0 : i32, i32
  }
  func.func @transform_3(%arg0: i32) -> (i32, i32) {
    %c0_i32 = arith.constant 0 : i32
    %c0_i32_0 = arith.constant 0 : i32
    %c0_i32_1 = arith.constant 0 : i32
    return %c0_i32, %c0_i32_0 : i32, i32
  }
  func.func @transform_4(%arg0: i32) -> (i32, i32) {
    %c0_i32 = arith.constant 0 : i32
    %c0_i32_0 = arith.constant 0 : i32
    %c0_i32_1 = arith.constant 0 : i32
    return %c0_i32, %c0_i32_0 : i32, i32
  }
  func.func @transform_5(%arg0: i32) -> (i32, i32) {
    %c0_i32 = arith.constant 0 : i32
    %c0_i32_0 = arith.constant 0 : i32
    %c0_i32_1 = arith.constant 0 : i32
    return %c0_i32, %c0_i32_0 : i32, i32
  }
  func.func @transform_6(%arg0: i32) -> (i32, i32) {
    %c0_i32 = arith.constant 0 : i32
    %c0_i32_0 = arith.constant 0 : i32
    %c0_i32_1 = arith.constant 0 : i32
    return %c0_i32, %c0_i32_0 : i32, i32
  }
  func.func @transform_7(%arg0: i32) -> (i32, i32) {
    %c0_i32 = arith.constant 0 : i32
    %c0_i32_0 = arith.constant 0 : i32
    %c0_i32_1 = arith.constant 0 : i32
    return %c0_i32, %c0_i32_0 : i32, i32
  }
  func.func @transform_8(%arg0: i32) -> (i32, i32) {
    %c0_i32 = arith.constant 0 : i32
    %c0_i32_0 = arith.constant 0 : i32
    %c0_i32_1 = arith.constant 0 : i32
    return %c0_i32, %c0_i32_0 : i32, i32
  }
  func.func @transform_9(%arg0: i32) -> (i32, i32) {
    %c0_i32 = arith.constant 0 : i32
    %c0_i32_0 = arith.constant 0 : i32
    %c0_i32_1 = arith.constant 0 : i32
    return %c0_i32, %c0_i32_0 : i32, i32
  }
  func.func @transform_10(%arg0: i32) -> (i32, i32) {
    %c0_i32 = arith.constant 0 : i32
    %c0_i32_0 = arith.constant 0 : i32
    %c0_i32_1 = arith.constant 0 : i32
    return %c0_i32, %c0_i32_0 : i32, i32
  }
  func.func @transform_11(%arg0: i32) -> (i32, i32) {
    %c0_i32 = arith.constant 0 : i32
    %c0_i32_0 = arith.constant 0 : i32
    %c0_i32_1 = arith.constant 0 : i32
    return %c0_i32, %c0_i32_0 : i32, i32
  }
  func.func @transform_12(%arg0: i32) -> (i32, i32) {
    %c0_i32 = arith.constant 0 : i32
    %c0_i32_0 = arith.constant 0 : i32
    %c0_i32_1 = arith.constant 0 : i32
    return %c0_i32, %c0_i32_0 : i32, i32
  }
  func.func @transform_13(%arg0: i32) -> (i32, i32) {
    %c0_i32 = arith.constant 0 : i32
    %c0_i32_0 = arith.constant 0 : i32
    %c0_i32_1 = arith.constant 0 : i32
    return %c0_i32, %c0_i32_0 : i32, i32
  }
  func.func @transform_14(%arg0: i32) -> (i32, i32, i32) {
    %c0_i32 = arith.constant 0 : i32
    %c0_i32_0 = arith.constant 0 : i32
    %c0_i32_1 = arith.constant 0 : i32
    return %arg0, %c0_i32, %c0_i32_0 : i32, i32, i32
  }
}

</mosaic_0001>

<llo_original>
// kernel: vit_forward.6
$region0: #{vit_forward.6}
  #allocation0 [shape = 'u32[]', space=smem, size = 0x4, offset = 0x4, fixed_abs, tag = 'smem constant byte address 0x4 - core index']
  #allocation1 [shape = 'u32[144,128]{1,0:T(1,128)}', space=vmem, size = 0x12000, scoped, tag = 'internal scratch']
  %s0 = inlined_call_operand.vmem [shape: f32[32,48], index: 0, kind: input, shape index: {}]
  %s1 = inlined_call_operand.vmem [shape: f32[48,32], index: 1, kind: input, shape index: {}]
  %s2 = inlined_call_operand.vmem [shape: f32[1,32], index: 2, kind: input, shape index: {}]
  %s3 = inlined_call_operand.vmem [shape: f32[32,32], index: 3, kind: output, shape index: {}]
  %s4 = sld [smem:[#allocation0]]
  $region22: #{vit_forward.6} parent=0
    _
  %s6 = ssub.s32 1, %s4
  %s7 = scalar_select 0, %s6, %s4
  // Predicated region
  $region2: #{vit_forward.6} parent=0 // pred_check
    _
  $region3: #{vit_forward.6} parent=0 // pred_check_branch
    %9 = sbr.rel (0) target = $region5
  $region4: #{vit_forward.6} parent=0 // pred_region
    _
  $region5: #{vit_forward.6} parent=0 // pred_fallthru
    _
  // Predicated region
  $region6: #{vit_forward.6} parent=0 // pred_check
    _
  $region7: #{vit_forward.6} parent=0 // pred_check_branch
    %11 = sbr.rel (0) target = $region9
  $region8: #{vit_forward.6} parent=0 // pred_region
    _
  $region9: #{vit_forward.6} parent=0 // pred_fallthru
    _
  // Predicated region
  $region10: #{vit_forward.6} parent=0 // pred_check
    _
  $region11: #{vit_forward.6} parent=0 // pred_check_branch
    %13 = sbr.rel (0) target = $region13
  $region12: #{vit_forward.6} parent=0 // pred_region
    _
  $region13: #{vit_forward.6} parent=0 // pred_fallthru
    _
  %v14 = vld [vmem:[%s0] sm:$0xff]
  %v15 = vld [vmem:[%s0 + $0x8] sm:$0xff]
  %v16 = vld [vmem:[%s0 + $0x10] sm:$0xff]
  %v17 = vld [vmem:[%s0 + $0x18] sm:$0xff]
  %v18 = vld [vmem:[%s1] sm:$0xff]
  %v19 = vld [vmem:[%s1 + $0x8] sm:$0xff]
  %v20 = vld [vmem:[%s1 + $0x10] sm:$0xff]
  %v21 = vld [vmem:[%s1 + $0x18] sm:$0xff]
  %v22 = vld [vmem:[%s1 + $0x20] sm:$0xff]
  %v23 = vld [vmem:[%s1 + $0x28] sm:$0xff]
  %v24 = vld [vmem:[%s2] sm:$0x1]
  %v26 = vlaneseq
  %v27 = vshrl.u32 %v26, 7
  %v28 = vsub.s32 0, %v27
  %v29 = vrot.slane %v24, %v28
  %vm31 = vcmask 392192
  %v33 = vsel %vm31, %v14, 0
  %v36 = vsel %vm31, %v15, 0
  %v39 = vsel %vm31, %v16, 0
  %v42 = vsel %vm31, %v17, 0
  %44 = vmatprep.subr.mxu0 0.0
  %45 = vmatpush1.msra.mxu0 0.0
  %46 = vmatprep.subr.mxu0 0.0
  %47 = vmatpush1.msra.mxu0 0.0
  %48 = vmatprep.subr.mxu0 0.0
  %49 = vmatpush1.msra.mxu0 0.0
  %50 = vmatprep.subr.mxu0 0.0
  %51 = vmatpush1.msra.mxu0 0.0
  %52 = vmatprep.subr.mxu0 0.0
  %53 = vmatpush1.msra.mxu0 0.0
  %54 = vmatprep.subr.mxu0 0.0
  %55 = vmatpush1.msra.mxu0 0.0
  %56 = vmatprep.subr.mxu0 0.0
  %57 = vmatpush1.msra.mxu0 0.0
  %58 = vmatprep.subr.mxu0 0.0
  %59 = vmatpush1.msra.mxu0 0.0
  %60 = vmatprep.subr.mxu0 0.0
  %61 = vmatpush1.msra.mxu0 0.0
  %62 = vmatprep.subr.mxu0 0.0
  %63 = vmatpush1.msra.mxu0 0.0
  %64 = vmatprep.subr.mxu0 0.0
  %65 = vmatpush1.msra.mxu0 %v23
  %66 = vmatprep.subr.mxu0 0.0
  %67 = vmatpush1.msra.mxu0 %v22
  %68 = vmatprep.subr.mxu0 0.0
  %69 = vmatpush1.msra.mxu0 %v21
  %70 = vmatprep.subr.mxu0 0.0
  %71 = vmatpush1.msra.mxu0 %v20
  %72 = vmatprep.subr.mxu0 0.0
  %73 = vmatpush1.msra.mxu0 %v19
  %74 = vmatprep.subr.mxu0 0.0
  %75 = vmatpush1.msra.mxu0 %v18
  %76 = vmatprep.subr.mxu0 0.0
  %77 = vmatpush2.msra.mxu0 0.0
  %78 = vmatprep.subr.mxu0 0.0
  %79 = vmatpush2.msra.mxu0 0.0
  %80 = vmatprep.subr.mxu0 0.0
  %81 = vmatpush2.msra.mxu0 0.0
  %82 = vmatprep.subr.mxu0 0.0
  %83 = vmatpush2.msra.mxu0 0.0
  %84 = vmatprep.subr.mxu0 0.0
  %85 = vmatpush2.msra.mxu0 0.0
  %86 = vmatprep.subr.mxu0 0.0
  %87 = vmatpush2.msra.mxu0 0.0
  %88 = vmatprep.subr.mxu0 0.0
  %89 = vmatpush2.msra.mxu0 0.0
  %90 = vmatprep.subr.mxu0 0.0
  %91 = vmatpush2.msra.mxu0 0.0
  %92 = vmatprep.subr.mxu0 0.0
  %93 = vmatpush2.msra.mxu0 0.0
  %94 = vmatprep.subr.mxu0 0.0
  %95 = vmatpush2.msra.mxu0 0.0
  %96 = vmatprep.subr.mxu0 0.0
  %97 = vmatpush2.msra.mxu0 0.0
  %98 = vmatprep.subr.mxu0 0.0
  %99 = vmatpush2.msra.mxu0 0.0
  %100 = vmatprep.subr.mxu0 0.0
  %101 = vmatpush2.msra.mxu0 0.0
  %102 = vmatprep.subr.mxu0 0.0
  %103 = vmatpush2.msra.mxu0 0.0
  %104 = vmatprep.subr.mxu0 0.0
  %105 = vmatpush2.msra.mxu0 0.0
  %106 = vmatprep.subr.mxu0 0.0
  %107 = vmatpush2.msra.mxu0 0.0
  %108 = vmatprep.mubr.f32.mxu0 0.0
  %109 = vmatmul.mubr.f32.gmra.mxu0 %v33
  %v110 = vpop.f32.mrf.mxu0
  %v111 = vadd.f32 %v29, %v110
  %v112 = vpop.f32.mrf.mxu0
  %113 = vmatprep.mubr.f32.mxu0 0.0
  %114 = vmatmul.mubr.f32.gmra.mxu0 %v36
  %v115 = vpop.f32.mrf.mxu0
  %v116 = vadd.f32 %v29, %v115
  %v117 = vpop.f32.mrf.mxu0
  %118 = vmatprep.mubr.f32.mxu0 0.0
  %119 = vmatmul.mubr.f32.gmra.mxu0 %v39
  %v120 = vpop.f32.mrf.mxu0
  %v121 = vadd.f32 %v29, %v120
  %v122 = vpop.f32.mrf.mxu0
  %123 = vmatprep.mubr.f32.mxu0 0.0
  %124 = vmatmul.mubr.f32.gmra.mxu0 %v42
  %v125 = vpop.f32.mrf.mxu0
  %v126 = vadd.f32 %v29, %v125
  %v127 = vpop.f32.mrf.mxu0
  %128 = vdwg.mxu0
  %vm129 = vcmask 261120
  %130 = vst.msk [vmem:[%s3] sm:$0xff] %vm129, %v111
  %131 = vst.msk [vmem:[%s3 + $0x8] sm:$0xff] %vm129, %v116
  %132 = vst.msk [vmem:[%s3 + $0x10] sm:$0xff] %vm129, %v121
  %133 = vst.msk [vmem:[%s3 + $0x18] sm:$0xff] %vm129, %v126
  // Predicated region
  $region14: #{vit_forward.6} parent=0 // pred_check
    _
  $region15: #{vit_forward.6} parent=0 // pred_check_branch
    %135 = sbr.rel (0) target = $region17
  $region16: #{vit_forward.6} parent=0 // pred_region
    _
  $region17: #{vit_forward.6} parent=0 // pred_fallthru
    _
  // Predicated region
  $region18: #{vit_forward.6} parent=0 // pred_check
    _
  $region19: #{vit_forward.6} parent=0 // pred_check_branch
    %137 = sbr.rel (0) target = $region21
  $region20: #{vit_forward.6} parent=0 // pred_region
    _
  $region21: #{vit_forward.6} parent=0 // pred_fallthru
    _

// kernel: vit_forward.7
$region0: #{vit_forward.7}
  #allocation0 [shape = 'u32[]', space=smem, size = 0x4, offset = 0x4, fixed_abs, tag = 'smem constant byte address 0x4 - core index']
  #allocation1 [shape = 'u32[144,128]{1,0:T(1,128)}', space=vmem, size = 0x12000, scoped, tag = 'internal scratch']
  %s0 = inlined_call_operand.vmem [shape: f32[2,8,32], index: 0, kind: input, shape index: {}]
  %s1 = inlined_call_operand.vmem [shape: f32[2,128,32], index: 1, kind: input, shape index: {}]
  %s2 = inlined_call_operand.vmem [shape: f32[2,8,128], index: 2, kind: output, shape index: {}]
  %s3 = sld [smem:[#allocation0]]
  $region18: #{vit_forward.7} parent=0
    _
  %s5 = ssub.s32 1, %s3
  %s6 = scalar_select 0, %s5, %s3
  // Predicated region
  $region2: #{vit_forward.7} parent=0 // pred_check
    _
  $region3: #{vit_forward.7} parent=0 // pred_check_branch
    %8 = sbr.rel (0) target = $region5
  $region4: #{vit_forward.7} parent=0 // pred_region
    _
  $region5: #{vit_forward.7} parent=0 // pred_fallthru
    _
  // Predicated region
  $region6: #{vit_forward.7} parent=0 // pred_check
    _
  $region7: #{vit_forward.7} parent=0 // pred_check_branch
    %10 = sbr.rel (0) target = $region9
  $region8: #{vit_forward.7} parent=0 // pred_region
    _
  $region9: #{vit_forward.7} parent=0 // pred_fallthru
    _
  %v11 = vld [vmem:[%s0] sm:$0xff]
  %v12 = vld [vmem:[%s0 + $0x8] sm:$0xff]
  %vm13 = vcmask 261120
  %v14 = vsel %vm13, %v11, 0.0
  %15 = vadd.xlane.f32.xlu0 %v14
  %v16 = vpop.xlane.xlu0 %15
  %v17 = vsel %vm13, %v12, 0.0
  %18 = vadd.xlane.f32.xlu0 %v17
  %v19 = vpop.xlane.xlu0 %18
  %v20 = vrcp.pop 32.0
  %v21 = vmul.f32 %v16, %v20
  %v22 = vmul.f32 %v19, %v20
  %v23 = vsub.f32 %v11, %v21
  %v24 = vsub.f32 %v12, %v22
  %v25 = vmul.f32 %v23, %v23
  %v26 = vmul.f32 %v24, %v24
  %v27 = vsel %vm13, %v25, 0.0
  %28 = vadd.xlane.f32.xlu0 %v27
  %v29 = vpop.xlane.xlu0 %28
  %v30 = vsel %vm13, %v26, 0.0
  %31 = vadd.xlane.f32.xlu0 %v30
  %v32 = vpop.xlane.xlu0 %31
  %v33 = vadd.f32 %v29, 1e-24
  %v34 = vadd.f32 %v32, 1e-24
  %v35 = vrsqrt.pop %v33
  %v36 = vrsqrt.pop %v34
  %v37 = vmul.f32 %v23, %v35
  %v38 = vmul.f32 %v24, %v36
  %v39 = vld [vmem:[%s1] sm:$0xff]
  %v40 = vld [vmem:[%s1 + $0x8] sm:$0xff]
  %v41 = vld [vmem:[%s1 + $0x10] sm:$0xff]
  %v42 = vld [vmem:[%s1 + $0x18] sm:$0xff]
  %v43 = vld [vmem:[%s1 + $0x20] sm:$0xff]
  %v44 = vld [vmem:[%s1 + $0x28] sm:$0xff]
  %v45 = vld [vmem:[%s1 + $0x30] sm:$0xff]
  %v46 = vld [vmem:[%s1 + $0x38] sm:$0xff]
  %v47 = vld [vmem:[%s1 + $0x40] sm:$0xff]
  %v48 = vld [vmem:[%s1 + $0x48] sm:$0xff]
  %v49 = vld [vmem:[%s1 + $0x50] sm:$0xff]
  %v50 = vld [vmem:[%s1 + $0x58] sm:$0xff]
  %v51 = vld [vmem:[%s1 + $0x60] sm:$0xff]
  %v52 = vld [vmem:[%s1 + $0x68] sm:$0xff]
  %v53 = vld [vmem:[%s1 + $0x70] sm:$0xff]
  %v54 = vld [vmem:[%s1 + $0x78] sm:$0xff]
  %v55 = vld [vmem:[%s1 + $0x80] sm:$0xff]
  %v56 = vld [vmem:[%s1 + $0x88] sm:$0xff]
  %v57 = vld [vmem:[%s1 + $0x90] sm:$0xff]
  %v58 = vld [vmem:[%s1 + $0x98] sm:$0xff]
  %v59 = vld [vmem:[%s1 + $0xa0] sm:$0xff]
  %v60 = vld [vmem:[%s1 + $0xa8] sm:$0xff]
  %v61 = vld [vmem:[%s1 + $0xb0] sm:$0xff]
  %v62 = vld [vmem:[%s1 + $0xb8] sm:$0xff]
  %v63 = vld [vmem:[%s1 + $0xc0] sm:$0xff]
  %v64 = vld [vmem:[%s1 + $0xc8] sm:$0xff]
  %v65 = vld [vmem:[%s1 + $0xd0] sm:$0xff]
  %v66 = vld [vmem:[%s1 + $0xd8] sm:$0xff]
  %v67 = vld [vmem:[%s1 + $0xe0] sm:$0xff]
  %v68 = vld [vmem:[%s1 + $0xe8] sm:$0xff]
  %v69 = vld [vmem:[%s1 + $0xf0] sm:$0xff]
  %v70 = vld [vmem:[%s1 + $0xf8] sm:$0xff]
  %v71 = vsel %vm13, %v39, 0.0
  %72 = vadd.xlane.f32.xlu0 %v71
  %v73 = vpop.xlane.xlu0 %72
  %v74 = vsel %vm13, %v40, 0.0
  %75 = vadd.xlane.f32.xlu0 %v74
  %v76 = vpop.xlane.xlu0 %75
  %v77 = vsel %vm13, %v41, 0.0
  %78 = vadd.xlane.f32.xlu0 %v77
  %v79 = vpop.xlane.xlu0 %78
  %v80 = vsel %vm13, %v42, 0.0
  %81 = vadd.xlane.f32.xlu0 %v80
  %v82 = vpop.xlane.xlu0 %81
  %v83 = vsel %vm13, %v43, 0.0
  %84 = vadd.xlane.f32.xlu0 %v83
  %v85 = vpop.xlane.xlu0 %84
  %v86 = vsel %vm13, %v44, 0.0
  %87 = vadd.xlane.f32.xlu0 %v86
  %v88 = vpop.xlane.xlu0 %87
  %v89 = vsel %vm13, %v45, 0.0
  %90 = vadd.xlane.f32.xlu0 %v89
  %v91 = vpop.xlane.xlu0 %90
  %v92 = vsel %vm13, %v46, 0.0
  %93 = vadd.xlane.f32.xlu0 %v92
  %v94 = vpop.xlane.xlu0 %93
  %v95 = vsel %vm13, %v47, 0.0
  %96 = vadd.xlane.f32.xlu0 %v95
  %v97 = vpop.xlane.xlu0 %96
  %v98 = vsel %vm13, %v48, 0.0
  %99 = vadd.xlane.f32.xlu0 %v98
  %v100 = vpop.xlane.xlu0 %99
  %v101 = vsel %vm13, %v49, 0.0
  %102 = vadd.xlane.f32.xlu0 %v101
  %v103 = vpop.xlane.xlu0 %102
  %v104 = vsel %vm13, %v50, 0.0
  %105 = vadd.xlane.f32.xlu0 %v104
  %v106 = vpop.xlane.xlu0 %105
  %v107 = vsel %vm13, %v51, 0.0
  %108 = vadd.xlane.f32.xlu0 %v107
  %v109 = vpop.xlane.xlu0 %108
  %v110 = vsel %vm13, %v52, 0.0
  %111 = vadd.xlane.f32.xlu0 %v110
  %v112 = vpop.xlane.xlu0 %111
  %v113 = vsel %vm13, %v53, 0.0
  %114 = vadd.xlane.f32.xlu0 %v113
  %v115 = vpop.xlane.xlu0 %114
  %v116 = vsel %vm13, %v54, 0.0
  %117 = vadd.xlane.f32.xlu0 %v116
  %v118 = vpop.xlane.xlu0 %117
  %v119 = vsel %vm13, %v55, 0.0
  %120 = vadd.xlane.f32.xlu0 %v119
  %v121 = vpop.xlane.xlu0 %120
  %v122 = vsel %vm13, %v56, 0.0
  %123 = vadd.xlane.f32.xlu0 %v122
  %v124 = vpop.xlane.xlu0 %123
  %v125 = vsel %vm13, %v57, 0.0
  %126 = vadd.xlane.f32.xlu0 %v125
  %v127 = vpop.xlane.xlu0 %126
  %v128 = vsel %vm13, %v58, 0.0
  %129 = vadd.xlane.f32.xlu0 %v128
  %v130 = vpop.xlane.xlu0 %129
  %v131 = vsel %vm13, %v59, 0.0
  %132 = vadd.xlane.f32.xlu0 %v131
  %v133 = vpop.xlane.xlu0 %132
  %v134 = vsel %vm13, %v60, 0.0
  %135 = vadd.xlane.f32.xlu0 %v134
  %v136 = vpop.xlane.xlu0 %135
  %v137 = vsel %vm13, %v61, 0.0
  %138 = vadd.xlane.f32.xlu0 %v137
  %v139 = vpop.xlane.xlu0 %138
  %v140 = vsel %vm13, %v62, 0.0
  %141 = vadd.xlane.f32.xlu0 %v140
  %v142 = vpop.xlane.xlu0 %141
  %v143 = vsel %vm13, %v63, 0.0
  %144 = vadd.xlane.f32.xlu0 %v143
  %v145 = vpop.xlane.xlu0 %144
  %v146 = vsel %vm13, %v64, 0.0
  %147 = vadd.xlane.f32.xlu0 %v146
  %v148 = vpop.xlane.xlu0 %147
  %v149 = vsel %vm13, %v65, 0.0
  %150 = vadd.xlane.f32.xlu0 %v149
  %v151 = vpop.xlane.xlu0 %150
  %v152 = vsel %vm13, %v66, 0.0
  %153 = vadd.xlane.f32.xlu0 %v152
  %v154 = vpop.xlane.xlu0 %153
  %v155 = vsel %vm13, %v67, 0.0
  %156 = vadd.xlane.f32.xlu0 %v155
  %v157 = vpop.xlane.xlu0 %156
  %v158 = vsel %vm13, %v68, 0.0
  %159 = vadd.xlane.f32.xlu0 %v158
  %v160 = vpop.xlane.xlu0 %159
  %v161 = vsel %vm13, %v69, 0.0
  %162 = vadd.xlane.f32.xlu0 %v161
  %v163 = vpop.xlane.xlu0 %162
  %v164 = vsel %vm13, %v70, 0.0
  %165 = vadd.xlane.f32.xlu0 %v164
  %v166 = vpop.xlane.xlu0 %165
  %v167 = vmul.f32 %v73, %v20
  %v168 = vmul.f32 %v76, %v20
  %v169 = vmul.f32 %v79, %v20
  %v170 = vmul.f32 %v82, %v20
  %v171 = vmul.f32 %v85, %v20
  %v172 = vmul.f32 %v88, %v20
  %v173 = vmul.f32 %v91, %v20
  %v174 = vmul.f32 %v94, %v20
  %v175 = vmul.f32 %v97, %v20
  %v176 = vmul.f32 %v100, %v20
  %v177 = vmul.f32 %v103, %v20
  %v178 = vmul.f32 %v106, %v20
  %v179 = vmul.f32 %v109, %v20
  %v180 = vmul.f32 %v112, %v20
  %v181 = vmul.f32 %v115, %v20
  %v182 = vmul.f32 %v118, %v20
  %v183 = vmul.f32 %v121, %v20
  %v184 = vmul.f32 %v124, %v20
  %v185 = vmul.f32 %v127, %v20
  %v186 = vmul.f32 %v130, %v20
  %v187 = vmul.f32 %v133, %v20
  %v188 = vmul.f32 %v136, %v20
  %v189 = vmul.f32 %v139, %v20
  %v190 = vmul.f32 %v142, %v20
  %v191 = vmul.f32 %v145, %v20
  %v192 = vmul.f32 %v148, %v20
  %v193 = vmul.f32 %v151, %v20
  %v194 = vmul.f32 %v154, %v20
  %v195 = vmul.f32 %v157, %v20
  %v196 = vmul.f32 %v160, %v20
  %v197 = vmul.f32 %v163, %v20
  %v198 = vmul.f32 %v166, %v20
  %v199 = vsub.f32 %v39, %v167
  %v200 = vsub.f32 %v40, %v168
  %v201 = vsub.f32 %v41, %v169
  %v202 = vsub.f32 %v42, %v170
  %v203 = vsub.f32 %v43, %v171
  %v204 = vsub.f32 %v44, %v172
  %v205 = vsub.f32 %v45, %v173
  %v206 = vsub.f32 %v46, %v174
  %v207 = vsub.f32 %v47, %v175
  %v208 = vsub.f32 %v48, %v176
  %v209 = vsub.f32 %v49, %v177
  %v210 = vsub.f32 %v50, %v178
  %v211 = vsub.f32 %v51, %v179
  %v212 = vsub.f32 %v52, %v180
  %v213 = vsub.f32 %v53, %v181
  %v214 = vsub.f32 %v54, %v182
  %v215 = vsub.f32 %v55, %v183
  %v216 = vsub.f32 %v56, %v184
  %v217 = vsub.f32 %v57, %v185
  %v218 = vsub.f32 %v58, %v186
  %v219 = vsub.f32 %v59, %v187
  %v220 = vsub.f32 %v60, %v188
  %v221 = vsub.f32 %v61, %v189
  %v222 = vsub.f32 %v62, %v190
  %v223 = vsub.f32 %v63, %v191
  %v224 = vsub.f32 %v64, %v192
  %v225 = vsub.f32 %v65, %v193
  %v226 = vsub.f32 %v66, %v194
  %v227 = vsub.f32 %v67, %v195
  %v228 = vsub.f32 %v68, %v196
  %v229 = vsub.f32 %v69, %v197
  %v230 = vsub.f32 %v70, %v198
  %v231 = vmul.f32 %v199, %v199
  %v232 = vmul.f32 %v200, %v200
  %v233 = vmul.f32 %v201, %v201
  %v234 = vmul.f32 %v202, %v202
  %v235 = vmul.f32 %v203, %v203
  %v236 = vmul.f32 %v204, %v204
  %v237 = vmul.f32 %v205, %v205
  %v238 = vmul.f32 %v206, %v206
  %v239 = vmul.f32 %v207, %v207
  %v240 = vmul.f32 %v208, %v208
  %v241 = vmul.f32 %v209, %v209
  %v242 = vmul.f32 %v210, %v210
  %v243 = vmul.f32 %v211, %v211
  %v244 = vmul.f32 %v212, %v212
  %v245 = vmul.f32 %v213, %v213
  %v246 = vmul.f32 %v214, %v214
  %v247 = vmul.f32 %v215, %v215
  %v248 = vmul.f32 %v216, %v216
  %v249 = vmul.f32 %v217, %v217
  %v250 = vmul.f32 %v218, %v218
  %v251 = vmul.f32 %v219, %v219
  %v252 = vmul.f32 %v220, %v220
  %v253 = vmul.f32 %v221, %v221
  %v254 = vmul.f32 %v222, %v222
  %v255 = vmul.f32 %v223, %v223
  %v256 = vmul.f32 %v224, %v224
  %v257 = vmul.f32 %v225, %v225
  %v258 = vmul.f32 %v226, %v226
  %v259 = vmul.f32 %v227, %v227
  %v260 = vmul.f32 %v228, %v228
  %v261 = vmul.f32 %v229, %v229
  %v262 = vmul.f32 %v230, %v230
  %v263 = vsel %vm13, %v231, 0.0
  %264 = vadd.xlane.f32.xlu0 %v263
  %v265 = vpop.xlane.xlu0 %264
  %v266 = vsel %vm13, %v232, 0.0
  %267 = vadd.xlane.f32.xlu0 %v266
  %v268 = vpop.xlane.xlu0 %267
  %v269 = vsel %vm13, %v233, 0.0
  %270 = vadd.xlane.f32.xlu0 %v269
  %v271 = vpop.xlane.xlu0 %270
  %v272 = vsel %vm13, %v234, 0.0
  %273 = vadd.xlane.f32.xlu0 %v272
  %v274 = vpop.xlane.xlu0 %273
  %v275 = vsel %vm13, %v235, 0.0
  %276 = vadd.xlane.f32.xlu0 %v275
  %v277 = vpop.xlane.xlu0 %276
  %v278 = vsel %vm13, %v236, 0.0
  %279 = vadd.xlane.f32.xlu0 %v278
  %v280 = vpop.xlane.xlu0 %279
  %v281 = vsel %vm13, %v237, 0.0
  %282 = vadd.xlane.f32.xlu0 %v281
  %v283 = vpop.xlane.xlu0 %282
  %v284 = vsel %vm13, %v238, 0.0
  %285 = vadd.xlane.f32.xlu0 %v284
  %v286 = vpop.xlane.xlu0 %285
  %v287 = vsel %vm13, %v239, 0.0
  %288 = vadd.xlane.f32.xlu0 %v287
  %v289 = vpop.xlane.xlu0 %288
  %v290 = vsel %vm13, %v240, 0.0
  %291 = vadd.xlane.f32.xlu0 %v290
  %v292 = vpop.xlane.xlu0 %291
  %v293 = vsel %vm13, %v241, 0.0
  %294 = vadd.xlane.f32.xlu0 %v293
  %v295 = vpop.xlane.xlu0 %294
  %v296 = vsel %vm13, %v242, 0.0
  %297 = vadd.xlane.f32.xlu0 %v296
  %v298 = vpop.xlane.xlu0 %297
  %v299 = vsel %vm13, %v243, 0.0
  %300 = vadd.xlane.f32.xlu0 %v299
  %v301 = vpop.xlane.xlu0 %300
  %v302 = vsel %vm13, %v244, 0.0
  %303 = vadd.xlane.f32.xlu0 %v302
  %v304 = vpop.xlane.xlu0 %303
  %v305 = vsel %vm13, %v245, 0.0
  %306 = vadd.xlane.f32.xlu0 %v305
  %v307 = vpop.xlane.xlu0 %306
  %v308 = vsel %vm13, %v246, 0.0
  %309 = vadd.xlane.f32.xlu0 %v308
  %v310 = vpop.xlane.xlu0 %309
  %v311 = vsel %vm13, %v247, 0.0
  %312 = vadd.xlane.f32.xlu0 %v311
  %v313 = vpop.xlane.xlu0 %312
  %v314 = vsel %vm13, %v248, 0.0
  %315 = vadd.xlane.f32.xlu0 %v314
  %v316 = vpop.xlane.xlu0 %315
  %v317 = vsel %vm13, %v249, 0.0
  %318 = vadd.xlane.f32.xlu0 %v317
  %v319 = vpop.xlane.xlu0 %318
  %v320 = vsel %vm13, %v250, 0.0
  %321 = vadd.xlane.f32.xlu0 %v320
  %v322 = vpop.xlane.xlu0 %321
  %v323 = vsel %vm13, %v251, 0.0
  %324 = vadd.xlane.f32.xlu0 %v323
  %v325 = vpop.xlane.xlu0 %324
  %v326 = vsel %vm13, %v252, 0.0
  %327 = vadd.xlane.f32.xlu0 %v326
  %v328 = vpop.xlane.xlu0 %327
  %v329 = vsel %vm13, %v253, 0.0
  %330 = vadd.xlane.f32.xlu0 %v329
  %v331 = vpop.xlane.xlu0 %330
  %v332 = vsel %vm13, %v254, 0.0
  %333 = vadd.xlane.f32.xlu0 %v332
  %v334 = vpop.xlane.xlu0 %333
  %v335 = vsel %vm13, %v255, 0.0
  %336 = vadd.xlane.f32.xlu0 %v335
  %v337 = vpop.xlane.xlu0 %336
  %v338 = vsel %vm13, %v256, 0.0
  %339 = vadd.xlane.f32.xlu0 %v338
  %v340 = vpop.xlane.xlu0 %339
  %v341 = vsel %vm13, %v257, 0.0
  %342 = vadd.xlane.f32.xlu0 %v341
  %v343 = vpop.xlane.xlu0 %342
  %v344 = vsel %vm13, %v258, 0.0
  %345 = vadd.xlane.f32.xlu0 %v344
  %v346 = vpop.xlane.xlu0 %345
  %v347 = vsel %vm13, %v259, 0.0
  %348 = vadd.xlane.f32.xlu0 %v347
  %v349 = vpop.xlane.xlu0 %348
  %v350 = vsel %vm13, %v260, 0.0
  %351 = vadd.xlane.f32.xlu0 %v350
  %v352 = vpop.xlane.xlu0 %351
  %v353 = vsel %vm13, %v261, 0.0
  %354 = vadd.xlane.f32.xlu0 %v353
  %v355 = vpop.xlane.xlu0 %354
  %v356 = vsel %vm13, %v262, 0.0
  %357 = vadd.xlane.f32.xlu0 %v356
  %v358 = vpop.xlane.xlu0 %357
  %v359 = vadd.f32 %v265, 1e-24
  %v360 = vadd.f32 %v268, 1e-24
  %v361 = vadd.f32 %v271, 1e-24
  %v362 = vadd.f32 %v274, 1e-24
  %v363 = vadd.f32 %v277, 1e-24
  %v364 = vadd.f32 %v280, 1e-24
  %v365 = vadd.f32 %v283, 1e-24
  %v366 = vadd.f32 %v286, 1e-24
  %v367 = vadd.f32 %v289, 1e-24
  %v368 = vadd.f32 %v292, 1e-24
  %v369 = vadd.f32 %v295, 1e-24
  %v370 = vadd.f32 %v298, 1e-24
  %v371 = vadd.f32 %v301, 1e-24
  %v372 = vadd.f32 %v304, 1e-24
  %v373 = vadd.f32 %v307, 1e-24
  %v374 = vadd.f32 %v310, 1e-24
  %v375 = vadd.f32 %v313, 1e-24
  %v376 = vadd.f32 %v316, 1e-24
  %v377 = vadd.f32 %v319, 1e-24
  %v378 = vadd.f32 %v322, 1e-24
  %v379 = vadd.f32 %v325, 1e-24
  %v380 = vadd.f32 %v328, 1e-24
  %v381 = vadd.f32 %v331, 1e-24
  %v382 = vadd.f32 %v334, 1e-24
  %v383 = vadd.f32 %v337, 1e-24
  %v384 = vadd.f32 %v340, 1e-24
  %v385 = vadd.f32 %v343, 1e-24
  %v386 = vadd.f32 %v346, 1e-24
  %v387 = vadd.f32 %v349, 1e-24
  %v388 = vadd.f32 %v352, 1e-24
  %v389 = vadd.f32 %v355, 1e-24
  %v390 = vadd.f32 %v358, 1e-24
  %v391 = vrsqrt.pop %v359
  %v392 = vrsqrt.pop %v360
  %v393 = vrsqrt.pop %v361
  %v394 = vrsqrt.pop %v362
  %v395 = vrsqrt.pop %v363
  %v396 = vrsqrt.pop %v364
  %v397 = vrsqrt.pop %v365
  %v398 = vrsqrt.pop %v366
  %v399 = vrsqrt.pop %v367
  %v400 = vrsqrt.pop %v368
  %v401 = vrsqrt.pop %v369
  %v402 = vrsqrt.pop %v370
  %v403 = vrsqrt.pop %v371
  %v404 = vrsqrt.pop %v372
  %v405 = vrsqrt.pop %v373
  %v406 = vrsqrt.pop %v374
  %v407 = vrsqrt.pop %v375
  %v408 = vrsqrt.pop %v376
  %v409 = vrsqrt.pop %v377
  %v410 = vrsqrt.pop %v378
  %v411 = vrsqrt.pop %v379
  %v412 = vrsqrt.pop %v380
  %v413 = vrsqrt.pop %v381
  %v414 = vrsqrt.pop %v382
  %v415 = vrsqrt.pop %v383
  %v416 = vrsqrt.pop %v384
  %v417 = vrsqrt.pop %v385
  %v418 = vrsqrt.pop %v386
  %v419 = vrsqrt.pop %v387
  %v420 = vrsqrt.pop %v388
  %v421 = vrsqrt.pop %v389
  %v422 = vrsqrt.pop %v390
  %v423 = vmul.f32 %v199, %v391
  %v424 = vmul.f32 %v200, %v392
  %v425 = vmul.f32 %v201, %v393
  %v426 = vmul.f32 %v202, %v394
  %v427 = vmul.f32 %v203, %v395
  %v428 = vmul.f32 %v204, %v396
  %v429 = vmul.f32 %v205, %v397
  %v430 = vmul.f32 %v206, %v398
  %v431 = vmul.f32 %v207, %v399
  %v432 = vmul.f32 %v208, %v400
  %v433 = vmul.f32 %v209, %v401
  %v434 = vmul.f32 %v210, %v402
  %v435 = vmul.f32 %v211, %v403
  %v436 = vmul.f32 %v212, %v404
  %v437 = vmul.f32 %v213, %v405
  %v438 = vmul.f32 %v214, %v406
  %v439 = vmul.f32 %v215, %v407
  %v440 = vmul.f32 %v216, %v408
  %v441 = vmul.f32 %v217, %v409
  %v442 = vmul.f32 %v218, %v410
  %v443 = vmul.f32 %v219, %v411
  %v444 = vmul.f32 %v220, %v412
  %v445 = vmul.f32 %v221, %v413
  %v446 = vmul.f32 %v222, %v414
  %v447 = vmul.f32 %v223, %v415
  %v448 = vmul.f32 %v224, %v416
  %v449 = vmul.f32 %v225, %v417
  %v450 = vmul.f32 %v226, %v418
  %v451 = vmul.f32 %v227, %v419
  %v452 = vmul.f32 %v228, %v420
  %v453 = vmul.f32 %v229, %v421
  %v454 = vmul.f32 %v230, %v422
  %v456 = vsel %vm13, %v37, 0
  %v459 = vsel %vm13, %v423, 0
  %v462 = vsel %vm13, %v424, 0
  %v465 = vsel %vm13, %v425, 0
  %v468 = vsel %vm13, %v426, 0
  %v471 = vsel %vm13, %v427, 0
  %v474 = vsel %vm13, %v428, 0
  %v477 = vsel %vm13, %v429, 0
  %v480 = vsel %vm13, %v430, 0
  %v483 = vsel %vm13, %v431, 0
  %v486 = vsel %vm13, %v432, 0
  %v489 = vsel %vm13, %v433, 0
  %v492 = vsel %vm13, %v434, 0
  %v495 = vsel %vm13, %v435, 0
  %v498 = vsel %vm13, %v436, 0
  %v501 = vsel %vm13, %v437, 0
  %v504 = vsel %vm13, %v438, 0
  %506 = vmatprep.subr.mxu0 0.0
  %507 = vmatpush1.xpose.msra.mxu0 %v504
  %508 = vmatprep.subr.mxu0 0.0
  %509 = vmatpush1.xpose.msra.mxu0 %v501
  %510 = vmatprep.subr.mxu0 0.0
  %511 = vmatpush1.xpose.msra.mxu0 %v498
  %512 = vmatprep.subr.mxu0 0.0
  %513 = vmatpush1.xpose.msra.mxu0 %v495
  %514 = vmatprep.subr.mxu0 0.0
  %515 = vmatpush1.xpose.msra.mxu0 %v492
  %516 = vmatprep.subr.mxu0 0.0
  %517 = vmatpush1.xpose.msra.mxu0 %v489
  %518 = vmatprep.subr.mxu0 0.0
  %519 = vmatpush1.xpose.msra.mxu0 %v486
  %520 = vmatprep.subr.mxu0 0.0
  %521 = vmatpush1.xpose.msra.mxu0 %v483
  %522 = vmatprep.subr.mxu0 0.0
  %523 = vmatpush1.xpose.msra.mxu0 %v480
  %524 = vmatprep.subr.mxu0 0.0
  %525 = vmatpush1.xpose.msra.mxu0 %v477
  %526 = vmatprep.subr.mxu0 0.0
  %527 = vmatpush1.xpose.msra.mxu0 %v474
  %528 = vmatprep.subr.mxu0 0.0
  %529 = vmatpush1.xpose.msra.mxu0 %v471
  %530 = vmatprep.subr.mxu0 0.0
  %531 = vmatpush1.xpose.msra.mxu0 %v468
  %532 = vmatprep.subr.mxu0 0.0
  %533 = vmatpush1.xpose.msra.mxu0 %v465
  %534 = vmatprep.subr.mxu0 0.0
  %535 = vmatpush1.xpose.msra.mxu0 %v462
  %536 = vmatprep.subr.mxu0 0.0
  %537 = vmatpush1.xpose.msra.mxu0 %v459
  %538 = vmatprep.subr.mxu0 0.0
  %539 = vmatpush2.xpose.msra.mxu0 0.0
  %540 = vmatprep.subr.mxu0 0.0
  %541 = vmatpush2.xpose.msra.mxu0 0.0
  %542 = vmatprep.subr.mxu0 0.0
  %543 = vmatpush2.xpose.msra.mxu0 0.0
  %544 = vmatprep.subr.mxu0 0.0
  %545 = vmatpush2.xpose.msra.mxu0 0.0
  %546 = vmatprep.subr.mxu0 0.0
  %547 = vmatpush2.xpose.msra.mxu0 0.0
  %548 = vmatprep.subr.mxu0 0.0
  %549 = vmatpush2.xpose.msra.mxu0 0.0
  %550 = vmatprep.subr.mxu0 0.0
  %551 = vmatpush2.xpose.msra.mxu0 0.0
  %552 = vmatprep.subr.mxu0 0.0
  %553 = vmatpush2.xpose.msra.mxu0 0.0
  %554 = vmatprep.subr.mxu0 0.0
  %555 = vmatpush2.xpose.msra.mxu0 0.0
  %556 = vmatprep.subr.mxu0 0.0
  %557 = vmatpush2.xpose.msra.mxu0 0.0
  %558 = vmatprep.subr.mxu0 0.0
  %559 = vmatpush2.xpose.msra.mxu0 0.0
  %560 = vmatprep.subr.mxu0 0.0
  %561 = vmatpush2.xpose.msra.mxu0 0.0
  %562 = vmatprep.subr.mxu0 0.0
  %563 = vmatpush2.xpose.msra.mxu0 0.0
  %564 = vmatprep.subr.mxu0 0.0
  %565 = vmatpush2.xpose.msra.mxu0 0.0
  %566 = vmatprep.subr.mxu0 0.0
  %567 = vmatpush2.xpose.msra.mxu0 0.0
  %568 = vmatprep.subr.mxu0 0.0
  %569 = vmatpush2.xpose.msra.mxu0 0.0
  %570 = vmatprep.mubr.f32.mxu0 0.0
  %571 = vmatmul.mubr.f32.gmra.mxu0 %v456
  %v572 = vpop.f32.mrf.mxu0
  %v573 = vadd.f32 0.0, %v572
  %v574 = vpop.f32.mrf.mxu0
  %575 = vdwg.mxu0
  %v577 = vsel %vm13, %v38, 0
  %v580 = vsel %vm13, %v439, 0
  %v583 = vsel %vm13, %v440, 0
  %v586 = vsel %vm13, %v441, 0
  %v589 = vsel %vm13, %v442, 0
  %v592 = vsel %vm13, %v443, 0
  %v595 = vsel %vm13, %v444, 0
  %v598 = vsel %vm13, %v445, 0
  %v601 = vsel %vm13, %v446, 0
  %v604 = vsel %vm13, %v447, 0
  %v607 = vsel %vm13, %v448, 0
  %v610 = vsel %vm13, %v449, 0
  %v613 = vsel %vm13, %v450, 0
  %v616 = vsel %vm13, %v451, 0
  %v619 = vsel %vm13, %v452, 0
  %v622 = vsel %vm13, %v453, 0
  %v625 = vsel %vm13, %v454, 0
  %627 = vmatprep.subr.mxu0 0.0
  %628 = vmatpush1.xpose.msra.mxu0 %v625
  %629 = vmatprep.subr.mxu0 0.0
  %630 = vmatpush1.xpose.msra.mxu0 %v622
  %631 = vmatprep.subr.mxu0 0.0
  %632 = vmatpush1.xpose.msra.mxu0 %v619
  %633 = vmatprep.subr.mxu0 0.0
  %634 = vmatpush1.xpose.msra.mxu0 %v616
  %635 = vmatprep.subr.mxu0 0.0
  %636 = vmatpush1.xpose.msra.mxu0 %v613
  %637 = vmatprep.subr.mxu0 0.0
  %638 = vmatpush1.xpose.msra.mxu0 %v610
  %639 = vmatprep.subr.mxu0 0.0
  %640 = vmatpush1.xpose.msra.mxu0 %v607
  %641 = vmatprep.subr.mxu0 0.0
  %642 = vmatpush1.xpose.msra.mxu0 %v604
  %643 = vmatprep.subr.mxu0 0.0
  %644 = vmatpush1.xpose.msra.mxu0 %v601
  %645 = vmatprep.subr.mxu0 0.0
  %646 = vmatpush1.xpose.msra.mxu0 %v598
  %647 = vmatprep.subr.mxu0 0.0
  %648 = vmatpush1.xpose.msra.mxu0 %v595
  %649 = vmatprep.subr.mxu0 0.0
  %650 = vmatpush1.xpose.msra.mxu0 %v592
  %651 = vmatprep.subr.mxu0 0.0
  %652 = vmatpush1.xpose.msra.mxu0 %v589
  %653 = vmatprep.subr.mxu0 0.0
  %654 = vmatpush1.xpose.msra.mxu0 %v586
  %655 = vmatprep.subr.mxu0 0.0
  %656 = vmatpush1.xpose.msra.mxu0 %v583
  %657 = vmatprep.subr.mxu0 0.0
  %658 = vmatpush1.xpose.msra.mxu0 %v580
  %659 = vmatprep.subr.mxu0 0.0
  %660 = vmatpush2.xpose.msra.mxu0 0.0
  %661 = vmatprep.subr.mxu0 0.0
  %662 = vmatpush2.xpose.msra.mxu0 0.0
  %663 = vmatprep.subr.mxu0 0.0
  %664 = vmatpush2.xpose.msra.mxu0 0.0
  %665 = vmatprep.subr.mxu0 0.0
  %666 = vmatpush2.xpose.msra.mxu0 0.0
  %667 = vmatprep.subr.mxu0 0.0
  %668 = vmatpush2.xpose.msra.mxu0 0.0
  %669 = vmatprep.subr.mxu0 0.0
  %670 = vmatpush2.xpose.msra.mxu0 0.0
  %671 = vmatprep.subr.mxu0 0.0
  %672 = vmatpush2.xpose.msra.mxu0 0.0
  %673 = vmatprep.subr.mxu0 0.0
  %674 = vmatpush2.xpose.msra.mxu0 0.0
  %675 = vmatprep.subr.mxu0 0.0
  %676 = vmatpush2.xpose.msra.mxu0 0.0
  %677 = vmatprep.subr.mxu0 0.0
  %678 = vmatpush2.xpose.msra.mxu0 0.0
  %679 = vmatprep.subr.mxu0 0.0
  %680 = vmatpush2.xpose.msra.mxu0 0.0
  %681 = vmatprep.subr.mxu0 0.0
  %682 = vmatpush2.xpose.msra.mxu0 0.0
  %683 = vmatprep.subr.mxu0 0.0
  %684 = vmatpush2.xpose.msra.mxu0 0.0
  %685 = vmatprep.subr.mxu0 0.0
  %686 = vmatpush2.xpose.msra.mxu0 0.0
  %687 = vmatprep.subr.mxu0 0.0
  %688 = vmatpush2.xpose.msra.mxu0 0.0
  %689 = vmatprep.subr.mxu0 0.0
  %690 = vmatpush2.xpose.msra.mxu0 0.0
  %691 = vmatprep.mubr.f32.mxu0 0.0
  %692 = vmatmul.mubr.f32.gmra.mxu0 %v577
  %v693 = vpop.f32.mrf.mxu0
  %v694 = vadd.f32 0.0, %v693
  %v695 = vpop.f32.mrf.mxu0
  %696 = vdwg.mxu0
  %697 = vst [vmem:[%s2] sm:$0xff] %v573
  %698 = vst [vmem:[%s2 + $0x8] sm:$0xff] %v694
  // Predicated region
  $region10: #{vit_forward.7} parent=0 // pred_check
    _
  $region11: #{vit_forward.7} parent=0 // pred_check_branch
    %700 = sbr.rel (0) target = $region13
  $region12: #{vit_forward.7} parent=0 // pred_region
    _
  $region13: #{vit_forward.7} parent=0 // pred_fallthru
    _
  // Predicated region
  $region14: #{vit_forward.7} parent=0 // pred_check
    _
  $region15: #{vit_forward.7} parent=0 // pred_check_branch
    %702 = sbr.rel (0) target = $region17
  $region16: #{vit_forward.7} parent=0 // pred_region
    _
  $region17: #{vit_forward.7} parent=0 // pred_fallthru
    _

// kernel: vit_forward.8
$region0: #{vit_forward.8}
  #allocation0 [shape = 'u32[]', space=smem, size = 0x4, offset = 0x4, fixed_abs, tag = 'smem constant byte address 0x4 - core index']
  #allocation1 [shape = 'u32[144,128]{1,0:T(1,128)}', space=vmem, size = 0x12000, scoped, tag = 'internal scratch']
  %s0 = inlined_call_operand.vmem [shape: f32[2,24,32], index: 0, kind: input, shape index: {}]
  %s1 = inlined_call_operand.vmem [shape: f32[2,1,24], index: 1, kind: input, shape index: {}]
  %s2 = inlined_call_operand.vmem [shape: f32[1,32], index: 2, kind: input, shape index: {}]
  %s3 = inlined_call_operand.vmem [shape: f32[1,32], index: 3, kind: input, shape index: {}]
  %s4 = inlined_call_operand.vmem [shape: bf16[32,96], index: 4, kind: input, shape index: {}]
  %s5 = inlined_call_operand.vmem [shape: f32[1,96], index: 5, kind: input, shape index: {}]
  %s6 = inlined_call_operand.vmem [shape: bf16[32,32], index: 6, kind: input, shape index: {}]
  %s7 = inlined_call_operand.vmem [shape: f32[1,32], index: 7, kind: input, shape index: {}]
  %s8 = inlined_call_operand.vmem [shape: f32[1,32], index: 8, kind: input, shape index: {}]
  %s9 = inlined_call_operand.vmem [shape: f32[1,32], index: 9, kind: input, shape index: {}]
  %s10 = inlined_call_operand.vmem [shape: bf16[32,128], index: 10, kind: input, shape index: {}]
  %s11 = inlined_call_operand.vmem [shape: f32[1,128], index: 11, kind: input, shape index: {}]
  %s12 = inlined_call_operand.vmem [shape: bf16[128,32], index: 12, kind: input, shape index: {}]
  %s13 = inlined_call_operand.vmem [shape: f32[1,32], index: 13, kind: input, shape index: {}]
  %s14 = inlined_call_operand.vmem [shape: f32[2,24,32], index: 14, kind: output, shape index: {}]
  %s15 = sld [smem:[#allocation0]]
  $region89: #{vit_forward.8} parent=0
    _
  %s17 = ssub.s32 1, %s15
  %s18 = scalar_select 0, %s17, %s15
  loop: start=0, step=1, limit=4
  $region2: #{vit_forward.8} parent=0 // loop_pre_header
    _
  $region3: #{vit_forward.8} parent=0 // loop_header
    %s20 = sphi 0, %s24
    %p21 = scmp.ge.s32.totalorder %s20, 4
    %s30 = sphi 0, %s32
    %s33 = sphi 0, %s30
    %s34 = sphi 0, %s33
    %s50 = sphi 0, %s34
    %s56 = sphi 0, %s58
    %s59 = sphi 0, %s56
    %s60 = sphi 0, %s59
    %s76 = sphi 0, %s60
    %s80 = sphi 0, %s80
    %s82 = sphi 0, %s80
    %s83 = sphi 0, %s82
    %s97 = sphi 0, %s83
    %s101 = sphi 0, %s101
    %s103 = sphi 0, %s101
    %s104 = sphi 0, %s103
    %s118 = sphi 0, %s104
    %s122 = sphi 0, %s122
    %s124 = sphi 0, %s122
    %s125 = sphi 0, %s124
    %s139 = sphi 0, %s125
    %s143 = sphi 0, %s143
    %s145 = sphi 0, %s143
    %s146 = sphi 0, %s145
    %s160 = sphi 0, %s146
    %s164 = sphi 0, %s164
    %s166 = sphi 0, %s164
    %s167 = sphi 0, %s166
    %s181 = sphi 0, %s167
    %s185 = sphi 0, %s185
    %s187 = sphi 0, %s185
    %s188 = sphi 0, %s187
    %s202 = sphi 0, %s188
    %s206 = sphi 0, %s206
    %s208 = sphi 0, %s206
    %s209 = sphi 0, %s208
    %s223 = sphi 0, %s209
    %s227 = sphi 0, %s227
    %s229 = sphi 0, %s227
    %s230 = sphi 0, %s229
    %s244 = sphi 0, %s230
    %s248 = sphi 0, %s248
    %s250 = sphi 0, %s248
    %s251 = sphi 0, %s250
    %s265 = sphi 0, %s251
    %s269 = sphi 0, %s269
    %s271 = sphi 0, %s269
    %s272 = sphi 0, %s271
    %s286 = sphi 0, %s272
    %s290 = sphi 0, %s290
    %s292 = sphi 0, %s290
    %s293 = sphi 0, %s292
    %s307 = sphi 0, %s293
    %s311 = sphi 0, %s311
    %s313 = sphi 0, %s311
    %s314 = sphi 0, %s313
    %s328 = sphi 0, %s314
    %s334 = sphi 0, %s336
    %s337 = sphi 0, %s334
    %s338 = sphi 0, %s337
    %s354 = sphi 0, %s338
  $region4: #{vit_forward.8} parent=0 // loop_header_branch
    %23 = sbr.rel (%p21) target = $region8
  $region5: #{vit_forward.8} parent=0 // loop_body
    %s25 = ssub.s32 %s20, 1
    %s26 = ssub.s32 %s20, 2
    %s27 = sadd.s32 %s20, 1
    %s28 = ssub.s32 %s20, %s27
    %p29 = scmp.eq.s32.totalorder %s28, 0
    %s31 = sadd.s32 %s30, 1
    %s32 = scalar_select %p29, %s30, %s31
    %p35 = pneg %p29
    %p36 = scmp.eq.s32.totalorder %s20, 1
    %p37 = por %p35, %p36
    %p38 = scmp.ne.s32.totalorder %s30, %s33
    %p39 = scmp.eq.s32.totalorder %s20, 0
    %p40 = por %p38, %p39
    %p41 = scmp.ne.s32.totalorder %s30, %s33
    %p42 = scmp.eq.s32.totalorder %s25, 1
    %p43 = por %p41, %p42
    %p44 = scmp.ne.s32.totalorder %s33, %s34
    %p45 = scmp.eq.s32.totalorder %s25, 0
    %p46 = por %p44, %p45
    %p47 = scmp.ne.s32.totalorder %s33, %s34
    %p48 = scmp.eq.s32.totalorder %s26, 1
    %p49 = por %p47, %p48
    %p51 = scmp.ne.s32.totalorder %s34, %s50
    %p52 = scmp.eq.s32.totalorder %s26, 0
    %p53 = por %p51, %p52
    %s54 = ssub.s32 %s20, %s27
    %p55 = scmp.eq.s32.totalorder %s54, 0
    %s57 = sadd.s32 %s56, 1
    %s58 = scalar_select %p55, %s56, %s57
    %p61 = pneg %p55
    %p62 = scmp.eq.s32.totalorder %s20, 1
    %p63 = por %p61, %p62
    %p64 = scmp.ne.s32.totalorder %s56, %s59
    %p65 = scmp.eq.s32.totalorder %s20, 0
    %p66 = por %p64, %p65
    %p67 = scmp.ne.s32.totalorder %s56, %s59
    %p68 = scmp.eq.s32.totalorder %s25, 1
    %p69 = por %p67, %p68
    %p70 = scmp.ne.s32.totalorder %s59, %s60
    %p71 = scmp.eq.s32.totalorder %s25, 0
    %p72 = por %p70, %p71
    %p73 = scmp.ne.s32.totalorder %s59, %s60
    %p74 = scmp.eq.s32.totalorder %s26, 1
    %p75 = por %p73, %p74
    %p77 = scmp.ne.s32.totalorder %s60, %s76
    %p78 = scmp.eq.s32.totalorder %s26, 0
    %p79 = por %p77, %p78
    %s81 = sadd.s32 %s80, 1
    %p84 = scmp.eq.s32.totalorder %s20, 1
    %p85 = scmp.ne.s32.totalorder %s80, %s82
    %p86 = scmp.eq.s32.totalorder %s20, 0
    %p87 = por %p85, %p86
    %p88 = scmp.ne.s32.totalorder %s80, %s82
    %p89 = scmp.eq.s32.totalorder %s25, 1
    %p90 = por %p88, %p89
    %p91 = scmp.ne.s32.totalorder %s82, %s83
    %p92 = scmp.eq.s32.totalorder %s25, 0
    %p93 = por %p91, %p92
    %p94 = scmp.ne.s32.totalorder %s82, %s83
    %p95 = scmp.eq.s32.totalorder %s26, 1
    %p96 = por %p94, %p95
    %p98 = scmp.ne.s32.totalorder %s83, %s97
    %p99 = scmp.eq.s32.totalorder %s26, 0
    %p100 = por %p98, %p99
    %s102 = sadd.s32 %s101, 1
    %p105 = scmp.eq.s32.totalorder %s20, 1
    %p106 = scmp.ne.s32.totalorder %s101, %s103
    %p107 = scmp.eq.s32.totalorder %s20, 0
    %p108 = por %p106, %p107
    %p109 = scmp.ne.s32.totalorder %s101, %s103
    %p110 = scmp.eq.s32.totalorder %s25, 1
    %p111 = por %p109, %p110
    %p112 = scmp.ne.s32.totalorder %s103, %s104
    %p113 = scmp.eq.s32.totalorder %s25, 0
    %p114 = por %p112, %p113
    %p115 = scmp.ne.s32.totalorder %s103, %s104
    %p116 = scmp.eq.s32.totalorder %s26, 1
    %p117 = por %p115, %p116
    %p119 = scmp.ne.s32.totalorder %s104, %s118
    %p120 = scmp.eq.s32.totalorder %s26, 0
    %p121 = por %p119, %p120
    %s123 = sadd.s32 %s122, 1
    %p126 = scmp.eq.s32.totalorder %s20, 1
    %p127 = scmp.ne.s32.totalorder %s122, %s124
    %p128 = scmp.eq.s32.totalorder %s20, 0
    %p129 = por %p127, %p128
    %p130 = scmp.ne.s32.totalorder %s122, %s124
    %p131 = scmp.eq.s32.totalorder %s25, 1
    %p132 = por %p130, %p131
    %p133 = scmp.ne.s32.totalorder %s124, %s125
    %p134 = scmp.eq.s32.totalorder %s25, 0
    %p135 = por %p133, %p134
    %p136 = scmp.ne.s32.totalorder %s124, %s125
    %p137 = scmp.eq.s32.totalorder %s26, 1
    %p138 = por %p136, %p137
    %p140 = scmp.ne.s32.totalorder %s125, %s139
    %p141 = scmp.eq.s32.totalorder %s26, 0
    %p142 = por %p140, %p141
    %s144 = sadd.s32 %s143, 1
    %p147 = scmp.eq.s32.totalorder %s20, 1
    %p148 = scmp.ne.s32.totalorder %s143, %s145
    %p149 = scmp.eq.s32.totalorder %s20, 0
    %p150 = por %p148, %p149
    %p151 = scmp.ne.s32.totalorder %s143, %s145
    %p152 = scmp.eq.s32.totalorder %s25, 1
    %p153 = por %p151, %p152
    %p154 = scmp.ne.s32.totalorder %s145, %s146
    %p155 = scmp.eq.s32.totalorder %s25, 0
    %p156 = por %p154, %p155
    %p157 = scmp.ne.s32.totalorder %s145, %s146
    %p158 = scmp.eq.s32.totalorder %s26, 1
    %p159 = por %p157, %p158
    %p161 = scmp.ne.s32.totalorder %s146, %s160
    %p162 = scmp.eq.s32.totalorder %s26, 0
    %p163 = por %p161, %p162
    %s165 = sadd.s32 %s164, 1
    %p168 = scmp.eq.s32.totalorder %s20, 1
    %p169 = scmp.ne.s32.totalorder %s164, %s166
    %p170 = scmp.eq.s32.totalorder %s20, 0
    %p171 = por %p169, %p170
    %p172 = scmp.ne.s32.totalorder %s164, %s166
    %p173 = scmp.eq.s32.totalorder %s25, 1
    %p174 = por %p172, %p173
    %p175 = scmp.ne.s32.totalorder %s166, %s167
    %p176 = scmp.eq.s32.totalorder %s25, 0
    %p177 = por %p175, %p176
    %p178 = scmp.ne.s32.totalorder %s166, %s167
    %p179 = scmp.eq.s32.totalorder %s26, 1
    %p180 = por %p178, %p179
    %p182 = scmp.ne.s32.totalorder %s167, %s181
    %p183 = scmp.eq.s32.totalorder %s26, 0
    %p184 = por %p182, %p183
    %s186 = sadd.s32 %s185, 1
    %p189 = scmp.eq.s32.totalorder %s20, 1
    %p190 = scmp.ne.s32.totalorder %s185, %s187
    %p191 = scmp.eq.s32.totalorder %s20, 0
    %p192 = por %p190, %p191
    %p193 = scmp.ne.s32.totalorder %s185, %s187
    %p194 = scmp.eq.s32.totalorder %s25, 1
    %p195 = por %p193, %p194
    %p196 = scmp.ne.s32.totalorder %s187, %s188
    %p197 = scmp.eq.s32.totalorder %s25, 0
    %p198 = por %p196, %p197
    %p199 = scmp.ne.s32.totalorder %s187, %s188
    %p200 = scmp.eq.s32.totalorder %s26, 1
    %p201 = por %p199, %p200
    %p203 = scmp.ne.s32.totalorder %s188, %s202
    %p204 = scmp.eq.s32.totalorder %s26, 0
    %p205 = por %p203, %p204
    %s207 = sadd.s32 %s206, 1
    %p210 = scmp.eq.s32.totalorder %s20, 1
    %p211 = scmp.ne.s32.totalorder %s206, %s208
    %p212 = scmp.eq.s32.totalorder %s20, 0
    %p213 = por %p211, %p212
    %p214 = scmp.ne.s32.totalorder %s206, %s208
    %p215 = scmp.eq.s32.totalorder %s25, 1
    %p216 = por %p214, %p215
    %p217 = scmp.ne.s32.totalorder %s208, %s209
    %p218 = scmp.eq.s32.totalorder %s25, 0
    %p219 = por %p217, %p218
    %p220 = scmp.ne.s32.totalorder %s208, %s209
    %p221 = scmp.eq.s32.totalorder %s26, 1
    %p222 = por %p220, %p221
    %p224 = scmp.ne.s32.totalorder %s209, %s223
    %p225 = scmp.eq.s32.totalorder %s26, 0
    %p226 = por %p224, %p225
    %s228 = sadd.s32 %s227, 1
    %p231 = scmp.eq.s32.totalorder %s20, 1
    %p232 = scmp.ne.s32.totalorder %s227, %s229
    %p233 = scmp.eq.s32.totalorder %s20, 0
    %p234 = por %p232, %p233
    %p235 = scmp.ne.s32.totalorder %s227, %s229
    %p236 = scmp.eq.s32.totalorder %s25, 1
    %p237 = por %p235, %p236
    %p238 = scmp.ne.s32.totalorder %s229, %s230
    %p239 = scmp.eq.s32.totalorder %s25, 0
    %p240 = por %p238, %p239
    %p241 = scmp.ne.s32.totalorder %s229, %s230
    %p242 = scmp.eq.s32.totalorder %s26, 1
    %p243 = por %p241, %p242
    %p245 = scmp.ne.s32.totalorder %s230, %s244
    %p246 = scmp.eq.s32.totalorder %s26, 0
    %p247 = por %p245, %p246
    %s249 = sadd.s32 %s248, 1
    %p252 = scmp.eq.s32.totalorder %s20, 1
    %p253 = scmp.ne.s32.totalorder %s248, %s250
    %p254 = scmp.eq.s32.totalorder %s20, 0
    %p255 = por %p253, %p254
    %p256 = scmp.ne.s32.totalorder %s248, %s250
    %p257 = scmp.eq.s32.totalorder %s25, 1
    %p258 = por %p256, %p257
    %p259 = scmp.ne.s32.totalorder %s250, %s251
    %p260 = scmp.eq.s32.totalorder %s25, 0
    %p261 = por %p259, %p260
    %p262 = scmp.ne.s32.totalorder %s250, %s251
    %p263 = scmp.eq.s32.totalorder %s26, 1
    %p264 = por %p262, %p263
    %p266 = scmp.ne.s32.totalorder %s251, %s265
    %p267 = scmp.eq.s32.totalorder %s26, 0
    %p268 = por %p266, %p267
    %s270 = sadd.s32 %s269, 1
    %p273 = scmp.eq.s32.totalorder %s20, 1
    %p274 = scmp.ne.s32.totalorder %s269, %s271
    %p275 = scmp.eq.s32.totalorder %s20, 0
    %p276 = por %p274, %p275
    %p277 = scmp.ne.s32.totalorder %s269, %s271
    %p278 = scmp.eq.s32.totalorder %s25, 1
    %p279 = por %p277, %p278
    %p280 = scmp.ne.s32.totalorder %s271, %s272
    %p281 = scmp.eq.s32.totalorder %s25, 0
    %p282 = por %p280, %p281
    %p283 = scmp.ne.s32.totalorder %s271, %s272
    %p284 = scmp.eq.s32.totalorder %s26, 1
    %p285 = por %p283, %p284
    %p287 = scmp.ne.s32.totalorder %s272, %s286
    %p288 = scmp.eq.s32.totalorder %s26, 0
    %p289 = por %p287, %p288
    %s291 = sadd.s32 %s290, 1
    %p294 = scmp.eq.s32.totalorder %s20, 1
    %p295 = scmp.ne.s32.totalorder %s290, %s292
    %p296 = scmp.eq.s32.totalorder %s20, 0
    %p297 = por %p295, %p296
    %p298 = scmp.ne.s32.totalorder %s290, %s292
    %p299 = scmp.eq.s32.totalorder %s25, 1
    %p300 = por %p298, %p299
    %p301 = scmp.ne.s32.totalorder %s292, %s293
    %p302 = scmp.eq.s32.totalorder %s25, 0
    %p303 = por %p301, %p302
    %p304 = scmp.ne.s32.totalorder %s292, %s293
    %p305 = scmp.eq.s32.totalorder %s26, 1
    %p306 = por %p304, %p305
    %p308 = scmp.ne.s32.totalorder %s293, %s307
    %p309 = scmp.eq.s32.totalorder %s26, 0
    %p310 = por %p308, %p309
    %s312 = sadd.s32 %s311, 1
    %p315 = scmp.eq.s32.totalorder %s20, 1
    %p316 = scmp.ne.s32.totalorder %s311, %s313
    %p317 = scmp.eq.s32.totalorder %s20, 0
    %p318 = por %p316, %p317
    %p319 = scmp.ne.s32.totalorder %s311, %s313
    %p320 = scmp.eq.s32.totalorder %s25, 1
    %p321 = por %p319, %p320
    %p322 = scmp.ne.s32.totalorder %s313, %s314
    %p323 = scmp.eq.s32.totalorder %s25, 0
    %p324 = por %p322, %p323
    %p325 = scmp.ne.s32.totalorder %s313, %s314
    %p326 = scmp.eq.s32.totalorder %s26, 1
    %p327 = por %p325, %p326
    %p329 = scmp.ne.s32.totalorder %s314, %s328
    %p330 = scmp.eq.s32.totalorder %s26, 0
    %p331 = por %p329, %p330
    %s332 = ssub.s32 %s20, %s27
    %p333 = scmp.eq.s32.totalorder %s332, 0
    %s335 = sadd.s32 %s334, 1
    %s336 = scalar_select %p333, %s334, %s335
    %p339 = pneg %p333
    %p340 = scmp.eq.s32.totalorder %s20, 1
    %p341 = por %p339, %p340
    %p342 = scmp.ne.s32.totalorder %s334, %s337
    %p343 = scmp.eq.s32.totalorder %s20, 0
    %p344 = por %p342, %p343
    %p345 = scmp.ne.s32.totalorder %s334, %s337
    %p346 = scmp.eq.s32.totalorder %s25, 1
    %p347 = por %p345, %p346
    %p348 = scmp.ne.s32.totalorder %s337, %s338
    %p349 = scmp.eq.s32.totalorder %s25, 0
    %p350 = por %p348, %p349
    %p351 = scmp.ne.s32.totalorder %s337, %s338
    %p352 = scmp.eq.s32.totalorder %s26, 1
    %p353 = por %p351, %p352
    %p355 = scmp.ne.s32.totalorder %s338, %s354
    %p356 = scmp.eq.s32.totalorder %s26, 0
    %p357 = por %p355, %p356
    %p358 = scmp.le.s32.totalorder 1, %s20
    %p359 = scmp.lt.s32.totalorder %s20, 3
    %p360 = pnand %p358, %p359
    %p361 = pneg %p360
    // Predicated region
    $region9: #{vit_forward.8} parent=5 // pred_check
      _
    $region10: #{vit_forward.8} parent=5 // pred_check_branch
      %363 = sbr.rel (%p360) target = $region12
    $region11: #{vit_forward.8} parent=5 // pred_region
      %s364 = ssub.s32 %s20, 1
      // Predicated region
      $region13: #{vit_forward.8} parent=11 // pred_check
        %p365 = pneg %p93
      $region14: #{vit_forward.8} parent=11 // pred_check_branch
        %367 = sbr.rel (%p365) target = $region16
      $region15: #{vit_forward.8} parent=11 // pred_region
        _
      $region16: #{vit_forward.8} parent=11 // pred_fallthru
        _
      // Predicated region
      $region17: #{vit_forward.8} parent=11 // pred_check
        %p368 = pneg %p114
      $region18: #{vit_forward.8} parent=11 // pred_check_branch
        %370 = sbr.rel (%p368) target = $region20
      $region19: #{vit_forward.8} parent=11 // pred_region
        _
      $region20: #{vit_forward.8} parent=11 // pred_fallthru
        _
      // Predicated region
      $region21: #{vit_forward.8} parent=11 // pred_check
        %p371 = pneg %p135
      $region22: #{vit_forward.8} parent=11 // pred_check_branch
        %373 = sbr.rel (%p371) target = $region24
      $region23: #{vit_forward.8} parent=11 // pred_region
        _
      $region24: #{vit_forward.8} parent=11 // pred_fallthru
        _
      // Predicated region
      $region25: #{vit_forward.8} parent=11 // pred_check
        %p374 = pneg %p156
      $region26: #{vit_forward.8} parent=11 // pred_check_branch
        %376 = sbr.rel (%p374) target = $region28
      $region27: #{vit_forward.8} parent=11 // pred_region
        _
      $region28: #{vit_forward.8} parent=11 // pred_fallthru
        _
      // Predicated region
      $region29: #{vit_forward.8} parent=11 // pred_check
        %p377 = pneg %p177
      $region30: #{vit_forward.8} parent=11 // pred_check_branch
        %379 = sbr.rel (%p377) target = $region32
      $region31: #{vit_forward.8} parent=11 // pred_region
        _
      $region32: #{vit_forward.8} parent=11 // pred_fallthru
        _
      // Predicated region
      $region33: #{vit_forward.8} parent=11 // pred_check
        %p380 = pneg %p198
      $region34: #{vit_forward.8} parent=11 // pred_check_branch
        %382 = sbr.rel (%p380) target = $region36
      $region35: #{vit_forward.8} parent=11 // pred_region
        _
      $region36: #{vit_forward.8} parent=11 // pred_fallthru
        _
      // Predicated region
      $region37: #{vit_forward.8} parent=11 // pred_check
        %p383 = pneg %p219
      $region38: #{vit_forward.8} parent=11 // pred_check_branch
        %385 = sbr.rel (%p383) target = $region40
      $region39: #{vit_forward.8} parent=11 // pred_region
        _
      $region40: #{vit_forward.8} parent=11 // pred_fallthru
        _
      // Predicated region
      $region41: #{vit_forward.8} parent=11 // pred_check
        %p386 = pneg %p240
      $region42: #{vit_forward.8} parent=11 // pred_check_branch
        %388 = sbr.rel (%p386) target = $region44
      $region43: #{vit_forward.8} parent=11 // pred_region
        _
      $region44: #{vit_forward.8} parent=11 // pred_fallthru
        _
      // Predicated region
      $region45: #{vit_forward.8} parent=11 // pred_check
        %p389 = pneg %p261
      $region46: #{vit_forward.8} parent=11 // pred_check_branch
        %391 = sbr.rel (%p389) target = $region48
      $region47: #{vit_forward.8} parent=11 // pred_region
        _
      $region48: #{vit_forward.8} parent=11 // pred_fallthru
        _
      // Predicated region
      $region49: #{vit_forward.8} parent=11 // pred_check
        %p392 = pneg %p282
      $region50: #{vit_forward.8} parent=11 // pred_check_branch
        %394 = sbr.rel (%p392) target = $region52
      $region51: #{vit_forward.8} parent=11 // pred_region
        _
      $region52: #{vit_forward.8} parent=11 // pred_fallthru
        _
      // Predicated region
      $region53: #{vit_forward.8} parent=11 // pred_check
        %p395 = pneg %p303
      $region54: #{vit_forward.8} parent=11 // pred_check_branch
        %397 = sbr.rel (%p395) target = $region56
      $region55: #{vit_forward.8} parent=11 // pred_region
        _
      $region56: #{vit_forward.8} parent=11 // pred_fallthru
        _
      // Predicated region
      $region57: #{vit_forward.8} parent=11 // pred_check
        %p398 = pneg %p324
      $region58: #{vit_forward.8} parent=11 // pred_check_branch
        %400 = sbr.rel (%p398) target = $region60
      $region59: #{vit_forward.8} parent=11 // pred_region
        _
      $region60: #{vit_forward.8} parent=11 // pred_fallthru
        _
    $region12: #{vit_forward.8} parent=5 // pred_fallthru
      _
    %p401 = scmp.lt.s32.totalorder %s20, 2
    // Predicated region
    $region61: #{vit_forward.8} parent=5 // pred_check
      %p402 = pneg %p401
    $region62: #{vit_forward.8} parent=5 // pred_check_branch
      %404 = sbr.rel (%p402) target = $region64
    $region63: #{vit_forward.8} parent=5 // pred_region
      // Predicated region
      $region65: #{vit_forward.8} parent=63 // pred_check
        %p405 = pneg %p40
      $region66: #{vit_forward.8} parent=63 // pred_check_branch
        %407 = sbr.rel (%p405) target = $region68
      $region67: #{vit_forward.8} parent=63 // pred_region
        %p408 = scmp.lt.s32.totalorder %s20, 1
        %s409 = scalar_select %p408, %s20, 1
        %s410 = smul.addr %s409, 3
        %s411 = smul.addr %s410, 8
        %s412 = scalar_lea.vmem %s0, %s411
      $region68: #{vit_forward.8} parent=63 // pred_fallthru
        _
      // Predicated region
      $region69: #{vit_forward.8} parent=63 // pred_check
        %p413 = pneg %p66
      $region70: #{vit_forward.8} parent=63 // pred_check_branch
        %415 = sbr.rel (%p413) target = $region72
      $region71: #{vit_forward.8} parent=63 // pred_region
        %p416 = scmp.lt.s32.totalorder %s20, 1
        %s417 = scalar_select %p416, %s20, 1
        %s418 = scalar_lea.vmem %s1, %s417
      $region72: #{vit_forward.8} parent=63 // pred_fallthru
        _
    $region64: #{vit_forward.8} parent=5 // pred_fallthru
      _
    %p419 = scmp.le.s32.totalorder 1, %s20
    %p420 = scmp.lt.s32.totalorder %s20, 3
    %p421 = pnand %p419, %p420
    %p422 = pneg %p421
    // Predicated region
    $region73: #{vit_forward.8} parent=5 // pred_check
      _
    $region74: #{vit_forward.8} parent=5 // pred_check_branch
      %424 = sbr.rel (%p421) target = $region76
    $region75: #{vit_forward.8} parent=5 // pred_region
      %s425 = ssub.s32 %s20, 1
      %p426 = scmp.lt.s32.totalorder %s25, 1
      %s427 = scalar_select %p426, %s25, 1
      %s428 = smul.addr %s427, 3
      %s429 = smul.addr %s428, 8
      %s430 = scalar_lea.vmem %s0, %s429
      %p431 = pneg %p46
      %p432 = pneg %p43
      %p433 = scmp.lt.s32.totalorder %s25, 1
      %s434 = scalar_select %p433, %s25, 1
      %s435 = scalar_lea.vmem %s1, %s434
      %p436 = pneg %p72
      %p437 = pneg %p69
      %p438 = pneg %p93
      %p439 = pneg %p90
      %p440 = pneg %p114
      %p441 = pneg %p111
      %p442 = pneg %p135
      %p443 = pneg %p132
      %p444 = pneg %p156
      %p445 = pneg %p153
      %p446 = pneg %p177
      %p447 = pneg %p174
      %p448 = pneg %p198
      %p449 = pneg %p195
      %p450 = pneg %p219
      %p451 = pneg %p216
      %p452 = pneg %p240
      %p453 = pneg %p237
      %p454 = pneg %p261
      %p455 = pneg %p258
      %p456 = pneg %p282
      %p457 = pneg %p279
      %p458 = pneg %p303
      %p459 = pneg %p300
      %p460 = pneg %p324
      %p461 = pneg %p321
      %p462 = pneg %p350
      %p463 = pneg %p347
      %p464 = scmp.lt.s32.totalorder %s25, 1
      %s465 = scalar_select %p464, %s25, 1
      %s466 = smul.addr %s465, 3
      %s467 = smul.addr %s466, 8
      %s468 = scalar_lea.vmem %s14, %s467
      %p469 = scmp.lt.s32.totalorder %s25, 1
      %s470 = scalar_select %p469, %s25, 1
      %s471 = smul.addr %s470, 3
      %s472 = smul.addr %s471, 8
      %s473 = scalar_lea.vmem %s0, %s472
      %p474 = scmp.lt.s32.totalorder %s25, 1
      %s475 = scalar_select %p474, %s25, 1
      %s476 = scalar_lea.vmem %s1, %s475
      %p477 = scmp.lt.s32.totalorder %s25, 1
      %s478 = scalar_select %p477, %s25, 1
      %s479 = smul.addr %s478, 3
      %s480 = smul.addr %s479, 8
      %s481 = scalar_lea.vmem %s14, %s480
      %v483 = vld [vmem:[%s473] sm:$0xff]
      %v484 = vld [vmem:[%s473 + $0x8] sm:$0xff]
      %v485 = vld [vmem:[%s473 + $0x10] sm:$0xff]
      %v486 = vld [vmem:[%s476] sm:$0x1]
      %v487 = vld [vmem:[%s2] sm:$0x1]
      %v488 = vld [vmem:[%s3] sm:$0x1]
      %vm489 = vcmask 261120
      %v490 = vsel %vm489, %v483, 0.0
      %491 = vadd.xlane.f32.xlu0 %v490
      %v492 = vpop.xlane.xlu0 %491
      %v493 = vsel %vm489, %v484, 0.0
      %494 = vadd.xlane.f32.xlu0 %v493
      %v495 = vpop.xlane.xlu0 %494
      %v496 = vsel %vm489, %v485, 0.0
      %497 = vadd.xlane.f32.xlu0 %v496
      %v498 = vpop.xlane.xlu0 %497
      %v499 = vrcp.pop 32.0
      %v500 = vmul.f32 %v492, %v499
      %v501 = vmul.f32 %v495, %v499
      %v502 = vmul.f32 %v498, %v499
      %v503 = vsub.f32 %v483, %v500
      %v504 = vsub.f32 %v484, %v501
      %v505 = vsub.f32 %v485, %v502
      %v506 = vmul.f32 %v503, %v503
      %v507 = vmul.f32 %v504, %v504
      %v508 = vmul.f32 %v505, %v505
      %v509 = vsel %vm489, %v506, 0.0
      %510 = vadd.xlane.f32.xlu0 %v509
      %v511 = vpop.xlane.xlu0 %510
      %v512 = vsel %vm489, %v507, 0.0
      %513 = vadd.xlane.f32.xlu0 %v512
      %v514 = vpop.xlane.xlu0 %513
      %v515 = vsel %vm489, %v508, 0.0
      %516 = vadd.xlane.f32.xlu0 %v515
      %v517 = vpop.xlane.xlu0 %516
      %v518 = vmul.f32 %v511, %v499
      %v519 = vmul.f32 %v514, %v499
      %v520 = vmul.f32 %v517, %v499
      %v521 = vadd.f32 %v518, 1e-05
      %v522 = vadd.f32 %v519, 1e-05
      %v523 = vadd.f32 %v520, 1e-05
      %v524 = vrsqrt.pop %v521
      %v525 = vrsqrt.pop %v522
      %v526 = vrsqrt.pop %v523
      %v527 = vmul.f32 %v503, %v524
      %v528 = vmul.f32 %v504, %v525
      %v529 = vmul.f32 %v505, %v526
      %v531 = vlaneseq
      %v532 = vshrl.u32 %v531, 7
      %v533 = vsub.s32 0, %v532
      %v534 = vrot.slane %v487, %v533
      %v536 = vmul.f32 %v527, %v534
      %v537 = vmul.f32 %v528, %v534
      %v538 = vmul.f32 %v529, %v534
      %v540 = vlaneseq
      %v541 = vshrl.u32 %v540, 7
      %v542 = vsub.s32 0, %v541
      %v543 = vrot.slane %v488, %v542
      %v545 = vadd.f32 %v536, %v543
      %v546 = vadd.f32 %v537, %v543
      %v547 = vadd.f32 %v538, %v543
      %v548 = vpack.c.bf16 %v546, %v545
      %v549 = vpack.c.bf16 %v547, %v547
      %v550 = vld [vmem:[%s4] sm:$0xf]
      %v551 = vld [vmem:[%s4 + $0x4] sm:$0xf]
      %v552 = vld [vmem:[%s4 + $0x8] sm:$0xf]
      %v553 = vld [vmem:[%s4 + $0xc] sm:$0xf]
      %v554 = vld [vmem:[%s5] sm:$0x1]
      %v556 = vlaneseq
      %v557 = vshrl.u32 %v556, 7
      %v558 = vsub.s32 0, %v557
      %v559 = vrot.slane %v554, %v558
      %v565 = vunpack.c.l.b16 %v550
      %v566 = vunpack.c.l.b16 %v551
      %v567 = vunpack.c.l.b16 %v552
      %v568 = vunpack.c.l.b16 %v553
      %v569 = vpack.c.b16 %v566, %v565
      %v570 = vpack.c.b16 %v568, %v567
      %v574 = vsel %vm489, %v548, 0
      %v577 = vsel %vm489, %v549, 0
      %579 = vmatprep.subr.bf16.mxu0 0
      %580 = vmatpush1.bf16.msra.mxu0 0
      %581 = vmatprep.subr.bf16.mxu0 0
      %582 = vmatpush1.bf16.msra.mxu0 0
      %583 = vmatprep.subr.bf16.mxu0 0
      %584 = vmatpush1.bf16.msra.mxu0 0
      %585 = vmatprep.subr.bf16.mxu0 0
      %586 = vmatpush1.bf16.msra.mxu0 0
      %587 = vmatprep.subr.bf16.mxu0 0
      %588 = vmatpush1.bf16.msra.mxu0 0
      %589 = vmatprep.subr.bf16.mxu0 0
      %590 = vmatpush1.bf16.msra.mxu0 0
      %591 = vmatprep.subr.bf16.mxu0 0
      %592 = vmatpush1.bf16.msra.mxu0 %v570
      %593 = vmatprep.subr.bf16.mxu0 0
      %594 = vmatpush1.bf16.msra.mxu0 %v569
      %595 = vmatprep.subr.bf16.mxu0 0
      %596 = vmatpush2.bf16.msra.mxu0 0
      %597 = vmatprep.subr.bf16.mxu0 0
      %598 = vmatpush2.bf16.msra.mxu0 0
      %599 = vmatprep.subr.bf16.mxu0 0
      %600 = vmatpush2.bf16.msra.mxu0 0
      %601 = vmatprep.subr.bf16.mxu0 0
      %602 = vmatpush2.bf16.msra.mxu0 0
      %603 = vmatprep.subr.bf16.mxu0 0
      %604 = vmatpush2.bf16.msra.mxu0 0
      %605 = vmatprep.subr.bf16.mxu0 0
      %606 = vmatpush2.bf16.msra.mxu0 0
      %607 = vmatprep.subr.bf16.mxu0 0
      %608 = vmatpush2.bf16.msra.mxu0 0
      %609 = vmatprep.subr.bf16.mxu0 0
      %610 = vmatpush2.bf16.msra.mxu0 0
      %611 = vmatprep.mubr.bf16.mxu0 0
      %612 = vmatmul.mubr.bf16.gmra.mxu0 %v574
      %v613 = vpop.f32.mrf.mxu0
      %v614 = vadd.f32 %v559, %v613
      %v615 = vpop.f32.mrf.mxu0
      %v616 = vpop.f32.mrf.mxu0
      %v617 = vadd.f32 %v559, %v616
      %v618 = vpop.f32.mrf.mxu0
      %619 = vmatprep.mubr.bf16.mxu0 0
      %620 = vmatmul.mubr.bf16.gmra.mxu0 %v577
      %v621 = vpop.f32.mrf.mxu0
      %v622 = vadd.f32 %v559, %v621
      %v623 = vpop.f32.mrf.mxu0
      %v624 = vpop.f32.mrf.mxu0
      %v625 = vpop.f32.mrf.mxu0
      %626 = vdwg.mxu0
      %v627 = vpack.c.bf16 %v617, %v614
      %v628 = vpack.c.bf16 %v622, %v622
      %631 = vrot.lane.b32.xlu0 %v627, 96
      %v632 = vpop.permute.xlu0 %631
      %633 = vrot.lane.b32.xlu0 %v628, 96
      %v634 = vpop.permute.xlu0 %633
      %vm635 = vcmask 64512
      %v637 = vsel %vm635, %v627, 0
      %v640 = vsel %vm635, %v628, 0
      %v643 = vsel %vm635, %v632, 0
      %v646 = vsel %vm635, %v634, 0
      %648 = vmatprep.subr.bf16.mxu0 0
      %649 = vmatpush1.bf16.xpose.msra.mxu0 0
      %650 = vmatprep.subr.bf16.mxu0 0
      %651 = vmatpush1.bf16.xpose.msra.mxu0 0
      %652 = vmatprep.subr.bf16.mxu0 0
      %653 = vmatpush1.bf16.xpose.msra.mxu0 0
      %654 = vmatprep.subr.bf16.mxu0 0
      %655 = vmatpush1.bf16.xpose.msra.mxu0 0
      %656 = vmatprep.subr.bf16.mxu0 0
      %657 = vmatpush1.bf16.xpose.msra.mxu0 0
      %658 = vmatprep.subr.bf16.mxu0 0
      %659 = vmatpush1.bf16.xpose.msra.mxu0 0
      %660 = vmatprep.subr.bf16.mxu0 0
      %661 = vmatpush1.bf16.xpose.msra.mxu0 %v646
      %662 = vmatprep.subr.bf16.mxu0 0
      %663 = vmatpush1.bf16.xpose.msra.mxu0 %v643
      %664 = vmatprep.subr.bf16.mxu0 0
      %665 = vmatpush2.bf16.xpose.msra.mxu0 0
      %666 = vmatprep.subr.bf16.mxu0 0
      %667 = vmatpush2.bf16.xpose.msra.mxu0 0
      %668 = vmatprep.subr.bf16.mxu0 0
      %669 = vmatpush2.bf16.xpose.msra.mxu0 0
      %670 = vmatprep.subr.bf16.mxu0 0
      %671 = vmatpush2.bf16.xpose.msra.mxu0 0
      %672 = vmatprep.subr.bf16.mxu0 0
      %673 = vmatpush2.bf16.xpose.msra.mxu0 0
      %674 = vmatprep.subr.bf16.mxu0 0
      %675 = vmatpush2.bf16.xpose.msra.mxu0 0
      %676 = vmatprep.subr.bf16.mxu0 0
      %677 = vmatpush2.bf16.xpose.msra.mxu0 0
      %678 = vmatprep.subr.bf16.mxu0 0
      %679 = vmatpush2.bf16.xpose.msra.mxu0 0
      %680 = vmatprep.mubr.bf16.mxu0 0
      %681 = vmatmul.mubr.bf16.gmra.mxu0 %v637
      %v682 = vpop.f32.mrf.mxu0
      %v683 = vadd.f32 0.0, %v682
      %v684 = vpop.f32.mrf.mxu0
      %v685 = vpop.f32.mrf.mxu0
      %v686 = vadd.f32 0.0, %v685
      %v687 = vpop.f32.mrf.mxu0
      %688 = vmatprep.mubr.bf16.mxu0 0
      %689 = vmatmul.mubr.bf16.gmra.mxu0 %v640
      %v690 = vpop.f32.mrf.mxu0
      %v691 = vadd.f32 0.0, %v690
      %v692 = vpop.f32.mrf.mxu0
      %v693 = vpop.f32.mrf.mxu0
      %v694 = vpop.f32.mrf.mxu0
      %695 = vdwg.mxu0
      %v696 = vmul.f32 %v683, 0.35355338
      %v697 = vmul.f32 %v686, 0.35355338
      %v698 = vmul.f32 %v691, 0.35355338
      %v700 = vlaneseq
      %v701 = vshrl.u32 %v700, 7
      %v702 = vsub.s32 0, %v701
      %v703 = vrot.slane %v486, %v702
      %v705 = vadd.f32 %v696, %v703
      %v706 = vadd.f32 %v697, %v703
      %v707 = vadd.f32 %v698, %v703
      %vm708 = vcmask 195584
      %v709 = vsel %vm708, %v705, -inf
      %710 = vmax.xlane.f32.xlu0 %v709
      %v711 = vpop.xlane.xlu0 %710
      %v712 = vsel %vm708, %v706, -inf
      %713 = vmax.xlane.f32.xlu0 %v712
      %v714 = vpop.xlane.xlu0 %713
      %v715 = vsel %vm708, %v707, -inf
      %716 = vmax.xlane.f32.xlu0 %v715
      %v717 = vpop.xlane.xlu0 %716
      %v718 = vsub.f32 %v705, %v711
      %v719 = vsub.f32 %v706, %v714
      %v720 = vsub.f32 %v707, %v717
      %v721 = vmul.f32 %v718, 1.442695
      %v722 = vpow.pop %v721
      %v723 = vmul.f32 %v719, 1.442695
      %v724 = vpow.pop %v723
      %v725 = vmul.f32 %v720, 1.442695
      %v726 = vpow.pop %v725
      %v727 = vsel %vm708, %v722, 0.0
      %728 = vadd.xlane.f32.xlu0 %v727
      %v729 = vpop.xlane.xlu0 %728
      %v730 = vsel %vm708, %v724, 0.0
      %731 = vadd.xlane.f32.xlu0 %v730
      %v732 = vpop.xlane.xlu0 %731
      %v733 = vsel %vm708, %v726, 0.0
      %734 = vadd.xlane.f32.xlu0 %v733
      %v735 = vpop.xlane.xlu0 %734
      %v736 = vrcp.pop %v729
      %v737 = vrcp.pop %v732
      %v738 = vrcp.pop %v735
      %v739 = vmul.f32 %v722, %v736
      %v740 = vmul.f32 %v724, %v737
      %v741 = vmul.f32 %v726, %v738
      %v742 = vpack.c.bf16 %v740, %v739
      %v743 = vpack.c.bf16 %v741, %v741
      %744 = vrot.lane.b32.xlu0 %v627, 64
      %v745 = vpop.permute.xlu0 %744
      %746 = vrot.lane.b32.xlu0 %v628, 64
      %v747 = vpop.permute.xlu0 %746
      %v750 = vsel %vm708, %v742, 0
      %v753 = vsel %vm708, %v743, 0
      %vm755 = vcmask 1043456
      %v757 = vsel %vm755, %v747, 0
      %759 = vmatprep.subr.bf16.mxu0 0
      %760 = vmatpush1.bf16.msra.mxu0 0
      %761 = vmatprep.subr.bf16.mxu0 0
      %762 = vmatpush1.bf16.msra.mxu0 0
      %763 = vmatprep.subr.bf16.mxu0 0
      %764 = vmatpush1.bf16.msra.mxu0 0
      %765 = vmatprep.subr.bf16.mxu0 0
      %766 = vmatpush1.bf16.msra.mxu0 0
      %767 = vmatprep.subr.bf16.mxu0 0
      %768 = vmatpush1.bf16.msra.mxu0 0
      %769 = vmatprep.subr.bf16.mxu0 0
      %770 = vmatpush1.bf16.msra.mxu0 0
      %771 = vmatprep.subr.bf16.mxu0 0
      %772 = vmatpush1.bf16.msra.mxu0 %v757
      %773 = vmatprep.subr.bf16.mxu0 0
      %774 = vmatpush1.bf16.msra.mxu0 %v745
      %775 = vmatprep.subr.bf16.mxu0 0
      %776 = vmatpush2.bf16.msra.mxu0 0
      %777 = vmatprep.subr.bf16.mxu0 0
      %778 = vmatpush2.bf16.msra.mxu0 0
      %779 = vmatprep.subr.bf16.mxu0 0
      %780 = vmatpush2.bf16.msra.mxu0 0
      %781 = vmatprep.subr.bf16.mxu0 0
      %782 = vmatpush2.bf16.msra.mxu0 0
      %783 = vmatprep.subr.bf16.mxu0 0
      %784 = vmatpush2.bf16.msra.mxu0 0
      %785 = vmatprep.subr.bf16.mxu0 0
      %786 = vmatpush2.bf16.msra.mxu0 0
      %787 = vmatprep.subr.bf16.mxu0 0
      %788 = vmatpush2.bf16.msra.mxu0 0
      %789 = vmatprep.subr.bf16.mxu0 0
      %790 = vmatpush2.bf16.msra.mxu0 0
      %791 = vmatprep.mubr.bf16.mxu0 0
      %792 = vmatmul.mubr.bf16.gmra.mxu0 %v750
      %v793 = vpop.f32.mrf.mxu0
      %v794 = vadd.f32 0.0, %v793
      %v795 = vpop.f32.mrf.mxu0
      %v796 = vpop.f32.mrf.mxu0
      %v797 = vadd.f32 0.0, %v796
      %v798 = vpop.f32.mrf.mxu0
      %799 = vmatprep.mubr.bf16.mxu0 0
      %800 = vmatmul.mubr.bf16.gmra.mxu0 %v753
      %v801 = vpop.f32.mrf.mxu0
      %v802 = vadd.f32 0.0, %v801
      %v803 = vpop.f32.mrf.mxu0
      %v804 = vpop.f32.mrf.mxu0
      %v805 = vpop.f32.mrf.mxu0
      %806 = vdwg.mxu0
      %807 = vrot.lane.b32.xlu0 %v627, 120
      %v808 = vpop.permute.xlu0 %807
      %809 = vrot.lane.b32.xlu0 %v628, 120
      %v810 = vpop.permute.xlu0 %809
      %811 = vrot.lane.b32.xlu0 %v627, 88
      %v812 = vpop.permute.xlu0 %811
      %813 = vrot.lane.b32.xlu0 %v628, 88
      %v814 = vpop.permute.xlu0 %813
      %v816 = vsel %vm635, %v808, 0
      %v819 = vsel %vm635, %v810, 0
      %v822 = vsel %vm635, %v812, 0
      %v825 = vsel %vm635, %v814, 0
      %827 = vmatprep.subr.bf16.mxu0 0
      %828 = vmatpush1.bf16.xpose.msra.mxu0 0
      %829 = vmatprep.subr.bf16.mxu0 0
      %830 = vmatpush1.bf16.xpose.msra.mxu0 0
      %831 = vmatprep.subr.bf16.mxu0 0
      %832 = vmatpush1.bf16.xpose.msra.mxu0 0
      %833 = vmatprep.subr.bf16.mxu0 0
      %834 = vmatpush1.bf16.xpose.msra.mxu0 0
      %835 = vmatprep.subr.bf16.mxu0 0
      %836 = vmatpush1.bf16.xpose.msra.mxu0 0
      %837 = vmatprep.subr.bf16.mxu0 0
      %838 = vmatpush1.bf16.xpose.msra.mxu0 0
      %839 = vmatprep.subr.bf16.mxu0 0
      %840 = vmatpush1.bf16.xpose.msra.mxu0 %v825
      %841 = vmatprep.subr.bf16.mxu0 0
      %842 = vmatpush1.bf16.xpose.msra.mxu0 %v822
      %843 = vmatprep.subr.bf16.mxu0 0
      %844 = vmatpush2.bf16.xpose.msra.mxu0 0
      %845 = vmatprep.subr.bf16.mxu0 0
      %846 = vmatpush2.bf16.xpose.msra.mxu0 0
      %847 = vmatprep.subr.bf16.mxu0 0
      %848 = vmatpush2.bf16.xpose.msra.mxu0 0
      %849 = vmatprep.subr.bf16.mxu0 0
      %850 = vmatpush2.bf16.xpose.msra.mxu0 0
      %851 = vmatprep.subr.bf16.mxu0 0
      %852 = vmatpush2.bf16.xpose.msra.mxu0 0
      %853 = vmatprep.subr.bf16.mxu0 0
      %854 = vmatpush2.bf16.xpose.msra.mxu0 0
      %855 = vmatprep.subr.bf16.mxu0 0
      %856 = vmatpush2.bf16.xpose.msra.mxu0 0
      %857 = vmatprep.subr.bf16.mxu0 0
      %858 = vmatpush2.bf16.xpose.msra.mxu0 0
      %859 = vmatprep.mubr.bf16.mxu0 0
      %860 = vmatmul.mubr.bf16.gmra.mxu0 %v816
      %v861 = vpop.f32.mrf.mxu0
      %v862 = vadd.f32 0.0, %v861
      %v863 = vpop.f32.mrf.mxu0
      %v864 = vpop.f32.mrf.mxu0
      %v865 = vadd.f32 0.0, %v864
      %v866 = vpop.f32.mrf.mxu0
      %867 = vmatprep.mubr.bf16.mxu0 0
      %868 = vmatmul.mubr.bf16.gmra.mxu0 %v819
      %v869 = vpop.f32.mrf.mxu0
      %v870 = vadd.f32 0.0, %v869
      %v871 = vpop.f32.mrf.mxu0
      %v872 = vpop.f32.mrf.mxu0
      %v873 = vpop.f32.mrf.mxu0
      %874 = vdwg.mxu0
      %v875 = vmul.f32 %v862, 0.35355338
      %v876 = vmul.f32 %v865, 0.35355338
      %v877 = vmul.f32 %v870, 0.35355338
      %v878 = vadd.f32 %v875, %v703
      %v879 = vadd.f32 %v876, %v703
      %v880 = vadd.f32 %v877, %v703
      %v881 = vsel %vm708, %v878, -inf
      %882 = vmax.xlane.f32.xlu0 %v881
      %v883 = vpop.xlane.xlu0 %882
      %v884 = vsel %vm708, %v879, -inf
      %885 = vmax.xlane.f32.xlu0 %v884
      %v886 = vpop.xlane.xlu0 %885
      %v887 = vsel %vm708, %v880, -inf
      %888 = vmax.xlane.f32.xlu0 %v887
      %v889 = vpop.xlane.xlu0 %888
      %v890 = vsub.f32 %v878, %v883
      %v891 = vsub.f32 %v879, %v886
      %v892 = vsub.f32 %v880, %v889
      %v893 = vmul.f32 %v890, 1.442695
      %v894 = vpow.pop %v893
      %v895 = vmul.f32 %v891, 1.442695
      %v896 = vpow.pop %v895
      %v897 = vmul.f32 %v892, 1.442695
      %v898 = vpow.pop %v897
      %v899 = vsel %vm708, %v894, 0.0
      %900 = vadd.xlane.f32.xlu0 %v899
      %v901 = vpop.xlane.xlu0 %900
      %v902 = vsel %vm708, %v896, 0.0
      %903 = vadd.xlane.f32.xlu0 %v902
      %v904 = vpop.xlane.xlu0 %903
      %v905 = vsel %vm708, %v898, 0.0
      %906 = vadd.xlane.f32.xlu0 %v905
      %v907 = vpop.xlane.xlu0 %906
      %v908 = vrcp.pop %v901
      %v909 = vrcp.pop %v904
      %v910 = vrcp.pop %v907
      %v911 = vmul.f32 %v894, %v908
      %v912 = vmul.f32 %v896, %v909
      %v913 = vmul.f32 %v898, %v910
      %v914 = vpack.c.bf16 %v912, %v911
      %v915 = vpack.c.bf16 %v913, %v913
      %916 = vrot.lane.b32.xlu0 %v627, 56
      %v917 = vpop.permute.xlu0 %916
      %918 = vrot.lane.b32.xlu0 %v628, 56
      %v919 = vpop.permute.xlu0 %918
      %v922 = vsel %vm708, %v914, 0
      %v925 = vsel %vm708, %v915, 0
      %v928 = vsel %vm755, %v919, 0
      %930 = vmatprep.subr.bf16.mxu0 0
      %931 = vmatpush1.bf16.msra.mxu0 0
      %932 = vmatprep.subr.bf16.mxu0 0
      %933 = vmatpush1.bf16.msra.mxu0 0
      %934 = vmatprep.subr.bf16.mxu0 0
      %935 = vmatpush1.bf16.msra.mxu0 0
      %936 = vmatprep.subr.bf16.mxu0 0
      %937 = vmatpush1.bf16.msra.mxu0 0
      %938 = vmatprep.subr.bf16.mxu0 0
      %939 = vmatpush1.bf16.msra.mxu0 0
      %940 = vmatprep.subr.bf16.mxu0 0
      %941 = vmatpush1.bf16.msra.mxu0 0
      %942 = vmatprep.subr.bf16.mxu0 0
      %943 = vmatpush1.bf16.msra.mxu0 %v928
      %944 = vmatprep.subr.bf16.mxu0 0
      %945 = vmatpush1.bf16.msra.mxu0 %v917
      %946 = vmatprep.subr.bf16.mxu0 0
      %947 = vmatpush2.bf16.msra.mxu0 0
      %948 = vmatprep.subr.bf16.mxu0 0
      %949 = vmatpush2.bf16.msra.mxu0 0
      %950 = vmatprep.subr.bf16.mxu0 0
      %951 = vmatpush2.bf16.msra.mxu0 0
      %952 = vmatprep.subr.bf16.mxu0 0
      %953 = vmatpush2.bf16.msra.mxu0 0
      %954 = vmatprep.subr.bf16.mxu0 0
      %955 = vmatpush2.bf16.msra.mxu0 0
      %956 = vmatprep.subr.bf16.mxu0 0
      %957 = vmatpush2.bf16.msra.mxu0 0
      %958 = vmatprep.subr.bf16.mxu0 0
      %959 = vmatpush2.bf16.msra.mxu0 0
      %960 = vmatprep.subr.bf16.mxu0 0
      %961 = vmatpush2.bf16.msra.mxu0 0
      %962 = vmatprep.mubr.bf16.mxu0 0
      %963 = vmatmul.mubr.bf16.gmra.mxu0 %v922
      %v964 = vpop.f32.mrf.mxu0
      %v965 = vadd.f32 0.0, %v964
      %v966 = vpop.f32.mrf.mxu0
      %v967 = vpop.f32.mrf.mxu0
      %v968 = vadd.f32 0.0, %v967
      %v969 = vpop.f32.mrf.mxu0
      %970 = vmatprep.mubr.bf16.mxu0 0
      %971 = vmatmul.mubr.bf16.gmra.mxu0 %v925
      %v972 = vpop.f32.mrf.mxu0
      %v973 = vadd.f32 0.0, %v972
      %v974 = vpop.f32.mrf.mxu0
      %v975 = vpop.f32.mrf.mxu0
      %v976 = vpop.f32.mrf.mxu0
      %977 = vdwg.mxu0
      %978 = vrot.lane.b32.xlu0 %v627, 112
      %v979 = vpop.permute.xlu0 %978
      %980 = vrot.lane.b32.xlu0 %v628, 112
      %v981 = vpop.permute.xlu0 %980
      %982 = vrot.lane.b32.xlu0 %v627, 80
      %v983 = vpop.permute.xlu0 %982
      %984 = vrot.lane.b32.xlu0 %v628, 80
      %v985 = vpop.permute.xlu0 %984
      %v987 = vsel %vm635, %v979, 0
      %v990 = vsel %vm635, %v981, 0
      %v993 = vsel %vm635, %v983, 0
      %v996 = vsel %vm635, %v985, 0
      %998 = vmatprep.subr.bf16.mxu0 0
      %999 = vmatpush1.bf16.xpose.msra.mxu0 0
      %1000 = vmatprep.subr.bf16.mxu0 0
      %1001 = vmatpush1.bf16.xpose.msra.mxu0 0
      %1002 = vmatprep.subr.bf16.mxu0 0
      %1003 = vmatpush1.bf16.xpose.msra.mxu0 0
      %1004 = vmatprep.subr.bf16.mxu0 0
      %1005 = vmatpush1.bf16.xpose.msra.mxu0 0
      %1006 = vmatprep.subr.bf16.mxu0 0
      %1007 = vmatpush1.bf16.xpose.msra.mxu0 0
      %1008 = vmatprep.subr.bf16.mxu0 0
      %1009 = vmatpush1.bf16.xpose.msra.mxu0 0
      %1010 = vmatprep.subr.bf16.mxu0 0
      %1011 = vmatpush1.bf16.xpose.msra.mxu0 %v996
      %1012 = vmatprep.subr.bf16.mxu0 0
      %1013 = vmatpush1.bf16.xpose.msra.mxu0 %v993
      %1014 = vmatprep.subr.bf16.mxu0 0
      %1015 = vmatpush2.bf16.xpose.msra.mxu0 0
      %1016 = vmatprep.subr.bf16.mxu0 0
      %1017 = vmatpush2.bf16.xpose.msra.mxu0 0
      %1018 = vmatprep.subr.bf16.mxu0 0
      %1019 = vmatpush2.bf16.xpose.msra.mxu0 0
      %1020 = vmatprep.subr.bf16.mxu0 0
      %1021 = vmatpush2.bf16.xpose.msra.mxu0 0
      %1022 = vmatprep.subr.bf16.mxu0 0
      %1023 = vmatpush2.bf16.xpose.msra.mxu0 0
      %1024 = vmatprep.subr.bf16.mxu0 0
      %1025 = vmatpush2.bf16.xpose.msra.mxu0 0
      %1026 = vmatprep.subr.bf16.mxu0 0
      %1027 = vmatpush2.bf16.xpose.msra.mxu0 0
      %1028 = vmatprep.subr.bf16.mxu0 0
      %1029 = vmatpush2.bf16.xpose.msra.mxu0 0
      %1030 = vmatprep.mubr.bf16.mxu0 0
      %1031 = vmatmul.mubr.bf16.gmra.mxu0 %v987
      %v1032 = vpop.f32.mrf.mxu0
      %v1033 = vadd.f32 0.0, %v1032
      %v1034 = vpop.f32.mrf.mxu0
      %v1035 = vpop.f32.mrf.mxu0
      %v1036 = vadd.f32 0.0, %v1035
      %v1037 = vpop.f32.mrf.mxu0
      %1038 = vmatprep.mubr.bf16.mxu0 0
      %1039 = vmatmul.mubr.bf16.gmra.mxu0 %v990
      %v1040 = vpop.f32.mrf.mxu0
      %v1041 = vadd.f32 0.0, %v1040
      %v1042 = vpop.f32.mrf.mxu0
      %v1043 = vpop.f32.mrf.mxu0
      %v1044 = vpop.f32.mrf.mxu0
      %1045 = vdwg.mxu0
      %v1046 = vmul.f32 %v1033, 0.35355338
      %v1047 = vmul.f32 %v1036, 0.35355338
      %v1048 = vmul.f32 %v1041, 0.35355338
      %v1049 = vadd.f32 %v1046, %v703
      %v1050 = vadd.f32 %v1047, %v703
      %v1051 = vadd.f32 %v1048, %v703
      %v1052 = vsel %vm708, %v1049, -inf
      %1053 = vmax.xlane.f32.xlu0 %v1052
      %v1054 = vpop.xlane.xlu0 %1053
      %v1055 = vsel %vm708, %v1050, -inf
      %1056 = vmax.xlane.f32.xlu0 %v1055
      %v1057 = vpop.xlane.xlu0 %1056
      %v1058 = vsel %vm708, %v1051, -inf
      %1059 = vmax.xlane.f32.xlu0 %v1058
      %v1060 = vpop.xlane.xlu0 %1059
      %v1061 = vsub.f32 %v1049, %v1054
      %v1062 = vsub.f32 %v1050, %v1057
      %v1063 = vsub.f32 %v1051, %v1060
      %v1064 = vmul.f32 %v1061, 1.442695
      %v1065 = vpow.pop %v1064
      %v1066 = vmul.f32 %v1062, 1.442695
      %v1067 = vpow.pop %v1066
      %v1068 = vmul.f32 %v1063, 1.442695
      %v1069 = vpow.pop %v1068
      %v1070 = vsel %vm708, %v1065, 0.0
      %1071 = vadd.xlane.f32.xlu0 %v1070
      %v1072 = vpop.xlane.xlu0 %1071
      %v1073 = vsel %vm708, %v1067, 0.0
      %1074 = vadd.xlane.f32.xlu0 %v1073
      %v1075 = vpop.xlane.xlu0 %1074
      %v1076 = vsel %vm708, %v1069, 0.0
      %1077 = vadd.xlane.f32.xlu0 %v1076
      %v1078 = vpop.xlane.xlu0 %1077
      %v1079 = vrcp.pop %v1072
      %v1080 = vrcp.pop %v1075
      %v1081 = vrcp.pop %v1078
      %v1082 = vmul.f32 %v1065, %v1079
      %v1083 = vmul.f32 %v1067, %v1080
      %v1084 = vmul.f32 %v1069, %v1081
      %v1085 = vpack.c.bf16 %v1083, %v1082
      %v1086 = vpack.c.bf16 %v1084, %v1084
      %1087 = vrot.lane.b32.xlu0 %v627, 48
      %v1088 = vpop.permute.xlu0 %1087
      %1089 = vrot.lane.b32.xlu0 %v628, 48
      %v1090 = vpop.permute.xlu0 %1089
      %v1093 = vsel %vm708, %v1085, 0
      %v1096 = vsel %vm708, %v1086, 0
      %v1099 = vsel %vm755, %v1090, 0
      %1101 = vmatprep.subr.bf16.mxu0 0
      %1102 = vmatpush1.bf16.msra.mxu0 0
      %1103 = vmatprep.subr.bf16.mxu0 0
      %1104 = vmatpush1.bf16.msra.mxu0 0
      %1105 = vmatprep.subr.bf16.mxu0 0
      %1106 = vmatpush1.bf16.msra.mxu0 0
      %1107 = vmatprep.subr.bf16.mxu0 0
      %1108 = vmatpush1.bf16.msra.mxu0 0
      %1109 = vmatprep.subr.bf16.mxu0 0
      %1110 = vmatpush1.bf16.msra.mxu0 0
      %1111 = vmatprep.subr.bf16.mxu0 0
      %1112 = vmatpush1.bf16.msra.mxu0 0
      %1113 = vmatprep.subr.bf16.mxu0 0
      %1114 = vmatpush1.bf16.msra.mxu0 %v1099
      %1115 = vmatprep.subr.bf16.mxu0 0
      %1116 = vmatpush1.bf16.msra.mxu0 %v1088
      %1117 = vmatprep.subr.bf16.mxu0 0
      %1118 = vmatpush2.bf16.msra.mxu0 0
      %1119 = vmatprep.subr.bf16.mxu0 0
      %1120 = vmatpush2.bf16.msra.mxu0 0
      %1121 = vmatprep.subr.bf16.mxu0 0
      %1122 = vmatpush2.bf16.msra.mxu0 0
      %1123 = vmatprep.subr.bf16.mxu0 0
      %1124 = vmatpush2.bf16.msra.mxu0 0
      %1125 = vmatprep.subr.bf16.mxu0 0
      %1126 = vmatpush2.bf16.msra.mxu0 0
      %1127 = vmatprep.subr.bf16.mxu0 0
      %1128 = vmatpush2.bf16.msra.mxu0 0
      %1129 = vmatprep.subr.bf16.mxu0 0
      %1130 = vmatpush2.bf16.msra.mxu0 0
      %1131 = vmatprep.subr.bf16.mxu0 0
      %1132 = vmatpush2.bf16.msra.mxu0 0
      %1133 = vmatprep.mubr.bf16.mxu0 0
      %1134 = vmatmul.mubr.bf16.gmra.mxu0 %v1093
      %v1135 = vpop.f32.mrf.mxu0
      %v1136 = vadd.f32 0.0, %v1135
      %v1137 = vpop.f32.mrf.mxu0
      %v1138 = vpop.f32.mrf.mxu0
      %v1139 = vadd.f32 0.0, %v1138
      %v1140 = vpop.f32.mrf.mxu0
      %1141 = vmatprep.mubr.bf16.mxu0 0
      %1142 = vmatmul.mubr.bf16.gmra.mxu0 %v1096
      %v1143 = vpop.f32.mrf.mxu0
      %v1144 = vadd.f32 0.0, %v1143
      %v1145 = vpop.f32.mrf.mxu0
      %v1146 = vpop.f32.mrf.mxu0
      %v1147 = vpop.f32.mrf.mxu0
      %1148 = vdwg.mxu0
      %1149 = vrot.lane.b32.xlu0 %v627, 104
      %v1150 = vpop.permute.xlu0 %1149
      %1151 = vrot.lane.b32.xlu0 %v628, 104
      %v1152 = vpop.permute.xlu0 %1151
      %1153 = vrot.lane.b32.xlu0 %v627, 72
      %v1154 = vpop.permute.xlu0 %1153
      %1155 = vrot.lane.b32.xlu0 %v628, 72
      %v1156 = vpop.permute.xlu0 %1155
      %v1158 = vsel %vm635, %v1150, 0
      %v1161 = vsel %vm635, %v1152, 0
      %v1164 = vsel %vm635, %v1154, 0
      %v1167 = vsel %vm635, %v1156, 0
      %1169 = vmatprep.subr.bf16.mxu0 0
      %1170 = vmatpush1.bf16.xpose.msra.mxu0 0
      %1171 = vmatprep.subr.bf16.mxu0 0
      %1172 = vmatpush1.bf16.xpose.msra.mxu0 0
      %1173 = vmatprep.subr.bf16.mxu0 0
      %1174 = vmatpush1.bf16.xpose.msra.mxu0 0
      %1175 = vmatprep.subr.bf16.mxu0 0
      %1176 = vmatpush1.bf16.xpose.msra.mxu0 0
      %1177 = vmatprep.subr.bf16.mxu0 0
      %1178 = vmatpush1.bf16.xpose.msra.mxu0 0
      %1179 = vmatprep.subr.bf16.mxu0 0
      %1180 = vmatpush1.bf16.xpose.msra.mxu0 0
      %1181 = vmatprep.subr.bf16.mxu0 0
      %1182 = vmatpush1.bf16.xpose.msra.mxu0 %v1167
      %1183 = vmatprep.subr.bf16.mxu0 0
      %1184 = vmatpush1.bf16.xpose.msra.mxu0 %v1164
      %1185 = vmatprep.subr.bf16.mxu0 0
      %1186 = vmatpush2.bf16.xpose.msra.mxu0 0
      %1187 = vmatprep.subr.bf16.mxu0 0
      %1188 = vmatpush2.bf16.xpose.msra.mxu0 0
      %1189 = vmatprep.subr.bf16.mxu0 0
      %1190 = vmatpush2.bf16.xpose.msra.mxu0 0
      %1191 = vmatprep.subr.bf16.mxu0 0
      %1192 = vmatpush2.bf16.xpose.msra.mxu0 0
      %1193 = vmatprep.subr.bf16.mxu0 0
      %1194 = vmatpush2.bf16.xpose.msra.mxu0 0
      %1195 = vmatprep.subr.bf16.mxu0 0
      %1196 = vmatpush2.bf16.xpose.msra.mxu0 0
      %1197 = vmatprep.subr.bf16.mxu0 0
      %1198 = vmatpush2.bf16.xpose.msra.mxu0 0
      %1199 = vmatprep.subr.bf16.mxu0 0
      %1200 = vmatpush2.bf16.xpose.msra.mxu0 0
      %1201 = vmatprep.mubr.bf16.mxu0 0
      %1202 = vmatmul.mubr.bf16.gmra.mxu0 %v1158
      %v1203 = vpop.f32.mrf.mxu0
      %v1204 = vadd.f32 0.0, %v1203
      %v1205 = vpop.f32.mrf.mxu0
      %v1206 = vpop.f32.mrf.mxu0
      %v1207 = vadd.f32 0.0, %v1206
      %v1208 = vpop.f32.mrf.mxu0
      %1209 = vmatprep.mubr.bf16.mxu0 0
      %1210 = vmatmul.mubr.bf16.gmra.mxu0 %v1161
      %v1211 = vpop.f32.mrf.mxu0
      %v1212 = vadd.f32 0.0, %v1211
      %v1213 = vpop.f32.mrf.mxu0
      %v1214 = vpop.f32.mrf.mxu0
      %v1215 = vpop.f32.mrf.mxu0
      %1216 = vdwg.mxu0
      %v1217 = vmul.f32 %v1204, 0.35355338
      %v1218 = vmul.f32 %v1207, 0.35355338
      %v1219 = vmul.f32 %v1212, 0.35355338
      %v1220 = vadd.f32 %v1217, %v703
      %v1221 = vadd.f32 %v1218, %v703
      %v1222 = vadd.f32 %v1219, %v703
      %v1223 = vsel %vm708, %v1220, -inf
      %1224 = vmax.xlane.f32.xlu0 %v1223
      %v1225 = vpop.xlane.xlu0 %1224
      %v1226 = vsel %vm708, %v1221, -inf
      %1227 = vmax.xlane.f32.xlu0 %v1226
      %v1228 = vpop.xlane.xlu0 %1227
      %v1229 = vsel %vm708, %v1222, -inf
      %1230 = vmax.xlane.f32.xlu0 %v1229
      %v1231 = vpop.xlane.xlu0 %1230
      %v1232 = vsub.f32 %v1220, %v1225
      %v1233 = vsub.f32 %v1221, %v1228
      %v1234 = vsub.f32 %v1222, %v1231
      %v1235 = vmul.f32 %v1232, 1.442695
      %v1236 = vpow.pop %v1235
      %v1237 = vmul.f32 %v1233, 1.442695
      %v1238 = vpow.pop %v1237
      %v1239 = vmul.f32 %v1234, 1.442695
      %v1240 = vpow.pop %v1239
      %v1241 = vsel %vm708, %v1236, 0.0
      %1242 = vadd.xlane.f32.xlu0 %v1241
      %v1243 = vpop.xlane.xlu0 %1242
      %v1244 = vsel %vm708, %v1238, 0.0
      %1245 = vadd.xlane.f32.xlu0 %v1244
      %v1246 = vpop.xlane.xlu0 %1245
      %v1247 = vsel %vm708, %v1240, 0.0
      %1248 = vadd.xlane.f32.xlu0 %v1247
      %v1249 = vpop.xlane.xlu0 %1248
      %v1250 = vrcp.pop %v1243
      %v1251 = vrcp.pop %v1246
      %v1252 = vrcp.pop %v1249
      %v1253 = vmul.f32 %v1236, %v1250
      %v1254 = vmul.f32 %v1238, %v1251
      %v1255 = vmul.f32 %v1240, %v1252
      %v1256 = vpack.c.bf16 %v1254, %v1253
      %v1257 = vpack.c.bf16 %v1255, %v1255
      %1258 = vrot.lane.b32.xlu0 %v627, 40
      %v1259 = vpop.permute.xlu0 %1258
      %1260 = vrot.lane.b32.xlu0 %v628, 40
      %v1261 = vpop.permute.xlu0 %1260
      %v1264 = vsel %vm708, %v1256, 0
      %v1267 = vsel %vm708, %v1257, 0
      %v1270 = vsel %vm755, %v1261, 0
      %1272 = vmatprep.subr.bf16.mxu0 0
      %1273 = vmatpush1.bf16.msra.mxu0 0
      %1274 = vmatprep.subr.bf16.mxu0 0
      %1275 = vmatpush1.bf16.msra.mxu0 0
      %1276 = vmatprep.subr.bf16.mxu0 0
      %1277 = vmatpush1.bf16.msra.mxu0 0
      %1278 = vmatprep.subr.bf16.mxu0 0
      %1279 = vmatpush1.bf16.msra.mxu0 0
      %1280 = vmatprep.subr.bf16.mxu0 0
      %1281 = vmatpush1.bf16.msra.mxu0 0
      %1282 = vmatprep.subr.bf16.mxu0 0
      %1283 = vmatpush1.bf16.msra.mxu0 0
      %1284 = vmatprep.subr.bf16.mxu0 0
      %1285 = vmatpush1.bf16.msra.mxu0 %v1270
      %1286 = vmatprep.subr.bf16.mxu0 0
      %1287 = vmatpush1.bf16.msra.mxu0 %v1259
      %1288 = vmatprep.subr.bf16.mxu0 0
      %1289 = vmatpush2.bf16.msra.mxu0 0
      %1290 = vmatprep.subr.bf16.mxu0 0
      %1291 = vmatpush2.bf16.msra.mxu0 0
      %1292 = vmatprep.subr.bf16.mxu0 0
      %1293 = vmatpush2.bf16.msra.mxu0 0
      %1294 = vmatprep.subr.bf16.mxu0 0
      %1295 = vmatpush2.bf16.msra.mxu0 0
      %1296 = vmatprep.subr.bf16.mxu0 0
      %1297 = vmatpush2.bf16.msra.mxu0 0
      %1298 = vmatprep.subr.bf16.mxu0 0
      %1299 = vmatpush2.bf16.msra.mxu0 0
      %1300 = vmatprep.subr.bf16.mxu0 0
      %1301 = vmatpush2.bf16.msra.mxu0 0
      %1302 = vmatprep.subr.bf16.mxu0 0
      %1303 = vmatpush2.bf16.msra.mxu0 0
      %1304 = vmatprep.mubr.bf16.mxu0 0
      %1305 = vmatmul.mubr.bf16.gmra.mxu0 %v1264
      %v1306 = vpop.f32.mrf.mxu0
      %v1307 = vadd.f32 0.0, %v1306
      %v1308 = vpop.f32.mrf.mxu0
      %v1309 = vpop.f32.mrf.mxu0
      %v1310 = vadd.f32 0.0, %v1309
      %v1311 = vpop.f32.mrf.mxu0
      %1312 = vmatprep.mubr.bf16.mxu0 0
      %1313 = vmatmul.mubr.bf16.gmra.mxu0 %v1267
      %v1314 = vpop.f32.mrf.mxu0
      %v1315 = vadd.f32 0.0, %v1314
      %v1316 = vpop.f32.mrf.mxu0
      %v1317 = vpop.f32.mrf.mxu0
      %v1318 = vpop.f32.mrf.mxu0
      %1319 = vdwg.mxu0
      %1323 = vrot.lane.b32.xlu0 %v965, 8
      %v1324 = vpop.permute.xlu0 %1323
      %1325 = vrot.lane.b32.xlu0 %v968, 8
      %v1326 = vpop.permute.xlu0 %1325
      %1327 = vrot.lane.b32.xlu0 %v973, 8
      %v1328 = vpop.permute.xlu0 %1327
      %1335 = vrot.lane.b32.xlu0 %v1136, 16
      %v1336 = vpop.permute.xlu0 %1335
      %1337 = vrot.lane.b32.xlu0 %v1139, 16
      %v1338 = vpop.permute.xlu0 %1337
      %1339 = vrot.lane.b32.xlu0 %v1144, 16
      %v1340 = vpop.permute.xlu0 %1339
      %1347 = vrot.lane.b32.xlu0 %v1307, 24
      %v1348 = vpop.permute.xlu0 %1347
      %1349 = vrot.lane.b32.xlu0 %v1310, 24
      %v1350 = vpop.permute.xlu0 %1349
      %1351 = vrot.lane.b32.xlu0 %v1315, 24
      %v1352 = vpop.permute.xlu0 %1351
      %v1356 = vsel %vm635, %v794, %v1324
      %v1357 = vsel %vm635, %v797, %v1326
      %v1358 = vsel %vm635, %v802, %v1328
      %vm1359 = vcmask 130048
      %v1360 = vsel %vm1359, %v1356, %v1336
      %v1361 = vsel %vm1359, %v1357, %v1338
      %v1362 = vsel %vm1359, %v1358, %v1340
      %v1363 = vsel %vm708, %v1360, %v1348
      %v1364 = vsel %vm708, %v1361, %v1350
      %v1365 = vsel %vm708, %v1362, %v1352
      %v1366 = vpack.c.bf16 %v1364, %v1363
      %v1367 = vpack.c.bf16 %v1365, %v1365
      %v1368 = vld [vmem:[%s6] sm:$0xf]
      %v1369 = vld [vmem:[%s6 + $0x4] sm:$0xf]
      %v1370 = vld [vmem:[%s6 + $0x8] sm:$0xf]
      %v1371 = vld [vmem:[%s6 + $0xc] sm:$0xf]
      %v1372 = vld [vmem:[%s7] sm:$0x1]
      %v1374 = vlaneseq
      %v1375 = vshrl.u32 %v1374, 7
      %v1376 = vsub.s32 0, %v1375
      %v1377 = vrot.slane %v1372, %v1376
      %v1383 = vunpack.c.l.b16 %v1368
      %v1384 = vunpack.c.l.b16 %v1369
      %v1385 = vunpack.c.l.b16 %v1370
      %v1386 = vunpack.c.l.b16 %v1371
      %v1387 = vpack.c.b16 %v1384, %v1383
      %v1388 = vpack.c.b16 %v1386, %v1385
      %v1392 = vsel %vm489, %v1366, 0
      %v1395 = vsel %vm489, %v1367, 0
      %1397 = vmatprep.subr.bf16.mxu0 0
      %1398 = vmatpush1.bf16.msra.mxu0 0
      %1399 = vmatprep.subr.bf16.mxu0 0
      %1400 = vmatpush1.bf16.msra.mxu0 0
      %1401 = vmatprep.subr.bf16.mxu0 0
      %1402 = vmatpush1.bf16.msra.mxu0 0
      %1403 = vmatprep.subr.bf16.mxu0 0
      %1404 = vmatpush1.bf16.msra.mxu0 0
      %1405 = vmatprep.subr.bf16.mxu0 0
      %1406 = vmatpush1.bf16.msra.mxu0 0
      %1407 = vmatprep.subr.bf16.mxu0 0
      %1408 = vmatpush1.bf16.msra.mxu0 0
      %1409 = vmatprep.subr.bf16.mxu0 0
      %1410 = vmatpush1.bf16.msra.mxu0 %v1388
      %1411 = vmatprep.subr.bf16.mxu0 0
      %1412 = vmatpush1.bf16.msra.mxu0 %v1387
      %1413 = vmatprep.subr.bf16.mxu0 0
      %1414 = vmatpush2.bf16.msra.mxu0 0
      %1415 = vmatprep.subr.bf16.mxu0 0
      %1416 = vmatpush2.bf16.msra.mxu0 0
      %1417 = vmatprep.subr.bf16.mxu0 0
      %1418 = vmatpush2.bf16.msra.mxu0 0
      %1419 = vmatprep.subr.bf16.mxu0 0
      %1420 = vmatpush2.bf16.msra.mxu0 0
      %1421 = vmatprep.subr.bf16.mxu0 0
      %1422 = vmatpush2.bf16.msra.mxu0 0
      %1423 = vmatprep.subr.bf16.mxu0 0
      %1424 = vmatpush2.bf16.msra.mxu0 0
      %1425 = vmatprep.subr.bf16.mxu0 0
      %1426 = vmatpush2.bf16.msra.mxu0 0
      %1427 = vmatprep.subr.bf16.mxu0 0
      %1428 = vmatpush2.bf16.msra.mxu0 0
      %1429 = vmatprep.mubr.bf16.mxu0 0
      %1430 = vmatmul.mubr.bf16.gmra.mxu0 %v1392
      %v1431 = vpop.f32.mrf.mxu0
      %v1432 = vadd.f32 %v1377, %v1431
      %v1433 = vpop.f32.mrf.mxu0
      %v1434 = vpop.f32.mrf.mxu0
      %v1435 = vadd.f32 %v1377, %v1434
      %v1436 = vpop.f32.mrf.mxu0
      %1437 = vmatprep.mubr.bf16.mxu0 0
      %1438 = vmatmul.mubr.bf16.gmra.mxu0 %v1395
      %v1439 = vpop.f32.mrf.mxu0
      %v1440 = vadd.f32 %v1377, %v1439
      %v1441 = vpop.f32.mrf.mxu0
      %v1442 = vpop.f32.mrf.mxu0
      %v1443 = vpop.f32.mrf.mxu0
      %1444 = vdwg.mxu0
      %v1445 = vadd.f32 %v483, %v1432
      %v1446 = vadd.f32 %v484, %v1435
      %v1447 = vadd.f32 %v485, %v1440
      %v1448 = vld [vmem:[%s8] sm:$0x1]
      %v1449 = vld [vmem:[%s9] sm:$0x1]
      %v1450 = vsel %vm489, %v1445, 0.0
      %1451 = vadd.xlane.f32.xlu0 %v1450
      %v1452 = vpop.xlane.xlu0 %1451
      %v1453 = vsel %vm489, %v1446, 0.0
      %1454 = vadd.xlane.f32.xlu0 %v1453
      %v1455 = vpop.xlane.xlu0 %1454
      %v1456 = vsel %vm489, %v1447, 0.0
      %1457 = vadd.xlane.f32.xlu0 %v1456
      %v1458 = vpop.xlane.xlu0 %1457
      %v1459 = vmul.f32 %v1452, %v499
      %v1460 = vmul.f32 %v1455, %v499
      %v1461 = vmul.f32 %v1458, %v499
      %v1462 = vsub.f32 %v1445, %v1459
      %v1463 = vsub.f32 %v1446, %v1460
      %v1464 = vsub.f32 %v1447, %v1461
      %v1465 = vmul.f32 %v1462, %v1462
      %v1466 = vmul.f32 %v1463, %v1463
      %v1467 = vmul.f32 %v1464, %v1464
      %v1468 = vsel %vm489, %v1465, 0.0
      %1469 = vadd.xlane.f32.xlu0 %v1468
      %v1470 = vpop.xlane.xlu0 %1469
      %v1471 = vsel %vm489, %v1466, 0.0
      %1472 = vadd.xlane.f32.xlu0 %v1471
      %v1473 = vpop.xlane.xlu0 %1472
      %v1474 = vsel %vm489, %v1467, 0.0
      %1475 = vadd.xlane.f32.xlu0 %v1474
      %v1476 = vpop.xlane.xlu0 %1475
      %v1477 = vmul.f32 %v1470, %v499
      %v1478 = vmul.f32 %v1473, %v499
      %v1479 = vmul.f32 %v1476, %v499
      %v1480 = vadd.f32 %v1477, 1e-05
      %v1481 = vadd.f32 %v1478, 1e-05
      %v1482 = vadd.f32 %v1479, 1e-05
      %v1483 = vrsqrt.pop %v1480
      %v1484 = vrsqrt.pop %v1481
      %v1485 = vrsqrt.pop %v1482
      %v1486 = vmul.f32 %v1462, %v1483
      %v1487 = vmul.f32 %v1463, %v1484
      %v1488 = vmul.f32 %v1464, %v1485
      %v1490 = vlaneseq
      %v1491 = vshrl.u32 %v1490, 7
      %v1492 = vsub.s32 0, %v1491
      %v1493 = vrot.slane %v1448, %v1492
      %v1495 = vmul.f32 %v1486, %v1493
      %v1496 = vmul.f32 %v1487, %v1493
      %v1497 = vmul.f32 %v1488, %v1493
      %v1499 = vlaneseq
      %v1500 = vshrl.u32 %v1499, 7
      %v1501 = vsub.s32 0, %v1500
      %v1502 = vrot.slane %v1449, %v1501
      %v1504 = vadd.f32 %v1495, %v1502
      %v1505 = vadd.f32 %v1496, %v1502
      %v1506 = vadd.f32 %v1497, %v1502
      %v1507 = vpack.c.bf16 %v1505, %v1504
      %v1508 = vpack.c.bf16 %v1506, %v1506
      %v1509 = vld [vmem:[%s10] sm:$0xf]
      %v1510 = vld [vmem:[%s10 + $0x4] sm:$0xf]
      %v1511 = vld [vmem:[%s10 + $0x8] sm:$0xf]
      %v1512 = vld [vmem:[%s10 + $0xc] sm:$0xf]
      %v1513 = vld [vmem:[%s11] sm:$0x1]
      %v1515 = vlaneseq
      %v1516 = vshrl.u32 %v1515, 7
      %v1517 = vsub.s32 0, %v1516
      %v1518 = vrot.slane %v1513, %v1517
      %v1524 = vunpack.c.l.b16 %v1509
      %v1525 = vunpack.c.l.b16 %v1510
      %v1526 = vunpack.c.l.b16 %v1511
      %v1527 = vunpack.c.l.b16 %v1512
      %v1528 = vpack.c.b16 %v1525, %v1524
      %v1529 = vpack.c.b16 %v1527, %v1526
      %v1533 = vsel %vm489, %v1507, 0
      %v1536 = vsel %vm489, %v1508, 0
      %1538 = vmatprep.subr.bf16.mxu0 0
      %1539 = vmatpush1.bf16.msra.mxu0 0
      %1540 = vmatprep.subr.bf16.mxu0 0
      %1541 = vmatpush1.bf16.msra.mxu0 0
      %1542 = vmatprep.subr.bf16.mxu0 0
      %1543 = vmatpush1.bf16.msra.mxu0 0
      %1544 = vmatprep.subr.bf16.mxu0 0
      %1545 = vmatpush1.bf16.msra.mxu0 0
      %1546 = vmatprep.subr.bf16.mxu0 0
      %1547 = vmatpush1.bf16.msra.mxu0 0
      %1548 = vmatprep.subr.bf16.mxu0 0
      %1549 = vmatpush1.bf16.msra.mxu0 0
      %1550 = vmatprep.subr.bf16.mxu0 0
      %1551 = vmatpush1.bf16.msra.mxu0 %v1529
      %1552 = vmatprep.subr.bf16.mxu0 0
      %1553 = vmatpush1.bf16.msra.mxu0 %v1528
      %1554 = vmatprep.subr.bf16.mxu0 0
      %1555 = vmatpush2.bf16.msra.mxu0 0
      %1556 = vmatprep.subr.bf16.mxu0 0
      %1557 = vmatpush2.bf16.msra.mxu0 0
      %1558 = vmatprep.subr.bf16.mxu0 0
      %1559 = vmatpush2.bf16.msra.mxu0 0
      %1560 = vmatprep.subr.bf16.mxu0 0
      %1561 = vmatpush2.bf16.msra.mxu0 0
      %1562 = vmatprep.subr.bf16.mxu0 0
      %1563 = vmatpush2.bf16.msra.mxu0 0
      %1564 = vmatprep.subr.bf16.mxu0 0
      %1565 = vmatpush2.bf16.msra.mxu0 0
      %1566 = vmatprep.subr.bf16.mxu0 0
      %1567 = vmatpush2.bf16.msra.mxu0 0
      %1568 = vmatprep.subr.bf16.mxu0 0
      %1569 = vmatpush2.bf16.msra.mxu0 0
      %1570 = vmatprep.mubr.bf16.mxu0 0
      %1571 = vmatmul.mubr.bf16.gmra.mxu0 %v1533
      %v1572 = vpop.f32.mrf.mxu0
      %v1573 = vadd.f32 %v1518, %v1572
      %v1574 = vpop.f32.mrf.mxu0
      %v1575 = vpop.f32.mrf.mxu0
      %v1576 = vadd.f32 %v1518, %v1575
      %v1577 = vpop.f32.mrf.mxu0
      %1578 = vmatprep.mubr.bf16.mxu0 0
      %1579 = vmatmul.mubr.bf16.gmra.mxu0 %v1536
      %v1580 = vpop.f32.mrf.mxu0
      %v1581 = vadd.f32 %v1518, %v1580
      %v1582 = vpop.f32.mrf.mxu0
      %v1583 = vpop.f32.mrf.mxu0
      %v1584 = vpop.f32.mrf.mxu0
      %1585 = vdwg.mxu0
      %v1586 = vmul.f32 %v1573, 0.5
      %v1587 = vmul.f32 %v1576, 0.5
      %v1588 = vmul.f32 %v1581, 0.5
      %v1589 = vmul.f32 %v1573, 0.044715
      %v1590 = vmul.f32 %v1576, 0.044715
      %v1591 = vmul.f32 %v1581, 0.044715
      %v1592 = vmul.f32 %v1589, %v1573
      %v1593 = vmul.f32 %v1590, %v1576
      %v1594 = vmul.f32 %v1591, %v1581
      %v1595 = vmul.f32 %v1592, %v1573
      %v1596 = vmul.f32 %v1593, %v1576
      %v1597 = vmul.f32 %v1594, %v1581
      %v1598 = vadd.f32 %v1573, %v1595
      %v1599 = vadd.f32 %v1576, %v1596
      %v1600 = vadd.f32 %v1581, %v1597
      %v1601 = vmul.f32 %v1598, 0.7978846
      %v1602 = vmul.f32 %v1599, 0.7978846
      %v1603 = vmul.f32 %v1600, 0.7978846
      %v1604 = vtanh.pop %v1601
      %v1605 = vtanh.pop %v1602
      %v1606 = vtanh.pop %v1603
      %v1607 = vadd.f32 %v1604, 1.0
      %v1608 = vadd.f32 %v1605, 1.0
      %v1609 = vadd.f32 %v1606, 1.0
      %v1610 = vmul.f32 %v1586, %v1607
      %v1611 = vmul.f32 %v1587, %v1608
      %v1612 = vmul.f32 %v1588, %v1609
      %v1613 = vpack.c.bf16 %v1611, %v1610
      %v1614 = vpack.c.bf16 %v1612, %v1612
      %v1615 = vld [vmem:[%s12] sm:$0xf]
      %v1616 = vld [vmem:[%s12 + $0x4] sm:$0xf]
      %v1617 = vld [vmem:[%s12 + $0x8] sm:$0xf]
      %v1618 = vld [vmem:[%s12 + $0xc] sm:$0xf]
      %v1619 = vld [vmem:[%s12 + $0x10] sm:$0xf]
      %v1620 = vld [vmem:[%s12 + $0x14] sm:$0xf]
      %v1621 = vld [vmem:[%s12 + $0x18] sm:$0xf]
      %v1622 = vld [vmem:[%s12 + $0x1c] sm:$0xf]
      %v1623 = vld [vmem:[%s12 + $0x20] sm:$0xf]
      %v1624 = vld [vmem:[%s12 + $0x24] sm:$0xf]
      %v1625 = vld [vmem:[%s12 + $0x28] sm:$0xf]
      %v1626 = vld [vmem:[%s12 + $0x2c] sm:$0xf]
      %v1627 = vld [vmem:[%s12 + $0x30] sm:$0xf]
      %v1628 = vld [vmem:[%s12 + $0x34] sm:$0xf]
      %v1629 = vld [vmem:[%s12 + $0x38] sm:$0xf]
      %v1630 = vld [vmem:[%s12 + $0x3c] sm:$0xf]
      %v1631 = vld [vmem:[%s13] sm:$0x1]
      %v1633 = vlaneseq
      %v1634 = vshrl.u32 %v1633, 7
      %v1635 = vsub.s32 0, %v1634
      %v1636 = vrot.slane %v1631, %v1635
      %v1654 = vunpack.c.l.b16 %v1615
      %v1655 = vunpack.c.l.b16 %v1616
      %v1656 = vunpack.c.l.b16 %v1617
      %v1657 = vunpack.c.l.b16 %v1618
      %v1658 = vunpack.c.l.b16 %v1619
      %v1659 = vunpack.c.l.b16 %v1620
      %v1660 = vunpack.c.l.b16 %v1621
      %v1661 = vunpack.c.l.b16 %v1622
      %v1662 = vunpack.c.l.b16 %v1623
      %v1663 = vunpack.c.l.b16 %v1624
      %v1664 = vunpack.c.l.b16 %v1625
      %v1665 = vunpack.c.l.b16 %v1626
      %v1666 = vunpack.c.l.b16 %v1627
      %v1667 = vunpack.c.l.b16 %v1628
      %v1668 = vunpack.c.l.b16 %v1629
      %v1669 = vunpack.c.l.b16 %v1630
      %v1670 = vpack.c.b16 %v1655, %v1654
      %v1671 = vpack.c.b16 %v1657, %v1656
      %v1672 = vpack.c.b16 %v1659, %v1658
      %v1673 = vpack.c.b16 %v1661, %v1660
      %v1674 = vpack.c.b16 %v1663, %v1662
      %v1675 = vpack.c.b16 %v1665, %v1664
      %v1676 = vpack.c.b16 %v1667, %v1666
      %v1677 = vpack.c.b16 %v1669, %v1668
      %1686 = vmatprep.subr.bf16.mxu0 0
      %1687 = vmatpush1.bf16.msra.mxu0 %v1677
      %1688 = vmatprep.subr.bf16.mxu0 0
      %1689 = vmatpush1.bf16.msra.mxu0 %v1676
      %1690 = vmatprep.subr.bf16.mxu0 0
      %1691 = vmatpush1.bf16.msra.mxu0 %v1675
      %1692 = vmatprep.subr.bf16.mxu0 0
      %1693 = vmatpush1.bf16.msra.mxu0 %v1674
      %1694 = vmatprep.subr.bf16.mxu0 0
      %1695 = vmatpush1.bf16.msra.mxu0 %v1673
      %1696 = vmatprep.subr.bf16.mxu0 0
      %1697 = vmatpush1.bf16.msra.mxu0 %v1672
      %1698 = vmatprep.subr.bf16.mxu0 0
      %1699 = vmatpush1.bf16.msra.mxu0 %v1671
      %1700 = vmatprep.subr.bf16.mxu0 0
      %1701 = vmatpush1.bf16.msra.mxu0 %v1670
      %1702 = vmatprep.subr.bf16.mxu0 0
      %1703 = vmatpush2.bf16.msra.mxu0 0
      %1704 = vmatprep.subr.bf16.mxu0 0
      %1705 = vmatpush2.bf16.msra.mxu0 0
      %1706 = vmatprep.subr.bf16.mxu0 0
      %1707 = vmatpush2.bf16.msra.mxu0 0
      %1708 = vmatprep.subr.bf16.mxu0 0
      %1709 = vmatpush2.bf16.msra.mxu0 0
      %1710 = vmatprep.subr.bf16.mxu0 0
      %1711 = vmatpush2.bf16.msra.mxu0 0
      %1712 = vmatprep.subr.bf16.mxu0 0
      %1713 = vmatpush2.bf16.msra.mxu0 0
      %1714 = vmatprep.subr.bf16.mxu0 0
      %1715 = vmatpush2.bf16.msra.mxu0 0
      %1716 = vmatprep.subr.bf16.mxu0 0
      %1717 = vmatpush2.bf16.msra.mxu0 0
      %1718 = vmatprep.mubr.bf16.mxu0 0
      %1719 = vmatmul.mubr.bf16.gmra.mxu0 %v1613
      %v1720 = vpop.f32.mrf.mxu0
      %v1721 = vadd.f32 %v1636, %v1720
      %v1722 = vpop.f32.mrf.mxu0
      %v1723 = vpop.f32.mrf.mxu0
      %v1724 = vadd.f32 %v1636, %v1723
      %v1725 = vpop.f32.mrf.mxu0
      %1726 = vmatprep.mubr.bf16.mxu0 0
      %1727 = vmatmul.mubr.bf16.gmra.mxu0 %v1614
      %v1728 = vpop.f32.mrf.mxu0
      %v1729 = vadd.f32 %v1636, %v1728
      %v1730 = vpop.f32.mrf.mxu0
      %v1731 = vpop.f32.mrf.mxu0
      %v1732 = vpop.f32.mrf.mxu0
      %1733 = vdwg.mxu0
      %v1734 = vadd.f32 %v1445, %v1721
      %v1735 = vadd.f32 %v1446, %v1724
      %v1736 = vadd.f32 %v1447, %v1729
      %1737 = vst.msk [vmem:[%s481] sm:$0xff] %vm489, %v1734
      %1738 = vst.msk [vmem:[%s481 + $0x8] sm:$0xff] %vm489, %v1735
      %1739 = vst.msk [vmem:[%s481 + $0x10] sm:$0xff] %vm489, %v1736
      %p1740 = scmp.lt.s32.totalorder %s25, 1
      %s1741 = scalar_select %p1740, %s25, 1
      %s1742 = smul.addr %s1741, 3
      %s1743 = smul.addr %s1742, 8
      %s1744 = scalar_lea.vmem %s14, %s1743
      // Predicated region
      $region77: #{vit_forward.8} parent=75 // pred_check
        %p1745 = pneg %p347
      $region78: #{vit_forward.8} parent=75 // pred_check_branch
        %1747 = sbr.rel (%p1745) target = $region80
      $region79: #{vit_forward.8} parent=75 // pred_region
        _
      $region80: #{vit_forward.8} parent=75 // pred_fallthru
        _
    $region76: #{vit_forward.8} parent=5 // pred_fallthru
      _
    %p1748 = scmp.le.s32.totalorder 2, %s20
    // Predicated region
    $region81: #{vit_forward.8} parent=5 // pred_check
      %p1749 = pneg %p1748
    $region82: #{vit_forward.8} parent=5 // pred_check_branch
      %1751 = sbr.rel (%p1749) target = $region84
    $region83: #{vit_forward.8} parent=5 // pred_region
      %s1752 = ssub.s32 %s20, 2
      // Predicated region
      $region85: #{vit_forward.8} parent=83 // pred_check
        %p1753 = pneg %p353
      $region86: #{vit_forward.8} parent=83 // pred_check_branch
        %1755 = sbr.rel (%p1753) target = $region88
      $region87: #{vit_forward.8} parent=83 // pred_region
        %p1756 = scmp.lt.s32.totalorder %s26, 1
        %s1757 = scalar_select %p1756, %s26, 1
        %s1758 = smul.addr %s1757, 3
        %s1759 = smul.addr %s1758, 8
        %s1760 = scalar_lea.vmem %s14, %s1759
      $region88: #{vit_forward.8} parent=83 // pred_fallthru
        _
    $region84: #{vit_forward.8} parent=5 // pred_fallthru
      _
  $region6: #{vit_forward.8} parent=0 // loop_footer
    %s24 = sadd.s32 1, %s20
  $region7: #{vit_forward.8} parent=0 // loop_footer_branch
    %19 = sbr.rel target = $region3
  $region8: #{vit_forward.8} parent=0 // loop_exit
    _

</llo_original>
